<compile_context>
chip_gen: v5e
topology: v5e:2x2
jax: 0.10.0
libtpu: 0.0.40
codegen_flags: <defaults>
</compile_context>

<pallas_src>
import functools

import numpy as np
import jax
import jax.numpy as jnp
from jax.experimental import pallas as pl
from jax.experimental.pallas import tpu as pltpu

EPS = 1e-5


def _round_up(x, m):
    return (x + m - 1) // m * m


# ---------------------------------------------------------------------------
# Single fused kernel:
#   conv1 -> BN1 -> ReLU -> conv2 -> BN2 -> ReLU -> convT (pixel-wise matmul)
# All activations stay flattened over (b, h, w) with full row stride W.
# ---------------------------------------------------------------------------
def _decoder_block_kernel(x_ref, m1_ref, m2_ref,
                          w1_ref, b1_ref, g1_ref, be1_ref,
                          w2_ref, b2_ref, g2_ref, be2_ref,
                          wt_ref, bt_ref,
                          y_ref, *, row_stride, n_valid1, n_valid2):
    f32 = jnp.float32
    n1 = m1_ref.shape[0]            # rows carried through stage 1
    n2 = m2_ref.shape[0]            # rows carried through stages 2/3 (= B*H*W)

    def taps(v, rows):
        # k=2 im2col with the taps folded into the contraction (lane) axis:
        # taps ordered (ky,kx) = (0,0),(0,1),(1,0),(1,1), matching the
        # (4*C, Cout) conv-weight row layout.  Rows whose neighbourhood
        # crosses an image border read garbage and are masked downstream.
        return jnp.concatenate(
            [v[0:rows],
             v[1:rows + 1],
             v[row_stride:rows + row_stride],
             v[row_stride + 1:rows + row_stride + 1]], axis=1)

    def bn_relu(z, mask, count, gamma, beta):
        # Training-mode BatchNorm (biased batch variance, centered two-pass)
        # fused with ReLU; `mask` zeroes the invalid border/pad rows.
        inv = 1.0 / count
        mean = jnp.sum(z * mask, axis=0, keepdims=True) * inv
        d = z - mean
        var = jnp.sum(d * d * mask, axis=0, keepdims=True) * inv
        scale = gamma * jax.lax.rsqrt(var + EPS)
        return jnp.maximum(d * scale + beta, 0.0)

    x = x_ref[...]                                                   # (nx, Cin)

    # Conv1 (k=2, valid): one whole-batch im2col matmul, K = 4*Cin.
    z1 = jnp.dot(taps(x, n1), w1_ref[...],
                 preferred_element_type=f32) + b1_ref[...]           # (n1, Cmid)
    a1 = bn_relu(z1, m1_ref[...], n_valid1, g1_ref[...], be1_ref[...])

    # Conv2 (k=2, valid): one whole-batch im2col matmul, K = 4*Cmid (= 128).
    z2 = jnp.dot(taps(a1, n2), w2_ref[...],
                 preferred_element_type=f32) + b2_ref[...]           # (n2, Cmid)
    a2 = bn_relu(z2, m2_ref[...], n_valid2, g2_ref[...], be2_ref[...])

    # ConvTranspose2d(k=2, s=2) == pixel-wise matmul against (Cmid, Cout*2*2),
    # zero-padded to 128 output lanes -> single unmasked full-lane store.
    y = jnp.dot(a2, wt_ref[...], preferred_element_type=f32) + bt_ref[...]
    y_ref[...] = y.astype(y_ref.dtype)


# ---------------------------------------------------------------------------
# Forward pass wrapper (XLA glue = layout only)
# ---------------------------------------------------------------------------
def forward(x_nchw, p, *, out_channels):
    B, Cin, H, W = x_nchw.shape
    Cmid = p["w1"].shape[1]
    NT = p["wt"].shape[1]
    Cout = out_channels
    H1, W1 = H - 1, W - 1                 # conv1 output spatial
    H2, W2 = H - 2, W - 2                 # conv2 / convT input spatial

    N = B * H * W                         # flat (b, h, w) grid rows
    n1 = _round_up(N + W + 1, 8)          # rows carried through stage 1
    nx = _round_up(n1 + W + 1, 8)         # padded input rows

    # NCHW -> flattened NHWC rows (channels on the TPU lane dim).  The small
    # zero pad (so in-kernel tap windows never run out of bounds) rides in the
    # same unavoidable input relayout copy -- no extra HBM pass.
    x2d = jnp.transpose(x_nchw, (0, 2, 3, 1)).reshape(N, Cin)
    x2d = jnp.pad(x2d, ((0, nx - N), (0, 0)))

    # Compile-time row-validity masks (numpy -> constants baked into the HLO):
    # a flat row is a valid k=2 'valid'-conv output iff it is not on the
    # right/bottom border of its image (and not in the pad tail).
    i1 = np.arange(n1)
    m1 = ((i1 < N) & (i1 % W < W1) & ((i1 // W) % H < H1))
    i2 = np.arange(N)
    m2 = ((i2 % W < W2) & ((i2 // W) % H < H2))
    m1 = jnp.asarray(m1.astype(np.float32).reshape(n1, 1))
    m2 = jnp.asarray(m2.astype(np.float32).reshape(N, 1))

    kernel = functools.partial(
        _decoder_block_kernel, row_stride=W,
        n_valid1=float(B * H1 * W1), n_valid2=float(B * H2 * W2))

    def full(shape):
        return pl.BlockSpec(shape, lambda i: (0,) * len(shape))

    # TODO(synk): at much larger H*W this single-invocation kernel should be
    # split into a row-tiled grid (1-row halo) to respect v7x's 64 MiB VMEM.
    y_flat = pl.pallas_call(
        kernel,
        out_shape=jax.ShapeDtypeStruct((N, NT), jnp.float32),
        grid=(1,),
        in_specs=[
            full((nx, Cin)), full((n1, 1)), full((N, 1)),
            full((4 * Cin, Cmid)), full((1, Cmid)), full((1, Cmid)), full((1, Cmid)),
            full((4 * Cmid, Cmid)), full((1, Cmid)), full((1, Cmid)), full((1, Cmid)),
            full((Cmid, NT)), full((1, NT)),
        ],
        out_specs=full((N, NT)),
        compiler_params=pltpu.CompilerParams(
            dimension_semantics=("arbitrary",)),
    )(x2d, m1, m2,
      p["w1"], p["b1"], p["g1"], p["be1"],
      p["w2"], p["b2"], p["g2"], p["be2"],
      p["wt"], p["bt"])

    # 2x pixel-shuffle + NCHW: pure layout glue on the small final tensor.
    y = y_flat.reshape(B, H, W, NT)[:, :H2, :W2, :4 * Cout]
    y = y.reshape(B, H2, W2, Cout, 2, 2)
    y = jnp.transpose(y, (0, 3, 1, 4, 2, 5)).reshape(B, Cout, 2 * H2, 2 * W2)
    return y


# ---------------------------------------------------------------------------
# Parameters (PyTorch-style uniform init; layouts pre-converted for the TPU)
# ---------------------------------------------------------------------------
def init_params(key, in_channels=4, middle_channels=32, out_channels=16):
    ks = jax.random.split(key, 6)

    def uniform(k, shape, fan_in):
        bound = 1.0 / np.sqrt(float(fan_in))
        return jax.random.uniform(k, shape, jnp.float32, -bound, bound)

    cin, cm, co = in_channels, middle_channels, out_channels
    nt = _round_up(4 * co, 128)            # ConvT columns padded to 128 lanes

    # ConvTranspose2d weight (Cmid, Cout, 2, 2) flattened to (Cmid, Cout*4)
    # with column order (co, dy, dx) == torch weight.reshape(Cmid, Cout*4).
    wt = uniform(ks[4], (cm, 4 * co), 4 * cm)
    bt = uniform(ks[5], (co,), 4 * cm)

    return {
        # Conv weights stored as (4*Cin, Cout): row index = (ky, kx, ci),
        # == torch weight.permute(2, 3, 1, 0).reshape(4*Cin, Cout).
        "w1": uniform(ks[0], (4 * cin, cm), 4 * cin),
        "b1": uniform(ks[1], (1, cm), 4 * cin),
        "w2": uniform(ks[2], (4 * cm, cm), 4 * cm),
        "b2": uniform(ks[3], (1, cm), 4 * cm),
        # BatchNorm affine params (PyTorch defaults gamma=1, beta=0).
        "g1": jnp.ones((1, cm), jnp.float32), "be1": jnp.zeros((1, cm), jnp.float32),
        "g2": jnp.ones((1, cm), jnp.float32), "be2": jnp.zeros((1, cm), jnp.float32),
        "wt": jnp.pad(wt, ((0, 0), (0, nt - 4 * co))),
        "bt": jnp.pad(jnp.repeat(bt, 4), (0, nt - 4 * co)).reshape(1, nt),
    }


# ---------------------------------------------------------------------------
# Pure-JAX (XLA) reference for a correctness check
# ---------------------------------------------------------------------------
def reference_forward(x_nchw, p, *, out_channels):
    cm = p["w1"].shape[1]
    co = out_channels

    def conv2x2(x, wk, b):
        cin = x.shape[1]
        w = jnp.transpose(wk.reshape(2, 2, cin, cm), (3, 2, 0, 1))    # OIHW
        y = jax.lax.conv_general_dilated(
            x, w, window_strides=(1, 1), padding="VALID",
            dimension_numbers=("NCHW", "OIHW", "NCHW"))
        return y + b.reshape(1, cm, 1, 1)

    def bn_relu(x, g, be):
        mean = jnp.mean(x, axis=(0, 2, 3), keepdims=True)
        var = jnp.mean((x - mean) ** 2, axis=(0, 2, 3), keepdims=True)
        xn = (x - mean) * jax.lax.rsqrt(var + EPS)
        return jnp.maximum(xn * g.reshape(1, cm, 1, 1) + be.reshape(1, cm, 1, 1),
                           0.0)

    a1 = bn_relu(conv2x2(x_nchw, p["w1"], p["b1"]), p["g1"], p["be1"])
    a2 = bn_relu(conv2x2(a1, p["w2"], p["b2"]), p["g2"], p["be2"])

    wt = p["wt"][:, :4 * co].reshape(cm, co, 2, 2)       # (ci, co, dy, dx)
    bt = p["bt"][0, :4 * co].reshape(co, 4)[:, 0]
    B, _, H2, W2 = a2.shape
    y = jnp.einsum("bchw,cokl->bohkwl", a2, wt).reshape(B, co, 2 * H2, 2 * W2)
    return y + bt.reshape(1, co, 1, 1)


if __name__ == "__main__":
    key = jax.random.PRNGKey(0)
    pkey, xkey = jax.random.split(key)

    B, CIN, CMID, COUT, H, W = 2, 4, 32, 16, 16, 16
    params = init_params(pkey, CIN, CMID, COUT)

    # (2, 4, 16, 16) -> conv -> (2, 32, 15, 15) -> conv -> (2, 32, 14, 14)
    #                -> ConvTranspose2d(k=2, s=2) -> (2, 16, 28, 28).
    x = jax.random.normal(xkey, (B, CIN, H, W), jnp.float32)

    fwd = jax.jit(functools.partial(forward, out_channels=COUT))
    out = jax.block_until_ready(fwd(x, params))

    assert out.shape == (B, COUT, 2 * (H - 2), 2 * (W - 2)), out.shape
    assert bool(jnp.all(jnp.isfinite(out)))

    ref = jax.block_until_ready(reference_forward(x, params, out_channels=COUT))
    err = float(jnp.max(jnp.abs(out - ref)))
    assert err < 1e-3, f"mismatch vs pure-JAX reference: {err}"

    print("KERNEL_OK")
</pallas_src>

<mosaic_0001>
module attributes {stable_mosaic.version = 11 : i64} {
  func.func @_decoder_block_kernel(%arg0: i32, %arg1: memref<560x4xf32, #tpu.memory_space<vmem>>, %arg2: memref<536x1xf32, #tpu.memory_space<vmem>>, %arg3: memref<512x1xf32, #tpu.memory_space<vmem>>, %arg4: memref<16x32xf32, #tpu.memory_space<vmem>>, %arg5: memref<1x32xf32, #tpu.memory_space<vmem>>, %arg6: memref<1x32xf32, #tpu.memory_space<vmem>>, %arg7: memref<1x32xf32, #tpu.memory_space<vmem>>, %arg8: memref<128x32xf32, #tpu.memory_space<vmem>>, %arg9: memref<1x32xf32, #tpu.memory_space<vmem>>, %arg10: memref<1x32xf32, #tpu.memory_space<vmem>>, %arg11: memref<1x32xf32, #tpu.memory_space<vmem>>, %arg12: memref<32x128xf32, #tpu.memory_space<vmem>>, %arg13: memref<1x128xf32, #tpu.memory_space<vmem>>, %arg14: memref<512x128xf32, #tpu.memory_space<vmem>>) attributes {dimension_semantics = [#tpu.dimension_semantics<arbitrary>], iteration_bounds = array<i64: 1>, scalar_prefetch = 0 : i64, scratch_operands = 0 : i64, tpu.core_type = #tpu.core_type<tc>, window_params = [{pipeline_mode = #tpu.pipeline_mode<synchronous>, transform_indices = @transform_0, window_bounds = array<i64: 560, 4>}, {pipeline_mode = #tpu.pipeline_mode<synchronous>, transform_indices = @transform_1, window_bounds = array<i64: 536, 1>}, {pipeline_mode = #tpu.pipeline_mode<synchronous>, transform_indices = @transform_2, window_bounds = array<i64: 512, 1>}, {pipeline_mode = #tpu.pipeline_mode<synchronous>, transform_indices = @transform_3, window_bounds = array<i64: 16, 32>}, {pipeline_mode = #tpu.pipeline_mode<synchronous>, transform_indices = @transform_4, window_bounds = array<i64: 1, 32>}, {pipeline_mode = #tpu.pipeline_mode<synchronous>, transform_indices = @transform_5, window_bounds = array<i64: 1, 32>}, {pipeline_mode = #tpu.pipeline_mode<synchronous>, transform_indices = @transform_6, window_bounds = array<i64: 1, 32>}, {pipeline_mode = #tpu.pipeline_mode<synchronous>, transform_indices = @transform_7, window_bounds = array<i64: 128, 32>}, {pipeline_mode = #tpu.pipeline_mode<synchronous>, transform_indices = @transform_8, window_bounds = array<i64: 1, 32>}, {pipeline_mode = #tpu.pipeline_mode<synchronous>, transform_indices = @transform_9, window_bounds = array<i64: 1, 32>}, {pipeline_mode = #tpu.pipeline_mode<synchronous>, transform_indices = @transform_10, window_bounds = array<i64: 1, 32>}, {pipeline_mode = #tpu.pipeline_mode<synchronous>, transform_indices = @transform_11, window_bounds = array<i64: 32, 128>}, {pipeline_mode = #tpu.pipeline_mode<synchronous>, transform_indices = @transform_12, window_bounds = array<i64: 1, 128>}, {pipeline_mode = #tpu.pipeline_mode<synchronous>, transform_indices = @transform_13, window_bounds = array<i64: 512, 128>}]} {
    %c0 = arith.constant 0 : index
    %c0_0 = arith.constant 0 : index
    %0 = vector.load %arg1[%c0, %c0_0] : memref<560x4xf32, #tpu.memory_space<vmem>>, vector<560x4xf32>
    %1 = vector.extract_strided_slice %0 {offsets = [0, 0], sizes = [536, 4], strides = [1, 1]} : vector<560x4xf32> to vector<536x4xf32>
    %2 = vector.extract_strided_slice %0 {offsets = [1, 0], sizes = [536, 4], strides = [1, 1]} : vector<560x4xf32> to vector<536x4xf32>
    %3 = vector.extract_strided_slice %0 {offsets = [16, 0], sizes = [536, 4], strides = [1, 1]} : vector<560x4xf32> to vector<536x4xf32>
    %4 = vector.extract_strided_slice %0 {offsets = [17, 0], sizes = [536, 4], strides = [1, 1]} : vector<560x4xf32> to vector<536x4xf32>
    %5 = tpu.concatenate %1, %2, %3, %4 in 1 : vector<536x4xf32>, vector<536x4xf32>, vector<536x4xf32>, vector<536x4xf32> -> vector<536x16xf32>
    %c0_1 = arith.constant 0 : index
    %c0_2 = arith.constant 0 : index
    %6 = vector.load %arg4[%c0_1, %c0_2] : memref<16x32xf32, #tpu.memory_space<vmem>>, vector<16x32xf32>
    %cst = arith.constant dense<0.000000e+00> : vector<536x32xf32>
    %7 = tpu.matmul %5, %6, %cst {dimension_numbers = #tpu.dot_dimension_numbers<[1], [0], [0], [1], [0, 0, 1, 1], [], []>} : vector<536x16xf32>, vector<16x32xf32>, vector<536x32xf32> -> vector<536x32xf32>
    %c0_3 = arith.constant 0 : index
    %c0_4 = arith.constant 0 : index
    %8 = vector.load %arg5[%c0_3, %c0_4] : memref<1x32xf32, #tpu.memory_space<vmem>>, vector<1x32xf32>
    %9 = vector.broadcast %8 : vector<1x32xf32> to vector<536x32xf32>
    %10 = arith.addf %7, %9 : vector<536x32xf32>
    %c0_5 = arith.constant 0 : index
    %c0_6 = arith.constant 0 : index
    %11 = vector.load %arg2[%c0_5, %c0_6] : memref<536x1xf32, #tpu.memory_space<vmem>>, vector<536x1xf32>
    %c0_7 = arith.constant 0 : index
    %c0_8 = arith.constant 0 : index
    %12 = vector.load %arg6[%c0_7, %c0_8] : memref<1x32xf32, #tpu.memory_space<vmem>>, vector<1x32xf32>
    %c0_9 = arith.constant 0 : index
    %c0_10 = arith.constant 0 : index
    %13 = vector.load %arg7[%c0_9, %c0_10] : memref<1x32xf32, #tpu.memory_space<vmem>>, vector<1x32xf32>
    %14 = vector.broadcast %11 : vector<536x1xf32> to vector<536x32xf32>
    %15 = arith.mulf %10, %14 : vector<536x32xf32>
    %cst_11 = arith.constant dense<0.000000e+00> : vector<32xf32>
    %16 = vector.multi_reduction <add>, %15, %cst_11 [0] : vector<536x32xf32> to vector<32xf32>
    %17 = vector.shape_cast %16 : vector<32xf32> to vector<1x32xf32>
    %cst_12 = arith.constant 0.00222222228 : f32
    %18 = vector.broadcast %cst_12 : f32 to vector<1x32xf32>
    %19 = arith.mulf %17, %18 : vector<1x32xf32>
    %20 = vector.broadcast %19 : vector<1x32xf32> to vector<536x32xf32>
    %21 = arith.subf %10, %20 : vector<536x32xf32>
    %22 = arith.mulf %21, %21 : vector<536x32xf32>
    %23 = vector.broadcast %11 : vector<536x1xf32> to vector<536x32xf32>
    %24 = arith.mulf %22, %23 : vector<536x32xf32>
    %cst_13 = arith.constant dense<0.000000e+00> : vector<32xf32>
    %25 = vector.multi_reduction <add>, %24, %cst_13 [0] : vector<536x32xf32> to vector<32xf32>
    %26 = vector.shape_cast %25 : vector<32xf32> to vector<1x32xf32>
    %cst_14 = arith.constant 0.00222222228 : f32
    %27 = vector.broadcast %cst_14 : f32 to vector<1x32xf32>
    %28 = arith.mulf %26, %27 : vector<1x32xf32>
    %cst_15 = arith.constant 9.99999974E-6 : f32
    %29 = vector.broadcast %cst_15 : f32 to vector<1x32xf32>
    %30 = arith.addf %28, %29 : vector<1x32xf32>
    %31 = math.rsqrt %30 : vector<1x32xf32>
    %32 = arith.mulf %12, %31 : vector<1x32xf32>
    %33 = vector.broadcast %32 : vector<1x32xf32> to vector<536x32xf32>
    %34 = arith.mulf %21, %33 : vector<536x32xf32>
    %35 = vector.broadcast %13 : vector<1x32xf32> to vector<536x32xf32>
    %36 = arith.addf %34, %35 : vector<536x32xf32>
    %cst_16 = arith.constant 0.000000e+00 : f32
    %37 = vector.broadcast %cst_16 : f32 to vector<536x32xf32>
    %38 = arith.maximumf %36, %37 : vector<536x32xf32>
    %39 = vector.extract_strided_slice %38 {offsets = [0, 0], sizes = [512, 32], strides = [1, 1]} : vector<536x32xf32> to vector<512x32xf32>
    %40 = vector.extract_strided_slice %38 {offsets = [1, 0], sizes = [512, 32], strides = [1, 1]} : vector<536x32xf32> to vector<512x32xf32>
    %41 = vector.extract_strided_slice %38 {offsets = [16, 0], sizes = [512, 32], strides = [1, 1]} : vector<536x32xf32> to vector<512x32xf32>
    %42 = vector.extract_strided_slice %38 {offsets = [17, 0], sizes = [512, 32], strides = [1, 1]} : vector<536x32xf32> to vector<512x32xf32>
    %43 = tpu.concatenate %39, %40, %41, %42 in 1 : vector<512x32xf32>, vector<512x32xf32>, vector<512x32xf32>, vector<512x32xf32> -> vector<512x128xf32>
    %c0_17 = arith.constant 0 : index
    %c0_18 = arith.constant 0 : index
    %44 = vector.load %arg8[%c0_17, %c0_18] : memref<128x32xf32, #tpu.memory_space<vmem>>, vector<128x32xf32>
    %cst_19 = arith.constant dense<0.000000e+00> : vector<512x32xf32>
    %45 = tpu.matmul %43, %44, %cst_19 {dimension_numbers = #tpu.dot_dimension_numbers<[1], [0], [0], [1], [0, 0, 1, 1], [], []>} : vector<512x128xf32>, vector<128x32xf32>, vector<512x32xf32> -> vector<512x32xf32>
    %c0_20 = arith.constant 0 : index
    %c0_21 = arith.constant 0 : index
    %46 = vector.load %arg9[%c0_20, %c0_21] : memref<1x32xf32, #tpu.memory_space<vmem>>, vector<1x32xf32>
    %47 = vector.broadcast %46 : vector<1x32xf32> to vector<512x32xf32>
    %48 = arith.addf %45, %47 : vector<512x32xf32>
    %c0_22 = arith.constant 0 : index
    %c0_23 = arith.constant 0 : index
    %49 = vector.load %arg3[%c0_22, %c0_23] : memref<512x1xf32, #tpu.memory_space<vmem>>, vector<512x1xf32>
    %c0_24 = arith.constant 0 : index
    %c0_25 = arith.constant 0 : index
    %50 = vector.load %arg10[%c0_24, %c0_25] : memref<1x32xf32, #tpu.memory_space<vmem>>, vector<1x32xf32>
    %c0_26 = arith.constant 0 : index
    %c0_27 = arith.constant 0 : index
    %51 = vector.load %arg11[%c0_26, %c0_27] : memref<1x32xf32, #tpu.memory_space<vmem>>, vector<1x32xf32>
    %52 = vector.broadcast %49 : vector<512x1xf32> to vector<512x32xf32>
    %53 = arith.mulf %48, %52 : vector<512x32xf32>
    %cst_28 = arith.constant dense<0.000000e+00> : vector<32xf32>
    %54 = vector.multi_reduction <add>, %53, %cst_28 [0] : vector<512x32xf32> to vector<32xf32>
    %55 = vector.shape_cast %54 : vector<32xf32> to vector<1x32xf32>
    %cst_29 = arith.constant 0.00255102036 : f32
    %56 = vector.broadcast %cst_29 : f32 to vector<1x32xf32>
    %57 = arith.mulf %55, %56 : vector<1x32xf32>
    %58 = vector.broadcast %57 : vector<1x32xf32> to vector<512x32xf32>
    %59 = arith.subf %48, %58 : vector<512x32xf32>
    %60 = arith.mulf %59, %59 : vector<512x32xf32>
    %61 = vector.broadcast %49 : vector<512x1xf32> to vector<512x32xf32>
    %62 = arith.mulf %60, %61 : vector<512x32xf32>
    %cst_30 = arith.constant dense<0.000000e+00> : vector<32xf32>
    %63 = vector.multi_reduction <add>, %62, %cst_30 [0] : vector<512x32xf32> to vector<32xf32>
    %64 = vector.shape_cast %63 : vector<32xf32> to vector<1x32xf32>
    %cst_31 = arith.constant 0.00255102036 : f32
    %65 = vector.broadcast %cst_31 : f32 to vector<1x32xf32>
    %66 = arith.mulf %64, %65 : vector<1x32xf32>
    %cst_32 = arith.constant 9.99999974E-6 : f32
    %67 = vector.broadcast %cst_32 : f32 to vector<1x32xf32>
    %68 = arith.addf %66, %67 : vector<1x32xf32>
    %69 = math.rsqrt %68 : vector<1x32xf32>
    %70 = arith.mulf %50, %69 : vector<1x32xf32>
    %71 = vector.broadcast %70 : vector<1x32xf32> to vector<512x32xf32>
    %72 = arith.mulf %59, %71 : vector<512x32xf32>
    %73 = vector.broadcast %51 : vector<1x32xf32> to vector<512x32xf32>
    %74 = arith.addf %72, %73 : vector<512x32xf32>
    %cst_33 = arith.constant 0.000000e+00 : f32
    %75 = vector.broadcast %cst_33 : f32 to vector<512x32xf32>
    %76 = arith.maximumf %74, %75 : vector<512x32xf32>
    %c0_34 = arith.constant 0 : index
    %c0_35 = arith.constant 0 : index
    %77 = vector.load %arg12[%c0_34, %c0_35] : memref<32x128xf32, #tpu.memory_space<vmem>>, vector<32x128xf32>
    %cst_36 = arith.constant dense<0.000000e+00> : vector<512x128xf32>
    %78 = tpu.matmul %76, %77, %cst_36 {dimension_numbers = #tpu.dot_dimension_numbers<[1], [0], [0], [1], [0, 0, 1, 1], [], []>} : vector<512x32xf32>, vector<32x128xf32>, vector<512x128xf32> -> vector<512x128xf32>
    %c0_37 = arith.constant 0 : index
    %c0_38 = arith.constant 0 : index
    %79 = vector.load %arg13[%c0_37, %c0_38] : memref<1x128xf32, #tpu.memory_space<vmem>>, vector<1x128xf32>
    %80 = vector.broadcast %79 : vector<1x128xf32> to vector<512x128xf32>
    %81 = arith.addf %78, %80 : vector<512x128xf32>
    %c0_39 = arith.constant 0 : index
    %c0_40 = arith.constant 0 : index
    %82 = vector.load %arg14[%c0_39, %c0_40] : memref<512x128xf32, #tpu.memory_space<vmem>>, vector<512x128xf32>
    tpu.vector_store %arg14[%c0_39, %c0_40], %81 {strides = array<i32>} : memref<512x128xf32, #tpu.memory_space<vmem>>, vector<512x128xf32>,
    return
  }
  func.func @transform_0(%arg0: i32) -> (i32, i32) {
    %c0_i32 = arith.constant 0 : i32
    %c0_i32_0 = arith.constant 0 : i32
    %c0_i32_1 = arith.constant 0 : i32
    return %c0_i32, %c0_i32_0 : i32, i32
  }
  func.func @transform_1(%arg0: i32) -> (i32, i32) {
    %c0_i32 = arith.constant 0 : i32
    %c0_i32_0 = arith.constant 0 : i32
    %c0_i32_1 = arith.constant 0 : i32
    return %c0_i32, %c0_i32_0 : i32, i32
  }
  func.func @transform_2(%arg0: i32) -> (i32, i32) {
    %c0_i32 = arith.constant 0 : i32
    %c0_i32_0 = arith.constant 0 : i32
    %c0_i32_1 = arith.constant 0 : i32
    return %c0_i32, %c0_i32_0 : i32, i32
  }
  func.func @transform_3(%arg0: i32) -> (i32, i32) {
    %c0_i32 = arith.constant 0 : i32
    %c0_i32_0 = arith.constant 0 : i32
    %c0_i32_1 = arith.constant 0 : i32
    return %c0_i32, %c0_i32_0 : i32, i32
  }
  func.func @transform_4(%arg0: i32) -> (i32, i32) {
    %c0_i32 = arith.constant 0 : i32
    %c0_i32_0 = arith.constant 0 : i32
    %c0_i32_1 = arith.constant 0 : i32
    return %c0_i32, %c0_i32_0 : i32, i32
  }
  func.func @transform_5(%arg0: i32) -> (i32, i32) {
    %c0_i32 = arith.constant 0 : i32
    %c0_i32_0 = arith.constant 0 : i32
    %c0_i32_1 = arith.constant 0 : i32
    return %c0_i32, %c0_i32_0 : i32, i32
  }
  func.func @transform_6(%arg0: i32) -> (i32, i32) {
    %c0_i32 = arith.constant 0 : i32
    %c0_i32_0 = arith.constant 0 : i32
    %c0_i32_1 = arith.constant 0 : i32
    return %c0_i32, %c0_i32_0 : i32, i32
  }
  func.func @transform_7(%arg0: i32) -> (i32, i32) {
    %c0_i32 = arith.constant 0 : i32
    %c0_i32_0 = arith.constant 0 : i32
    %c0_i32_1 = arith.constant 0 : i32
    return %c0_i32, %c0_i32_0 : i32, i32
  }
  func.func @transform_8(%arg0: i32) -> (i32, i32) {
    %c0_i32 = arith.constant 0 : i32
    %c0_i32_0 = arith.constant 0 : i32
    %c0_i32_1 = arith.constant 0 : i32
    return %c0_i32, %c0_i32_0 : i32, i32
  }
  func.func @transform_9(%arg0: i32) -> (i32, i32) {
    %c0_i32 = arith.constant 0 : i32
    %c0_i32_0 = arith.constant 0 : i32
    %c0_i32_1 = arith.constant 0 : i32
    return %c0_i32, %c0_i32_0 : i32, i32
  }
  func.func @transform_10(%arg0: i32) -> (i32, i32) {
    %c0_i32 = arith.constant 0 : i32
    %c0_i32_0 = arith.constant 0 : i32
    %c0_i32_1 = arith.constant 0 : i32
    return %c0_i32, %c0_i32_0 : i32, i32
  }
  func.func @transform_11(%arg0: i32) -> (i32, i32) {
    %c0_i32 = arith.constant 0 : i32
    %c0_i32_0 = arith.constant 0 : i32
    %c0_i32_1 = arith.constant 0 : i32
    return %c0_i32, %c0_i32_0 : i32, i32
  }
  func.func @transform_12(%arg0: i32) -> (i32, i32) {
    %c0_i32 = arith.constant 0 : i32
    %c0_i32_0 = arith.constant 0 : i32
    %c0_i32_1 = arith.constant 0 : i32
    return %c0_i32, %c0_i32_0 : i32, i32
  }
  func.func @transform_13(%arg0: i32) -> (i32, i32) {
    %c0_i32 = arith.constant 0 : i32
    %c0_i32_0 = arith.constant 0 : i32
    %c0_i32_1 = arith.constant 0 : i32
    return %c0_i32, %c0_i32_0 : i32, i32
  }
}

</mosaic_0001>

<llo_original>
// kernel: forward.1
$region0: #{forward.1}
  #allocation0 [shape = 'u32[]', space=smem, size = 0x4, offset = 0x4, fixed_abs, tag = 'smem constant byte address 0x4 - core index']
  #allocation1 [shape = 'u32[72,128]{1,0:T(1,128)}', space=vmem, size = 0x9000, scoped, tag = 'internal scratch']
  %s0 = inlined_call_operand.vmem [shape: f32[560,4], index: 0, kind: input, shape index: {}]
  %s1 = inlined_call_operand.vmem [shape: f32[536,1], index: 1, kind: input, shape index: {}]
  %s2 = inlined_call_operand.vmem [shape: f32[512,1], index: 2, kind: input, shape index: {}]
  %s3 = inlined_call_operand.vmem [shape: f32[16,32], index: 3, kind: input, shape index: {}]
  %s4 = inlined_call_operand.vmem [shape: f32[1,32], index: 4, kind: input, shape index: {}]
  %s5 = inlined_call_operand.vmem [shape: f32[1,32], index: 5, kind: input, shape index: {}]
  %s6 = inlined_call_operand.vmem [shape: f32[1,32], index: 6, kind: input, shape index: {}]
  %s7 = inlined_call_operand.vmem [shape: f32[128,32], index: 7, kind: input, shape index: {}]
  %s8 = inlined_call_operand.vmem [shape: f32[1,32], index: 8, kind: input, shape index: {}]
  %s9 = inlined_call_operand.vmem [shape: f32[1,32], index: 9, kind: input, shape index: {}]
  %s10 = inlined_call_operand.vmem [shape: f32[1,32], index: 10, kind: input, shape index: {}]
  %s11 = inlined_call_operand.vmem [shape: f32[32,128], index: 11, kind: input, shape index: {}]
  %s12 = inlined_call_operand.vmem [shape: f32[1,128], index: 12, kind: input, shape index: {}]
  %s13 = inlined_call_operand.vmem [shape: f32[512,128], index: 13, kind: output, shape index: {}]
  %s14 = sld [smem:[#allocation0]]
  $region62: #{forward.1} parent=0
    _
  %s16 = ssub.s32 1, %s14
  %s17 = scalar_select 0, %s16, %s14
  // Predicated region
  $region2: #{forward.1} parent=0 // pred_check
    _
  $region3: #{forward.1} parent=0 // pred_check_branch
    %19 = sbr.rel (0) target = $region5
  $region4: #{forward.1} parent=0 // pred_region
    _
  $region5: #{forward.1} parent=0 // pred_fallthru
    _
  // Predicated region
  $region6: #{forward.1} parent=0 // pred_check
    _
  $region7: #{forward.1} parent=0 // pred_check_branch
    %21 = sbr.rel (0) target = $region9
  $region8: #{forward.1} parent=0 // pred_region
    _
  $region9: #{forward.1} parent=0 // pred_fallthru
    _
  // Predicated region
  $region10: #{forward.1} parent=0 // pred_check
    _
  $region11: #{forward.1} parent=0 // pred_check_branch
    %23 = sbr.rel (0) target = $region13
  $region12: #{forward.1} parent=0 // pred_region
    _
  $region13: #{forward.1} parent=0 // pred_fallthru
    _
  // Predicated region
  $region14: #{forward.1} parent=0 // pred_check
    _
  $region15: #{forward.1} parent=0 // pred_check_branch
    %25 = sbr.rel (0) target = $region17
  $region16: #{forward.1} parent=0 // pred_region
    _
  $region17: #{forward.1} parent=0 // pred_fallthru
    _
  // Predicated region
  $region18: #{forward.1} parent=0 // pred_check
    _
  $region19: #{forward.1} parent=0 // pred_check_branch
    %27 = sbr.rel (0) target = $region21
  $region20: #{forward.1} parent=0 // pred_region
    _
  $region21: #{forward.1} parent=0 // pred_fallthru
    _
  // Predicated region
  $region22: #{forward.1} parent=0 // pred_check
    _
  $region23: #{forward.1} parent=0 // pred_check_branch
    %29 = sbr.rel (0) target = $region25
  $region24: #{forward.1} parent=0 // pred_region
    _
  $region25: #{forward.1} parent=0 // pred_fallthru
    _
  // Predicated region
  $region26: #{forward.1} parent=0 // pred_check
    _
  $region27: #{forward.1} parent=0 // pred_check_branch
    %31 = sbr.rel (0) target = $region29
  $region28: #{forward.1} parent=0 // pred_region
    _
  $region29: #{forward.1} parent=0 // pred_fallthru
    _
  // Predicated region
  $region30: #{forward.1} parent=0 // pred_check
    _
  $region31: #{forward.1} parent=0 // pred_check_branch
    %33 = sbr.rel (0) target = $region33
  $region32: #{forward.1} parent=0 // pred_region
    _
  $region33: #{forward.1} parent=0 // pred_fallthru
    _
  // Predicated region
  $region34: #{forward.1} parent=0 // pred_check
    _
  $region35: #{forward.1} parent=0 // pred_check_branch
    %35 = sbr.rel (0) target = $region37
  $region36: #{forward.1} parent=0 // pred_region
    _
  $region37: #{forward.1} parent=0 // pred_fallthru
    _
  // Predicated region
  $region38: #{forward.1} parent=0 // pred_check
    _
  $region39: #{forward.1} parent=0 // pred_check_branch
    %37 = sbr.rel (0) target = $region41
  $region40: #{forward.1} parent=0 // pred_region
    _
  $region41: #{forward.1} parent=0 // pred_fallthru
    _
  // Predicated region
  $region42: #{forward.1} parent=0 // pred_check
    _
  $region43: #{forward.1} parent=0 // pred_check_branch
    %39 = sbr.rel (0) target = $region45
  $region44: #{forward.1} parent=0 // pred_region
    _
  $region45: #{forward.1} parent=0 // pred_fallthru
    _
  // Predicated region
  $region46: #{forward.1} parent=0 // pred_check
    _
  $region47: #{forward.1} parent=0 // pred_check_branch
    %41 = sbr.rel (0) target = $region49
  $region48: #{forward.1} parent=0 // pred_region
    _
  $region49: #{forward.1} parent=0 // pred_fallthru
    _
  // Predicated region
  $region50: #{forward.1} parent=0 // pred_check
    _
  $region51: #{forward.1} parent=0 // pred_check_branch
    %43 = sbr.rel (0) target = $region53
  $region52: #{forward.1} parent=0 // pred_region
    _
  $region53: #{forward.1} parent=0 // pred_fallthru
    _
  %v44 = vld [vmem:[%s0] sm:$0xff]
  %v45 = vld [vmem:[%s0 + $0x8] sm:$0xff]
  %v46 = vld [vmem:[%s0 + $0x10] sm:$0xff]
  %v47 = vld [vmem:[%s0 + $0x18] sm:$0xff]
  %v48 = vld [vmem:[%s0 + $0x20] sm:$0xff]
  %v49 = vld [vmem:[%s0 + $0x28] sm:$0xff]
  %v50 = vld [vmem:[%s0 + $0x30] sm:$0xff]
  %v51 = vld [vmem:[%s0 + $0x38] sm:$0xff]
  %v52 = vld [vmem:[%s0 + $0x40] sm:$0xff]
  %v53 = vld [vmem:[%s0 + $0x48] sm:$0xff]
  %v54 = vld [vmem:[%s0 + $0x50] sm:$0xff]
  %v55 = vld [vmem:[%s0 + $0x58] sm:$0xff]
  %v56 = vld [vmem:[%s0 + $0x60] sm:$0xff]
  %v57 = vld [vmem:[%s0 + $0x68] sm:$0xff]
  %v58 = vld [vmem:[%s0 + $0x70] sm:$0xff]
  %v59 = vld [vmem:[%s0 + $0x78] sm:$0xff]
  %v60 = vld [vmem:[%s0 + $0x80] sm:$0xff]
  %v61 = vld [vmem:[%s0 + $0x88] sm:$0xff]
  %v62 = vld [vmem:[%s0 + $0x90] sm:$0xff]
  %v63 = vld [vmem:[%s0 + $0x98] sm:$0xff]
  %v64 = vld [vmem:[%s0 + $0xa0] sm:$0xff]
  %v65 = vld [vmem:[%s0 + $0xa8] sm:$0xff]
  %v66 = vld [vmem:[%s0 + $0xb0] sm:$0xff]
  %v67 = vld [vmem:[%s0 + $0xb8] sm:$0xff]
  %v68 = vld [vmem:[%s0 + $0xc0] sm:$0xff]
  %v69 = vld [vmem:[%s0 + $0xc8] sm:$0xff]
  %v70 = vld [vmem:[%s0 + $0xd0] sm:$0xff]
  %v71 = vld [vmem:[%s0 + $0xd8] sm:$0xff]
  %v72 = vld [vmem:[%s0 + $0xe0] sm:$0xff]
  %v73 = vld [vmem:[%s0 + $0xe8] sm:$0xff]
  %v74 = vld [vmem:[%s0 + $0xf0] sm:$0xff]
  %v75 = vld [vmem:[%s0 + $0xf8] sm:$0xff]
  %v76 = vld [vmem:[%s0 + $0x100] sm:$0xff]
  %v77 = vld [vmem:[%s0 + $0x108] sm:$0xff]
  %v78 = vld [vmem:[%s0 + $0x110] sm:$0xff]
  %v79 = vld [vmem:[%s0 + $0x118] sm:$0xff]
  %v80 = vld [vmem:[%s0 + $0x120] sm:$0xff]
  %v81 = vld [vmem:[%s0 + $0x128] sm:$0xff]
  %v82 = vld [vmem:[%s0 + $0x130] sm:$0xff]
  %v83 = vld [vmem:[%s0 + $0x138] sm:$0xff]
  %v84 = vld [vmem:[%s0 + $0x140] sm:$0xff]
  %v85 = vld [vmem:[%s0 + $0x148] sm:$0xff]
  %v86 = vld [vmem:[%s0 + $0x150] sm:$0xff]
  %v87 = vld [vmem:[%s0 + $0x158] sm:$0xff]
  %v88 = vld [vmem:[%s0 + $0x160] sm:$0xff]
  %v89 = vld [vmem:[%s0 + $0x168] sm:$0xff]
  %v90 = vld [vmem:[%s0 + $0x170] sm:$0xff]
  %v91 = vld [vmem:[%s0 + $0x178] sm:$0xff]
  %v92 = vld [vmem:[%s0 + $0x180] sm:$0xff]
  %v93 = vld [vmem:[%s0 + $0x188] sm:$0xff]
  %v94 = vld [vmem:[%s0 + $0x190] sm:$0xff]
  %v95 = vld [vmem:[%s0 + $0x198] sm:$0xff]
  %v96 = vld [vmem:[%s0 + $0x1a0] sm:$0xff]
  %v97 = vld [vmem:[%s0 + $0x1a8] sm:$0xff]
  %v98 = vld [vmem:[%s0 + $0x1b0] sm:$0xff]
  %v99 = vld [vmem:[%s0 + $0x1b8] sm:$0xff]
  %v100 = vld [vmem:[%s0 + $0x1c0] sm:$0xff]
  %v101 = vld [vmem:[%s0 + $0x1c8] sm:$0xff]
  %v102 = vld [vmem:[%s0 + $0x1d0] sm:$0xff]
  %v103 = vld [vmem:[%s0 + $0x1d8] sm:$0xff]
  %v104 = vld [vmem:[%s0 + $0x1e0] sm:$0xff]
  %v105 = vld [vmem:[%s0 + $0x1e8] sm:$0xff]
  %v106 = vld [vmem:[%s0 + $0x1f0] sm:$0xff]
  %v107 = vld [vmem:[%s0 + $0x1f8] sm:$0xff]
  %v108 = vld [vmem:[%s0 + $0x200] sm:$0xff]
  %v109 = vld [vmem:[%s0 + $0x208] sm:$0xff]
  %v110 = vld [vmem:[%s0 + $0x210] sm:$0xff]
  %v111 = vld [vmem:[%s0 + $0x218] sm:$0xff]
  %v112 = vld [vmem:[%s0 + $0x220] sm:$0xff]
  %v113 = vld [vmem:[%s0 + $0x228] sm:$0xff]
  %vm182 = vcmask 1046528
  %v183 = vrot.slane %v44, 1
  %v184 = vrot.slane %v45, 1
  %v185 = vsel %vm182, %v183, %v184
  %v186 = vrot.slane %v46, 1
  %v187 = vsel %vm182, %v184, %v186
  %v188 = vrot.slane %v47, 1
  %v189 = vsel %vm182, %v186, %v188
  %v190 = vrot.slane %v48, 1
  %v191 = vsel %vm182, %v188, %v190
  %v192 = vrot.slane %v49, 1
  %v193 = vsel %vm182, %v190, %v192
  %v194 = vrot.slane %v50, 1
  %v195 = vsel %vm182, %v192, %v194
  %v196 = vrot.slane %v51, 1
  %v197 = vsel %vm182, %v194, %v196
  %v198 = vrot.slane %v52, 1
  %v199 = vsel %vm182, %v196, %v198
  %v200 = vrot.slane %v53, 1
  %v201 = vsel %vm182, %v198, %v200
  %v202 = vrot.slane %v54, 1
  %v203 = vsel %vm182, %v200, %v202
  %v204 = vrot.slane %v55, 1
  %v205 = vsel %vm182, %v202, %v204
  %v206 = vrot.slane %v56, 1
  %v207 = vsel %vm182, %v204, %v206
  %v208 = vrot.slane %v57, 1
  %v209 = vsel %vm182, %v206, %v208
  %v210 = vrot.slane %v58, 1
  %v211 = vsel %vm182, %v208, %v210
  %v212 = vrot.slane %v59, 1
  %v213 = vsel %vm182, %v210, %v212
  %v214 = vrot.slane %v60, 1
  %v215 = vsel %vm182, %v212, %v214
  %v216 = vrot.slane %v61, 1
  %v217 = vsel %vm182, %v214, %v216
  %v218 = vrot.slane %v62, 1
  %v219 = vsel %vm182, %v216, %v218
  %v220 = vrot.slane %v63, 1
  %v221 = vsel %vm182, %v218, %v220
  %v222 = vrot.slane %v64, 1
  %v223 = vsel %vm182, %v220, %v222
  %v224 = vrot.slane %v65, 1
  %v225 = vsel %vm182, %v222, %v224
  %v226 = vrot.slane %v66, 1
  %v227 = vsel %vm182, %v224, %v226
  %v228 = vrot.slane %v67, 1
  %v229 = vsel %vm182, %v226, %v228
  %v230 = vrot.slane %v68, 1
  %v231 = vsel %vm182, %v228, %v230
  %v232 = vrot.slane %v69, 1
  %v233 = vsel %vm182, %v230, %v232
  %v234 = vrot.slane %v70, 1
  %v235 = vsel %vm182, %v232, %v234
  %v236 = vrot.slane %v71, 1
  %v237 = vsel %vm182, %v234, %v236
  %v238 = vrot.slane %v72, 1
  %v239 = vsel %vm182, %v236, %v238
  %v240 = vrot.slane %v73, 1
  %v241 = vsel %vm182, %v238, %v240
  %v242 = vrot.slane %v74, 1
  %v243 = vsel %vm182, %v240, %v242
  %v244 = vrot.slane %v75, 1
  %v245 = vsel %vm182, %v242, %v244
  %v246 = vrot.slane %v76, 1
  %v247 = vsel %vm182, %v244, %v246
  %v248 = vrot.slane %v77, 1
  %v249 = vsel %vm182, %v246, %v248
  %v250 = vrot.slane %v78, 1
  %v251 = vsel %vm182, %v248, %v250
  %v252 = vrot.slane %v79, 1
  %v253 = vsel %vm182, %v250, %v252
  %v254 = vrot.slane %v80, 1
  %v255 = vsel %vm182, %v252, %v254
  %v256 = vrot.slane %v81, 1
  %v257 = vsel %vm182, %v254, %v256
  %v258 = vrot.slane %v82, 1
  %v259 = vsel %vm182, %v256, %v258
  %v260 = vrot.slane %v83, 1
  %v261 = vsel %vm182, %v258, %v260
  %v262 = vrot.slane %v84, 1
  %v263 = vsel %vm182, %v260, %v262
  %v264 = vrot.slane %v85, 1
  %v265 = vsel %vm182, %v262, %v264
  %v266 = vrot.slane %v86, 1
  %v267 = vsel %vm182, %v264, %v266
  %v268 = vrot.slane %v87, 1
  %v269 = vsel %vm182, %v266, %v268
  %v270 = vrot.slane %v88, 1
  %v271 = vsel %vm182, %v268, %v270
  %v272 = vrot.slane %v89, 1
  %v273 = vsel %vm182, %v270, %v272
  %v274 = vrot.slane %v90, 1
  %v275 = vsel %vm182, %v272, %v274
  %v276 = vrot.slane %v91, 1
  %v277 = vsel %vm182, %v274, %v276
  %v278 = vrot.slane %v92, 1
  %v279 = vsel %vm182, %v276, %v278
  %v280 = vrot.slane %v93, 1
  %v281 = vsel %vm182, %v278, %v280
  %v282 = vrot.slane %v94, 1
  %v283 = vsel %vm182, %v280, %v282
  %v284 = vrot.slane %v95, 1
  %v285 = vsel %vm182, %v282, %v284
  %v286 = vrot.slane %v96, 1
  %v287 = vsel %vm182, %v284, %v286
  %v288 = vrot.slane %v97, 1
  %v289 = vsel %vm182, %v286, %v288
  %v290 = vrot.slane %v98, 1
  %v291 = vsel %vm182, %v288, %v290
  %v292 = vrot.slane %v99, 1
  %v293 = vsel %vm182, %v290, %v292
  %v294 = vrot.slane %v100, 1
  %v295 = vsel %vm182, %v292, %v294
  %v296 = vrot.slane %v101, 1
  %v297 = vsel %vm182, %v294, %v296
  %v298 = vrot.slane %v102, 1
  %v299 = vsel %vm182, %v296, %v298
  %v300 = vrot.slane %v103, 1
  %v301 = vsel %vm182, %v298, %v300
  %v302 = vrot.slane %v104, 1
  %v303 = vsel %vm182, %v300, %v302
  %v304 = vrot.slane %v105, 1
  %v305 = vsel %vm182, %v302, %v304
  %v306 = vrot.slane %v106, 1
  %v307 = vsel %vm182, %v304, %v306
  %v308 = vrot.slane %v107, 1
  %v309 = vsel %vm182, %v306, %v308
  %v310 = vrot.slane %v108, 1
  %v311 = vsel %vm182, %v308, %v310
  %v312 = vrot.slane %v109, 1
  %v313 = vsel %vm182, %v310, %v312
  %v314 = vrot.slane %v110, 1
  %v315 = vsel %vm182, %v312, %v314
  %v316 = vrot.slane %v111, 1
  %v317 = vsel %vm182, %v314, %v316
  %318 = vrot.lane.b32.xlu0 %v185, 4
  %v319 = vpop.permute.xlu0 %318
  %320 = vrot.lane.b32.xlu0 %v187, 4
  %v321 = vpop.permute.xlu0 %320
  %322 = vrot.lane.b32.xlu0 %v189, 4
  %v323 = vpop.permute.xlu0 %322
  %324 = vrot.lane.b32.xlu0 %v191, 4
  %v325 = vpop.permute.xlu0 %324
  %326 = vrot.lane.b32.xlu0 %v193, 4
  %v327 = vpop.permute.xlu0 %326
  %328 = vrot.lane.b32.xlu0 %v195, 4
  %v329 = vpop.permute.xlu0 %328
  %330 = vrot.lane.b32.xlu0 %v197, 4
  %v331 = vpop.permute.xlu0 %330
  %332 = vrot.lane.b32.xlu0 %v199, 4
  %v333 = vpop.permute.xlu0 %332
  %334 = vrot.lane.b32.xlu0 %v201, 4
  %v335 = vpop.permute.xlu0 %334
  %336 = vrot.lane.b32.xlu0 %v203, 4
  %v337 = vpop.permute.xlu0 %336
  %338 = vrot.lane.b32.xlu0 %v205, 4
  %v339 = vpop.permute.xlu0 %338
  %340 = vrot.lane.b32.xlu0 %v207, 4
  %v341 = vpop.permute.xlu0 %340
  %342 = vrot.lane.b32.xlu0 %v209, 4
  %v343 = vpop.permute.xlu0 %342
  %344 = vrot.lane.b32.xlu0 %v211, 4
  %v345 = vpop.permute.xlu0 %344
  %346 = vrot.lane.b32.xlu0 %v213, 4
  %v347 = vpop.permute.xlu0 %346
  %348 = vrot.lane.b32.xlu0 %v215, 4
  %v349 = vpop.permute.xlu0 %348
  %350 = vrot.lane.b32.xlu0 %v217, 4
  %v351 = vpop.permute.xlu0 %350
  %352 = vrot.lane.b32.xlu0 %v219, 4
  %v353 = vpop.permute.xlu0 %352
  %354 = vrot.lane.b32.xlu0 %v221, 4
  %v355 = vpop.permute.xlu0 %354
  %356 = vrot.lane.b32.xlu0 %v223, 4
  %v357 = vpop.permute.xlu0 %356
  %358 = vrot.lane.b32.xlu0 %v225, 4
  %v359 = vpop.permute.xlu0 %358
  %360 = vrot.lane.b32.xlu0 %v227, 4
  %v361 = vpop.permute.xlu0 %360
  %362 = vrot.lane.b32.xlu0 %v229, 4
  %v363 = vpop.permute.xlu0 %362
  %364 = vrot.lane.b32.xlu0 %v231, 4
  %v365 = vpop.permute.xlu0 %364
  %366 = vrot.lane.b32.xlu0 %v233, 4
  %v367 = vpop.permute.xlu0 %366
  %368 = vrot.lane.b32.xlu0 %v235, 4
  %v369 = vpop.permute.xlu0 %368
  %370 = vrot.lane.b32.xlu0 %v237, 4
  %v371 = vpop.permute.xlu0 %370
  %372 = vrot.lane.b32.xlu0 %v239, 4
  %v373 = vpop.permute.xlu0 %372
  %374 = vrot.lane.b32.xlu0 %v241, 4
  %v375 = vpop.permute.xlu0 %374
  %376 = vrot.lane.b32.xlu0 %v243, 4
  %v377 = vpop.permute.xlu0 %376
  %378 = vrot.lane.b32.xlu0 %v245, 4
  %v379 = vpop.permute.xlu0 %378
  %380 = vrot.lane.b32.xlu0 %v247, 4
  %v381 = vpop.permute.xlu0 %380
  %382 = vrot.lane.b32.xlu0 %v249, 4
  %v383 = vpop.permute.xlu0 %382
  %384 = vrot.lane.b32.xlu0 %v251, 4
  %v385 = vpop.permute.xlu0 %384
  %386 = vrot.lane.b32.xlu0 %v253, 4
  %v387 = vpop.permute.xlu0 %386
  %388 = vrot.lane.b32.xlu0 %v255, 4
  %v389 = vpop.permute.xlu0 %388
  %390 = vrot.lane.b32.xlu0 %v257, 4
  %v391 = vpop.permute.xlu0 %390
  %392 = vrot.lane.b32.xlu0 %v259, 4
  %v393 = vpop.permute.xlu0 %392
  %394 = vrot.lane.b32.xlu0 %v261, 4
  %v395 = vpop.permute.xlu0 %394
  %396 = vrot.lane.b32.xlu0 %v263, 4
  %v397 = vpop.permute.xlu0 %396
  %398 = vrot.lane.b32.xlu0 %v265, 4
  %v399 = vpop.permute.xlu0 %398
  %400 = vrot.lane.b32.xlu0 %v267, 4
  %v401 = vpop.permute.xlu0 %400
  %402 = vrot.lane.b32.xlu0 %v269, 4
  %v403 = vpop.permute.xlu0 %402
  %404 = vrot.lane.b32.xlu0 %v271, 4
  %v405 = vpop.permute.xlu0 %404
  %406 = vrot.lane.b32.xlu0 %v273, 4
  %v407 = vpop.permute.xlu0 %406
  %408 = vrot.lane.b32.xlu0 %v275, 4
  %v409 = vpop.permute.xlu0 %408
  %410 = vrot.lane.b32.xlu0 %v277, 4
  %v411 = vpop.permute.xlu0 %410
  %412 = vrot.lane.b32.xlu0 %v279, 4
  %v413 = vpop.permute.xlu0 %412
  %414 = vrot.lane.b32.xlu0 %v281, 4
  %v415 = vpop.permute.xlu0 %414
  %416 = vrot.lane.b32.xlu0 %v283, 4
  %v417 = vpop.permute.xlu0 %416
  %418 = vrot.lane.b32.xlu0 %v285, 4
  %v419 = vpop.permute.xlu0 %418
  %420 = vrot.lane.b32.xlu0 %v287, 4
  %v421 = vpop.permute.xlu0 %420
  %422 = vrot.lane.b32.xlu0 %v289, 4
  %v423 = vpop.permute.xlu0 %422
  %424 = vrot.lane.b32.xlu0 %v291, 4
  %v425 = vpop.permute.xlu0 %424
  %426 = vrot.lane.b32.xlu0 %v293, 4
  %v427 = vpop.permute.xlu0 %426
  %428 = vrot.lane.b32.xlu0 %v295, 4
  %v429 = vpop.permute.xlu0 %428
  %430 = vrot.lane.b32.xlu0 %v297, 4
  %v431 = vpop.permute.xlu0 %430
  %432 = vrot.lane.b32.xlu0 %v299, 4
  %v433 = vpop.permute.xlu0 %432
  %434 = vrot.lane.b32.xlu0 %v301, 4
  %v435 = vpop.permute.xlu0 %434
  %436 = vrot.lane.b32.xlu0 %v303, 4
  %v437 = vpop.permute.xlu0 %436
  %438 = vrot.lane.b32.xlu0 %v305, 4
  %v439 = vpop.permute.xlu0 %438
  %440 = vrot.lane.b32.xlu0 %v307, 4
  %v441 = vpop.permute.xlu0 %440
  %442 = vrot.lane.b32.xlu0 %v309, 4
  %v443 = vpop.permute.xlu0 %442
  %444 = vrot.lane.b32.xlu0 %v311, 4
  %v445 = vpop.permute.xlu0 %444
  %446 = vrot.lane.b32.xlu0 %v313, 4
  %v447 = vpop.permute.xlu0 %446
  %448 = vrot.lane.b32.xlu0 %v315, 4
  %v449 = vpop.permute.xlu0 %448
  %450 = vrot.lane.b32.xlu0 %v317, 4
  %v451 = vpop.permute.xlu0 %450
  %520 = vrot.lane.b32.xlu0 %v46, 8
  %v521 = vpop.permute.xlu0 %520
  %522 = vrot.lane.b32.xlu0 %v47, 8
  %v523 = vpop.permute.xlu0 %522
  %524 = vrot.lane.b32.xlu0 %v48, 8
  %v525 = vpop.permute.xlu0 %524
  %526 = vrot.lane.b32.xlu0 %v49, 8
  %v527 = vpop.permute.xlu0 %526
  %528 = vrot.lane.b32.xlu0 %v50, 8
  %v529 = vpop.permute.xlu0 %528
  %530 = vrot.lane.b32.xlu0 %v51, 8
  %v531 = vpop.permute.xlu0 %530
  %532 = vrot.lane.b32.xlu0 %v52, 8
  %v533 = vpop.permute.xlu0 %532
  %534 = vrot.lane.b32.xlu0 %v53, 8
  %v535 = vpop.permute.xlu0 %534
  %536 = vrot.lane.b32.xlu0 %v54, 8
  %v537 = vpop.permute.xlu0 %536
  %538 = vrot.lane.b32.xlu0 %v55, 8
  %v539 = vpop.permute.xlu0 %538
  %540 = vrot.lane.b32.xlu0 %v56, 8
  %v541 = vpop.permute.xlu0 %540
  %542 = vrot.lane.b32.xlu0 %v57, 8
  %v543 = vpop.permute.xlu0 %542
  %544 = vrot.lane.b32.xlu0 %v58, 8
  %v545 = vpop.permute.xlu0 %544
  %546 = vrot.lane.b32.xlu0 %v59, 8
  %v547 = vpop.permute.xlu0 %546
  %548 = vrot.lane.b32.xlu0 %v60, 8
  %v549 = vpop.permute.xlu0 %548
  %550 = vrot.lane.b32.xlu0 %v61, 8
  %v551 = vpop.permute.xlu0 %550
  %552 = vrot.lane.b32.xlu0 %v62, 8
  %v553 = vpop.permute.xlu0 %552
  %554 = vrot.lane.b32.xlu0 %v63, 8
  %v555 = vpop.permute.xlu0 %554
  %556 = vrot.lane.b32.xlu0 %v64, 8
  %v557 = vpop.permute.xlu0 %556
  %558 = vrot.lane.b32.xlu0 %v65, 8
  %v559 = vpop.permute.xlu0 %558
  %560 = vrot.lane.b32.xlu0 %v66, 8
  %v561 = vpop.permute.xlu0 %560
  %562 = vrot.lane.b32.xlu0 %v67, 8
  %v563 = vpop.permute.xlu0 %562
  %564 = vrot.lane.b32.xlu0 %v68, 8
  %v565 = vpop.permute.xlu0 %564
  %566 = vrot.lane.b32.xlu0 %v69, 8
  %v567 = vpop.permute.xlu0 %566
  %568 = vrot.lane.b32.xlu0 %v70, 8
  %v569 = vpop.permute.xlu0 %568
  %570 = vrot.lane.b32.xlu0 %v71, 8
  %v571 = vpop.permute.xlu0 %570
  %572 = vrot.lane.b32.xlu0 %v72, 8
  %v573 = vpop.permute.xlu0 %572
  %574 = vrot.lane.b32.xlu0 %v73, 8
  %v575 = vpop.permute.xlu0 %574
  %576 = vrot.lane.b32.xlu0 %v74, 8
  %v577 = vpop.permute.xlu0 %576
  %578 = vrot.lane.b32.xlu0 %v75, 8
  %v579 = vpop.permute.xlu0 %578
  %580 = vrot.lane.b32.xlu0 %v76, 8
  %v581 = vpop.permute.xlu0 %580
  %582 = vrot.lane.b32.xlu0 %v77, 8
  %v583 = vpop.permute.xlu0 %582
  %584 = vrot.lane.b32.xlu0 %v78, 8
  %v585 = vpop.permute.xlu0 %584
  %586 = vrot.lane.b32.xlu0 %v79, 8
  %v587 = vpop.permute.xlu0 %586
  %588 = vrot.lane.b32.xlu0 %v80, 8
  %v589 = vpop.permute.xlu0 %588
  %590 = vrot.lane.b32.xlu0 %v81, 8
  %v591 = vpop.permute.xlu0 %590
  %592 = vrot.lane.b32.xlu0 %v82, 8
  %v593 = vpop.permute.xlu0 %592
  %594 = vrot.lane.b32.xlu0 %v83, 8
  %v595 = vpop.permute.xlu0 %594
  %596 = vrot.lane.b32.xlu0 %v84, 8
  %v597 = vpop.permute.xlu0 %596
  %598 = vrot.lane.b32.xlu0 %v85, 8
  %v599 = vpop.permute.xlu0 %598
  %600 = vrot.lane.b32.xlu0 %v86, 8
  %v601 = vpop.permute.xlu0 %600
  %602 = vrot.lane.b32.xlu0 %v87, 8
  %v603 = vpop.permute.xlu0 %602
  %604 = vrot.lane.b32.xlu0 %v88, 8
  %v605 = vpop.permute.xlu0 %604
  %606 = vrot.lane.b32.xlu0 %v89, 8
  %v607 = vpop.permute.xlu0 %606
  %608 = vrot.lane.b32.xlu0 %v90, 8
  %v609 = vpop.permute.xlu0 %608
  %610 = vrot.lane.b32.xlu0 %v91, 8
  %v611 = vpop.permute.xlu0 %610
  %612 = vrot.lane.b32.xlu0 %v92, 8
  %v613 = vpop.permute.xlu0 %612
  %614 = vrot.lane.b32.xlu0 %v93, 8
  %v615 = vpop.permute.xlu0 %614
  %616 = vrot.lane.b32.xlu0 %v94, 8
  %v617 = vpop.permute.xlu0 %616
  %618 = vrot.lane.b32.xlu0 %v95, 8
  %v619 = vpop.permute.xlu0 %618
  %620 = vrot.lane.b32.xlu0 %v96, 8
  %v621 = vpop.permute.xlu0 %620
  %622 = vrot.lane.b32.xlu0 %v97, 8
  %v623 = vpop.permute.xlu0 %622
  %624 = vrot.lane.b32.xlu0 %v98, 8
  %v625 = vpop.permute.xlu0 %624
  %626 = vrot.lane.b32.xlu0 %v99, 8
  %v627 = vpop.permute.xlu0 %626
  %628 = vrot.lane.b32.xlu0 %v100, 8
  %v629 = vpop.permute.xlu0 %628
  %630 = vrot.lane.b32.xlu0 %v101, 8
  %v631 = vpop.permute.xlu0 %630
  %632 = vrot.lane.b32.xlu0 %v102, 8
  %v633 = vpop.permute.xlu0 %632
  %634 = vrot.lane.b32.xlu0 %v103, 8
  %v635 = vpop.permute.xlu0 %634
  %636 = vrot.lane.b32.xlu0 %v104, 8
  %v637 = vpop.permute.xlu0 %636
  %638 = vrot.lane.b32.xlu0 %v105, 8
  %v639 = vpop.permute.xlu0 %638
  %640 = vrot.lane.b32.xlu0 %v106, 8
  %v641 = vpop.permute.xlu0 %640
  %642 = vrot.lane.b32.xlu0 %v107, 8
  %v643 = vpop.permute.xlu0 %642
  %644 = vrot.lane.b32.xlu0 %v108, 8
  %v645 = vpop.permute.xlu0 %644
  %646 = vrot.lane.b32.xlu0 %v109, 8
  %v647 = vpop.permute.xlu0 %646
  %648 = vrot.lane.b32.xlu0 %v110, 8
  %v649 = vpop.permute.xlu0 %648
  %650 = vrot.lane.b32.xlu0 %v111, 8
  %v651 = vpop.permute.xlu0 %650
  %652 = vrot.lane.b32.xlu0 %v112, 8
  %v653 = vpop.permute.xlu0 %652
  %v722 = vrot.slane %v112, 1
  %v723 = vsel %vm182, %v316, %v722
  %v724 = vrot.slane %v113, 1
  %v725 = vsel %vm182, %v722, %v724
  %726 = vrot.lane.b32.xlu0 %v189, 12
  %v727 = vpop.permute.xlu0 %726
  %728 = vrot.lane.b32.xlu0 %v191, 12
  %v729 = vpop.permute.xlu0 %728
  %730 = vrot.lane.b32.xlu0 %v193, 12
  %v731 = vpop.permute.xlu0 %730
  %732 = vrot.lane.b32.xlu0 %v195, 12
  %v733 = vpop.permute.xlu0 %732
  %734 = vrot.lane.b32.xlu0 %v197, 12
  %v735 = vpop.permute.xlu0 %734
  %736 = vrot.lane.b32.xlu0 %v199, 12
  %v737 = vpop.permute.xlu0 %736
  %738 = vrot.lane.b32.xlu0 %v201, 12
  %v739 = vpop.permute.xlu0 %738
  %740 = vrot.lane.b32.xlu0 %v203, 12
  %v741 = vpop.permute.xlu0 %740
  %742 = vrot.lane.b32.xlu0 %v205, 12
  %v743 = vpop.permute.xlu0 %742
  %744 = vrot.lane.b32.xlu0 %v207, 12
  %v745 = vpop.permute.xlu0 %744
  %746 = vrot.lane.b32.xlu0 %v209, 12
  %v747 = vpop.permute.xlu0 %746
  %748 = vrot.lane.b32.xlu0 %v211, 12
  %v749 = vpop.permute.xlu0 %748
  %750 = vrot.lane.b32.xlu0 %v213, 12
  %v751 = vpop.permute.xlu0 %750
  %752 = vrot.lane.b32.xlu0 %v215, 12
  %v753 = vpop.permute.xlu0 %752
  %754 = vrot.lane.b32.xlu0 %v217, 12
  %v755 = vpop.permute.xlu0 %754
  %756 = vrot.lane.b32.xlu0 %v219, 12
  %v757 = vpop.permute.xlu0 %756
  %758 = vrot.lane.b32.xlu0 %v221, 12
  %v759 = vpop.permute.xlu0 %758
  %760 = vrot.lane.b32.xlu0 %v223, 12
  %v761 = vpop.permute.xlu0 %760
  %762 = vrot.lane.b32.xlu0 %v225, 12
  %v763 = vpop.permute.xlu0 %762
  %764 = vrot.lane.b32.xlu0 %v227, 12
  %v765 = vpop.permute.xlu0 %764
  %766 = vrot.lane.b32.xlu0 %v229, 12
  %v767 = vpop.permute.xlu0 %766
  %768 = vrot.lane.b32.xlu0 %v231, 12
  %v769 = vpop.permute.xlu0 %768
  %770 = vrot.lane.b32.xlu0 %v233, 12
  %v771 = vpop.permute.xlu0 %770
  %772 = vrot.lane.b32.xlu0 %v235, 12
  %v773 = vpop.permute.xlu0 %772
  %774 = vrot.lane.b32.xlu0 %v237, 12
  %v775 = vpop.permute.xlu0 %774
  %776 = vrot.lane.b32.xlu0 %v239, 12
  %v777 = vpop.permute.xlu0 %776
  %778 = vrot.lane.b32.xlu0 %v241, 12
  %v779 = vpop.permute.xlu0 %778
  %780 = vrot.lane.b32.xlu0 %v243, 12
  %v781 = vpop.permute.xlu0 %780
  %782 = vrot.lane.b32.xlu0 %v245, 12
  %v783 = vpop.permute.xlu0 %782
  %784 = vrot.lane.b32.xlu0 %v247, 12
  %v785 = vpop.permute.xlu0 %784
  %786 = vrot.lane.b32.xlu0 %v249, 12
  %v787 = vpop.permute.xlu0 %786
  %788 = vrot.lane.b32.xlu0 %v251, 12
  %v789 = vpop.permute.xlu0 %788
  %790 = vrot.lane.b32.xlu0 %v253, 12
  %v791 = vpop.permute.xlu0 %790
  %792 = vrot.lane.b32.xlu0 %v255, 12
  %v793 = vpop.permute.xlu0 %792
  %794 = vrot.lane.b32.xlu0 %v257, 12
  %v795 = vpop.permute.xlu0 %794
  %796 = vrot.lane.b32.xlu0 %v259, 12
  %v797 = vpop.permute.xlu0 %796
  %798 = vrot.lane.b32.xlu0 %v261, 12
  %v799 = vpop.permute.xlu0 %798
  %800 = vrot.lane.b32.xlu0 %v263, 12
  %v801 = vpop.permute.xlu0 %800
  %802 = vrot.lane.b32.xlu0 %v265, 12
  %v803 = vpop.permute.xlu0 %802
  %804 = vrot.lane.b32.xlu0 %v267, 12
  %v805 = vpop.permute.xlu0 %804
  %806 = vrot.lane.b32.xlu0 %v269, 12
  %v807 = vpop.permute.xlu0 %806
  %808 = vrot.lane.b32.xlu0 %v271, 12
  %v809 = vpop.permute.xlu0 %808
  %810 = vrot.lane.b32.xlu0 %v273, 12
  %v811 = vpop.permute.xlu0 %810
  %812 = vrot.lane.b32.xlu0 %v275, 12
  %v813 = vpop.permute.xlu0 %812
  %814 = vrot.lane.b32.xlu0 %v277, 12
  %v815 = vpop.permute.xlu0 %814
  %816 = vrot.lane.b32.xlu0 %v279, 12
  %v817 = vpop.permute.xlu0 %816
  %818 = vrot.lane.b32.xlu0 %v281, 12
  %v819 = vpop.permute.xlu0 %818
  %820 = vrot.lane.b32.xlu0 %v283, 12
  %v821 = vpop.permute.xlu0 %820
  %822 = vrot.lane.b32.xlu0 %v285, 12
  %v823 = vpop.permute.xlu0 %822
  %824 = vrot.lane.b32.xlu0 %v287, 12
  %v825 = vpop.permute.xlu0 %824
  %826 = vrot.lane.b32.xlu0 %v289, 12
  %v827 = vpop.permute.xlu0 %826
  %828 = vrot.lane.b32.xlu0 %v291, 12
  %v829 = vpop.permute.xlu0 %828
  %830 = vrot.lane.b32.xlu0 %v293, 12
  %v831 = vpop.permute.xlu0 %830
  %832 = vrot.lane.b32.xlu0 %v295, 12
  %v833 = vpop.permute.xlu0 %832
  %834 = vrot.lane.b32.xlu0 %v297, 12
  %v835 = vpop.permute.xlu0 %834
  %836 = vrot.lane.b32.xlu0 %v299, 12
  %v837 = vpop.permute.xlu0 %836
  %838 = vrot.lane.b32.xlu0 %v301, 12
  %v839 = vpop.permute.xlu0 %838
  %840 = vrot.lane.b32.xlu0 %v303, 12
  %v841 = vpop.permute.xlu0 %840
  %842 = vrot.lane.b32.xlu0 %v305, 12
  %v843 = vpop.permute.xlu0 %842
  %844 = vrot.lane.b32.xlu0 %v307, 12
  %v845 = vpop.permute.xlu0 %844
  %846 = vrot.lane.b32.xlu0 %v309, 12
  %v847 = vpop.permute.xlu0 %846
  %848 = vrot.lane.b32.xlu0 %v311, 12
  %v849 = vpop.permute.xlu0 %848
  %850 = vrot.lane.b32.xlu0 %v313, 12
  %v851 = vpop.permute.xlu0 %850
  %852 = vrot.lane.b32.xlu0 %v315, 12
  %v853 = vpop.permute.xlu0 %852
  %854 = vrot.lane.b32.xlu0 %v317, 12
  %v855 = vpop.permute.xlu0 %854
  %856 = vrot.lane.b32.xlu0 %v723, 12
  %v857 = vpop.permute.xlu0 %856
  %858 = vrot.lane.b32.xlu0 %v725, 12
  %v859 = vpop.permute.xlu0 %858
  %vm927 = vcmask 31744
  %v928 = vsel %vm927, %v44, %v319
  %v929 = vsel %vm927, %v45, %v321
  %v930 = vsel %vm927, %v46, %v323
  %v931 = vsel %vm927, %v47, %v325
  %v932 = vsel %vm927, %v48, %v327
  %v933 = vsel %vm927, %v49, %v329
  %v934 = vsel %vm927, %v50, %v331
  %v935 = vsel %vm927, %v51, %v333
  %v936 = vsel %vm927, %v52, %v335
  %v937 = vsel %vm927, %v53, %v337
  %v938 = vsel %vm927, %v54, %v339
  %v939 = vsel %vm927, %v55, %v341
  %v940 = vsel %vm927, %v56, %v343
  %v941 = vsel %vm927, %v57, %v345
  %v942 = vsel %vm927, %v58, %v347
  %v943 = vsel %vm927, %v59, %v349
  %v944 = vsel %vm927, %v60, %v351
  %v945 = vsel %vm927, %v61, %v353
  %v946 = vsel %vm927, %v62, %v355
  %v947 = vsel %vm927, %v63, %v357
  %v948 = vsel %vm927, %v64, %v359
  %v949 = vsel %vm927, %v65, %v361
  %v950 = vsel %vm927, %v66, %v363
  %v951 = vsel %vm927, %v67, %v365
  %v952 = vsel %vm927, %v68, %v367
  %v953 = vsel %vm927, %v69, %v369
  %v954 = vsel %vm927, %v70, %v371
  %v955 = vsel %vm927, %v71, %v373
  %v956 = vsel %vm927, %v72, %v375
  %v957 = vsel %vm927, %v73, %v377
  %v958 = vsel %vm927, %v74, %v379
  %v959 = vsel %vm927, %v75, %v381
  %v960 = vsel %vm927, %v76, %v383
  %v961 = vsel %vm927, %v77, %v385
  %v962 = vsel %vm927, %v78, %v387
  %v963 = vsel %vm927, %v79, %v389
  %v964 = vsel %vm927, %v80, %v391
  %v965 = vsel %vm927, %v81, %v393
  %v966 = vsel %vm927, %v82, %v395
  %v967 = vsel %vm927, %v83, %v397
  %v968 = vsel %vm927, %v84, %v399
  %v969 = vsel %vm927, %v85, %v401
  %v970 = vsel %vm927, %v86, %v403
  %v971 = vsel %vm927, %v87, %v405
  %v972 = vsel %vm927, %v88, %v407
  %v973 = vsel %vm927, %v89, %v409
  %v974 = vsel %vm927, %v90, %v411
  %v975 = vsel %vm927, %v91, %v413
  %v976 = vsel %vm927, %v92, %v415
  %v977 = vsel %vm927, %v93, %v417
  %v978 = vsel %vm927, %v94, %v419
  %v979 = vsel %vm927, %v95, %v421
  %v980 = vsel %vm927, %v96, %v423
  %v981 = vsel %vm927, %v97, %v425
  %v982 = vsel %vm927, %v98, %v427
  %v983 = vsel %vm927, %v99, %v429
  %v984 = vsel %vm927, %v100, %v431
  %v985 = vsel %vm927, %v101, %v433
  %v986 = vsel %vm927, %v102, %v435
  %v987 = vsel %vm927, %v103, %v437
  %v988 = vsel %vm927, %v104, %v439
  %v989 = vsel %vm927, %v105, %v441
  %v990 = vsel %vm927, %v106, %v443
  %v991 = vsel %vm927, %v107, %v445
  %v992 = vsel %vm927, %v108, %v447
  %v993 = vsel %vm927, %v109, %v449
  %v994 = vsel %vm927, %v110, %v451
  %vm995 = vcmask 64512
  %v996 = vsel %vm995, %v928, %v521
  %v997 = vsel %vm995, %v929, %v523
  %v998 = vsel %vm995, %v930, %v525
  %v999 = vsel %vm995, %v931, %v527
  %v1000 = vsel %vm995, %v932, %v529
  %v1001 = vsel %vm995, %v933, %v531
  %v1002 = vsel %vm995, %v934, %v533
  %v1003 = vsel %vm995, %v935, %v535
  %v1004 = vsel %vm995, %v936, %v537
  %v1005 = vsel %vm995, %v937, %v539
  %v1006 = vsel %vm995, %v938, %v541
  %v1007 = vsel %vm995, %v939, %v543
  %v1008 = vsel %vm995, %v940, %v545
  %v1009 = vsel %vm995, %v941, %v547
  %v1010 = vsel %vm995, %v942, %v549
  %v1011 = vsel %vm995, %v943, %v551
  %v1012 = vsel %vm995, %v944, %v553
  %v1013 = vsel %vm995, %v945, %v555
  %v1014 = vsel %vm995, %v946, %v557
  %v1015 = vsel %vm995, %v947, %v559
  %v1016 = vsel %vm995, %v948, %v561
  %v1017 = vsel %vm995, %v949, %v563
  %v1018 = vsel %vm995, %v950, %v565
  %v1019 = vsel %vm995, %v951, %v567
  %v1020 = vsel %vm995, %v952, %v569
  %v1021 = vsel %vm995, %v953, %v571
  %v1022 = vsel %vm995, %v954, %v573
  %v1023 = vsel %vm995, %v955, %v575
  %v1024 = vsel %vm995, %v956, %v577
  %v1025 = vsel %vm995, %v957, %v579
  %v1026 = vsel %vm995, %v958, %v581
  %v1027 = vsel %vm995, %v959, %v583
  %v1028 = vsel %vm995, %v960, %v585
  %v1029 = vsel %vm995, %v961, %v587
  %v1030 = vsel %vm995, %v962, %v589
  %v1031 = vsel %vm995, %v963, %v591
  %v1032 = vsel %vm995, %v964, %v593
  %v1033 = vsel %vm995, %v965, %v595
  %v1034 = vsel %vm995, %v966, %v597
  %v1035 = vsel %vm995, %v967, %v599
  %v1036 = vsel %vm995, %v968, %v601
  %v1037 = vsel %vm995, %v969, %v603
  %v1038 = vsel %vm995, %v970, %v605
  %v1039 = vsel %vm995, %v971, %v607
  %v1040 = vsel %vm995, %v972, %v609
  %v1041 = vsel %vm995, %v973, %v611
  %v1042 = vsel %vm995, %v974, %v613
  %v1043 = vsel %vm995, %v975, %v615
  %v1044 = vsel %vm995, %v976, %v617
  %v1045 = vsel %vm995, %v977, %v619
  %v1046 = vsel %vm995, %v978, %v621
  %v1047 = vsel %vm995, %v979, %v623
  %v1048 = vsel %vm995, %v980, %v625
  %v1049 = vsel %vm995, %v981, %v627
  %v1050 = vsel %vm995, %v982, %v629
  %v1051 = vsel %vm995, %v983, %v631
  %v1052 = vsel %vm995, %v984, %v633
  %v1053 = vsel %vm995, %v985, %v635
  %v1054 = vsel %vm995, %v986, %v637
  %v1055 = vsel %vm995, %v987, %v639
  %v1056 = vsel %vm995, %v988, %v641
  %v1057 = vsel %vm995, %v989, %v643
  %v1058 = vsel %vm995, %v990, %v645
  %v1059 = vsel %vm995, %v991, %v647
  %v1060 = vsel %vm995, %v992, %v649
  %v1061 = vsel %vm995, %v993, %v651
  %v1062 = vsel %vm995, %v994, %v653
  %vm1063 = vcmask 97280
  %v1064 = vsel %vm1063, %v996, %v727
  %v1065 = vsel %vm1063, %v997, %v729
  %v1066 = vsel %vm1063, %v998, %v731
  %v1067 = vsel %vm1063, %v999, %v733
  %v1068 = vsel %vm1063, %v1000, %v735
  %v1069 = vsel %vm1063, %v1001, %v737
  %v1070 = vsel %vm1063, %v1002, %v739
  %v1071 = vsel %vm1063, %v1003, %v741
  %v1072 = vsel %vm1063, %v1004, %v743
  %v1073 = vsel %vm1063, %v1005, %v745
  %v1074 = vsel %vm1063, %v1006, %v747
  %v1075 = vsel %vm1063, %v1007, %v749
  %v1076 = vsel %vm1063, %v1008, %v751
  %v1077 = vsel %vm1063, %v1009, %v753
  %v1078 = vsel %vm1063, %v1010, %v755
  %v1079 = vsel %vm1063, %v1011, %v757
  %v1080 = vsel %vm1063, %v1012, %v759
  %v1081 = vsel %vm1063, %v1013, %v761
  %v1082 = vsel %vm1063, %v1014, %v763
  %v1083 = vsel %vm1063, %v1015, %v765
  %v1084 = vsel %vm1063, %v1016, %v767
  %v1085 = vsel %vm1063, %v1017, %v769
  %v1086 = vsel %vm1063, %v1018, %v771
  %v1087 = vsel %vm1063, %v1019, %v773
  %v1088 = vsel %vm1063, %v1020, %v775
  %v1089 = vsel %vm1063, %v1021, %v777
  %v1090 = vsel %vm1063, %v1022, %v779
  %v1091 = vsel %vm1063, %v1023, %v781
  %v1092 = vsel %vm1063, %v1024, %v783
  %v1093 = vsel %vm1063, %v1025, %v785
  %v1094 = vsel %vm1063, %v1026, %v787
  %v1095 = vsel %vm1063, %v1027, %v789
  %v1096 = vsel %vm1063, %v1028, %v791
  %v1097 = vsel %vm1063, %v1029, %v793
  %v1098 = vsel %vm1063, %v1030, %v795
  %v1099 = vsel %vm1063, %v1031, %v797
  %v1100 = vsel %vm1063, %v1032, %v799
  %v1101 = vsel %vm1063, %v1033, %v801
  %v1102 = vsel %vm1063, %v1034, %v803
  %v1103 = vsel %vm1063, %v1035, %v805
  %v1104 = vsel %vm1063, %v1036, %v807
  %v1105 = vsel %vm1063, %v1037, %v809
  %v1106 = vsel %vm1063, %v1038, %v811
  %v1107 = vsel %vm1063, %v1039, %v813
  %v1108 = vsel %vm1063, %v1040, %v815
  %v1109 = vsel %vm1063, %v1041, %v817
  %v1110 = vsel %vm1063, %v1042, %v819
  %v1111 = vsel %vm1063, %v1043, %v821
  %v1112 = vsel %vm1063, %v1044, %v823
  %v1113 = vsel %vm1063, %v1045, %v825
  %v1114 = vsel %vm1063, %v1046, %v827
  %v1115 = vsel %vm1063, %v1047, %v829
  %v1116 = vsel %vm1063, %v1048, %v831
  %v1117 = vsel %vm1063, %v1049, %v833
  %v1118 = vsel %vm1063, %v1050, %v835
  %v1119 = vsel %vm1063, %v1051, %v837
  %v1120 = vsel %vm1063, %v1052, %v839
  %v1121 = vsel %vm1063, %v1053, %v841
  %v1122 = vsel %vm1063, %v1054, %v843
  %v1123 = vsel %vm1063, %v1055, %v845
  %v1124 = vsel %vm1063, %v1056, %v847
  %v1125 = vsel %vm1063, %v1057, %v849
  %v1126 = vsel %vm1063, %v1058, %v851
  %v1127 = vsel %vm1063, %v1059, %v853
  %v1128 = vsel %vm1063, %v1060, %v855
  %v1129 = vsel %vm1063, %v1061, %v857
  %v1130 = vsel %vm1063, %v1062, %v859
  %v1131 = vld [vmem:[%s3] sm:$0xff]
  %v1132 = vld [vmem:[%s3 + $0x8] sm:$0xff]
  %v1133 = vld [vmem:[%s4] sm:$0x1]
  %v1135 = vperm.slane %v1133, 0
  %vm1137 = vcmask 130048
  %v1139 = vsel %vm1137, %v1064, 0
  %v1142 = vsel %vm1137, %v1065, 0
  %v1145 = vsel %vm1137, %v1066, 0
  %v1148 = vsel %vm1137, %v1067, 0
  %v1151 = vsel %vm1137, %v1068, 0
  %v1154 = vsel %vm1137, %v1069, 0
  %v1157 = vsel %vm1137, %v1070, 0
  %v1160 = vsel %vm1137, %v1071, 0
  %v1163 = vsel %vm1137, %v1072, 0
  %v1166 = vsel %vm1137, %v1073, 0
  %v1169 = vsel %vm1137, %v1074, 0
  %v1172 = vsel %vm1137, %v1075, 0
  %v1175 = vsel %vm1137, %v1076, 0
  %v1178 = vsel %vm1137, %v1077, 0
  %v1181 = vsel %vm1137, %v1078, 0
  %v1184 = vsel %vm1137, %v1079, 0
  %v1187 = vsel %vm1137, %v1080, 0
  %v1190 = vsel %vm1137, %v1081, 0
  %v1193 = vsel %vm1137, %v1082, 0
  %v1196 = vsel %vm1137, %v1083, 0
  %v1199 = vsel %vm1137, %v1084, 0
  %v1202 = vsel %vm1137, %v1085, 0
  %v1205 = vsel %vm1137, %v1086, 0
  %v1208 = vsel %vm1137, %v1087, 0
  %v1211 = vsel %vm1137, %v1088, 0
  %v1214 = vsel %vm1137, %v1089, 0
  %v1217 = vsel %vm1137, %v1090, 0
  %v1220 = vsel %vm1137, %v1091, 0
  %v1223 = vsel %vm1137, %v1092, 0
  %v1226 = vsel %vm1137, %v1093, 0
  %v1229 = vsel %vm1137, %v1094, 0
  %v1232 = vsel %vm1137, %v1095, 0
  %v1235 = vsel %vm1137, %v1096, 0
  %v1238 = vsel %vm1137, %v1097, 0
  %v1241 = vsel %vm1137, %v1098, 0
  %v1244 = vsel %vm1137, %v1099, 0
  %v1247 = vsel %vm1137, %v1100, 0
  %v1250 = vsel %vm1137, %v1101, 0
  %v1253 = vsel %vm1137, %v1102, 0
  %v1256 = vsel %vm1137, %v1103, 0
  %v1259 = vsel %vm1137, %v1104, 0
  %v1262 = vsel %vm1137, %v1105, 0
  %v1265 = vsel %vm1137, %v1106, 0
  %v1268 = vsel %vm1137, %v1107, 0
  %v1271 = vsel %vm1137, %v1108, 0
  %v1274 = vsel %vm1137, %v1109, 0
  %v1277 = vsel %vm1137, %v1110, 0
  %v1280 = vsel %vm1137, %v1111, 0
  %v1283 = vsel %vm1137, %v1112, 0
  %v1286 = vsel %vm1137, %v1113, 0
  %v1289 = vsel %vm1137, %v1114, 0
  %v1292 = vsel %vm1137, %v1115, 0
  %v1295 = vsel %vm1137, %v1116, 0
  %v1298 = vsel %vm1137, %v1117, 0
  %v1301 = vsel %vm1137, %v1118, 0
  %v1304 = vsel %vm1137, %v1119, 0
  %v1307 = vsel %vm1137, %v1120, 0
  %v1310 = vsel %vm1137, %v1121, 0
  %v1313 = vsel %vm1137, %v1122, 0
  %v1316 = vsel %vm1137, %v1123, 0
  %v1319 = vsel %vm1137, %v1124, 0
  %v1322 = vsel %vm1137, %v1125, 0
  %v1325 = vsel %vm1137, %v1126, 0
  %v1328 = vsel %vm1137, %v1127, 0
  %v1331 = vsel %vm1137, %v1128, 0
  %v1334 = vsel %vm1137, %v1129, 0
  %v1337 = vsel %vm1137, %v1130, 0
  %1339 = vmatpush.msra.mxu0 0.0
  %1340 = vmatpush.msra.mxu0 0.0
  %1341 = vmatpush.msra.mxu0 0.0
  %1342 = vmatpush.msra.mxu0 0.0
  %1343 = vmatpush.msra.mxu0 0.0
  %1344 = vmatpush.msra.mxu0 0.0
  %1345 = vmatpush.msra.mxu0 0.0
  %1346 = vmatpush.msra.mxu0 0.0
  %1347 = vmatpush.msra.mxu0 0.0
  %1348 = vmatpush.msra.mxu0 0.0
  %1349 = vmatpush.msra.mxu0 0.0
  %1350 = vmatpush.msra.mxu0 0.0
  %1351 = vmatpush.msra.mxu0 0.0
  %1352 = vmatpush.msra.mxu0 0.0
  %1353 = vmatpush.msra.mxu0 %v1132
  %1354 = vmatpush.msra.mxu0 %v1131
  %1355 = vmatmul.f32.gmra.mxu0 %v1139
  %v1356 = vpop.f32.mrf.mxu0
  %v1357 = vadd.f32 %v1135, %v1356
  %1358 = vmatmul.f32.gmra.mxu0 %v1142
  %v1359 = vpop.f32.mrf.mxu0
  %v1360 = vadd.f32 %v1135, %v1359
  %1361 = vmatmul.f32.gmra.mxu0 %v1145
  %v1362 = vpop.f32.mrf.mxu0
  %v1363 = vadd.f32 %v1135, %v1362
  %1364 = vmatmul.f32.gmra.mxu0 %v1148
  %v1365 = vpop.f32.mrf.mxu0
  %v1366 = vadd.f32 %v1135, %v1365
  %1367 = vmatmul.f32.gmra.mxu0 %v1151
  %v1368 = vpop.f32.mrf.mxu0
  %v1369 = vadd.f32 %v1135, %v1368
  %1370 = vmatmul.f32.gmra.mxu0 %v1154
  %v1371 = vpop.f32.mrf.mxu0
  %v1372 = vadd.f32 %v1135, %v1371
  %1373 = vmatmul.f32.gmra.mxu0 %v1157
  %v1374 = vpop.f32.mrf.mxu0
  %v1375 = vadd.f32 %v1135, %v1374
  %1376 = vmatmul.f32.gmra.mxu0 %v1160
  %v1377 = vpop.f32.mrf.mxu0
  %v1378 = vadd.f32 %v1135, %v1377
  %1379 = vmatmul.f32.gmra.mxu0 %v1163
  %v1380 = vpop.f32.mrf.mxu0
  %v1381 = vadd.f32 %v1135, %v1380
  %1382 = vmatmul.f32.gmra.mxu0 %v1166
  %v1383 = vpop.f32.mrf.mxu0
  %v1384 = vadd.f32 %v1135, %v1383
  %1385 = vmatmul.f32.gmra.mxu0 %v1169
  %v1386 = vpop.f32.mrf.mxu0
  %v1387 = vadd.f32 %v1135, %v1386
  %1388 = vmatmul.f32.gmra.mxu0 %v1172
  %v1389 = vpop.f32.mrf.mxu0
  %v1390 = vadd.f32 %v1135, %v1389
  %1391 = vmatmul.f32.gmra.mxu0 %v1175
  %v1392 = vpop.f32.mrf.mxu0
  %v1393 = vadd.f32 %v1135, %v1392
  %1394 = vmatmul.f32.gmra.mxu0 %v1178
  %v1395 = vpop.f32.mrf.mxu0
  %v1396 = vadd.f32 %v1135, %v1395
  %1397 = vmatmul.f32.gmra.mxu0 %v1181
  %v1398 = vpop.f32.mrf.mxu0
  %v1399 = vadd.f32 %v1135, %v1398
  %1400 = vmatmul.f32.gmra.mxu0 %v1184
  %v1401 = vpop.f32.mrf.mxu0
  %v1402 = vadd.f32 %v1135, %v1401
  %1403 = vmatmul.f32.gmra.mxu0 %v1187
  %v1404 = vpop.f32.mrf.mxu0
  %v1405 = vadd.f32 %v1135, %v1404
  %1406 = vmatmul.f32.gmra.mxu0 %v1190
  %v1407 = vpop.f32.mrf.mxu0
  %v1408 = vadd.f32 %v1135, %v1407
  %1409 = vmatmul.f32.gmra.mxu0 %v1193
  %v1410 = vpop.f32.mrf.mxu0
  %v1411 = vadd.f32 %v1135, %v1410
  %1412 = vmatmul.f32.gmra.mxu0 %v1196
  %v1413 = vpop.f32.mrf.mxu0
  %v1414 = vadd.f32 %v1135, %v1413
  %1415 = vmatmul.f32.gmra.mxu0 %v1199
  %v1416 = vpop.f32.mrf.mxu0
  %v1417 = vadd.f32 %v1135, %v1416
  %1418 = vmatmul.f32.gmra.mxu0 %v1202
  %v1419 = vpop.f32.mrf.mxu0
  %v1420 = vadd.f32 %v1135, %v1419
  %1421 = vmatmul.f32.gmra.mxu0 %v1205
  %v1422 = vpop.f32.mrf.mxu0
  %v1423 = vadd.f32 %v1135, %v1422
  %1424 = vmatmul.f32.gmra.mxu0 %v1208
  %v1425 = vpop.f32.mrf.mxu0
  %v1426 = vadd.f32 %v1135, %v1425
  %1427 = vmatmul.f32.gmra.mxu0 %v1211
  %v1428 = vpop.f32.mrf.mxu0
  %v1429 = vadd.f32 %v1135, %v1428
  %1430 = vmatmul.f32.gmra.mxu0 %v1214
  %v1431 = vpop.f32.mrf.mxu0
  %v1432 = vadd.f32 %v1135, %v1431
  %1433 = vmatmul.f32.gmra.mxu0 %v1217
  %v1434 = vpop.f32.mrf.mxu0
  %v1435 = vadd.f32 %v1135, %v1434
  %1436 = vmatmul.f32.gmra.mxu0 %v1220
  %v1437 = vpop.f32.mrf.mxu0
  %v1438 = vadd.f32 %v1135, %v1437
  %1439 = vmatmul.f32.gmra.mxu0 %v1223
  %v1440 = vpop.f32.mrf.mxu0
  %v1441 = vadd.f32 %v1135, %v1440
  %1442 = vmatmul.f32.gmra.mxu0 %v1226
  %v1443 = vpop.f32.mrf.mxu0
  %v1444 = vadd.f32 %v1135, %v1443
  %1445 = vmatmul.f32.gmra.mxu0 %v1229
  %v1446 = vpop.f32.mrf.mxu0
  %v1447 = vadd.f32 %v1135, %v1446
  %1448 = vmatmul.f32.gmra.mxu0 %v1232
  %v1449 = vpop.f32.mrf.mxu0
  %v1450 = vadd.f32 %v1135, %v1449
  %1451 = vmatmul.f32.gmra.mxu0 %v1235
  %v1452 = vpop.f32.mrf.mxu0
  %v1453 = vadd.f32 %v1135, %v1452
  %1454 = vmatmul.f32.gmra.mxu0 %v1238
  %v1455 = vpop.f32.mrf.mxu0
  %v1456 = vadd.f32 %v1135, %v1455
  %1457 = vmatmul.f32.gmra.mxu0 %v1241
  %v1458 = vpop.f32.mrf.mxu0
  %v1459 = vadd.f32 %v1135, %v1458
  %1460 = vmatmul.f32.gmra.mxu0 %v1244
  %v1461 = vpop.f32.mrf.mxu0
  %v1462 = vadd.f32 %v1135, %v1461
  %1463 = vmatmul.f32.gmra.mxu0 %v1247
  %v1464 = vpop.f32.mrf.mxu0
  %v1465 = vadd.f32 %v1135, %v1464
  %1466 = vmatmul.f32.gmra.mxu0 %v1250
  %v1467 = vpop.f32.mrf.mxu0
  %v1468 = vadd.f32 %v1135, %v1467
  %1469 = vmatmul.f32.gmra.mxu0 %v1253
  %v1470 = vpop.f32.mrf.mxu0
  %v1471 = vadd.f32 %v1135, %v1470
  %1472 = vmatmul.f32.gmra.mxu0 %v1256
  %v1473 = vpop.f32.mrf.mxu0
  %v1474 = vadd.f32 %v1135, %v1473
  %1475 = vmatmul.f32.gmra.mxu0 %v1259
  %v1476 = vpop.f32.mrf.mxu0
  %v1477 = vadd.f32 %v1135, %v1476
  %1478 = vmatmul.f32.gmra.mxu0 %v1262
  %v1479 = vpop.f32.mrf.mxu0
  %v1480 = vadd.f32 %v1135, %v1479
  %1481 = vmatmul.f32.gmra.mxu0 %v1265
  %v1482 = vpop.f32.mrf.mxu0
  %v1483 = vadd.f32 %v1135, %v1482
  %1484 = vmatmul.f32.gmra.mxu0 %v1268
  %v1485 = vpop.f32.mrf.mxu0
  %v1486 = vadd.f32 %v1135, %v1485
  %1487 = vmatmul.f32.gmra.mxu0 %v1271
  %v1488 = vpop.f32.mrf.mxu0
  %v1489 = vadd.f32 %v1135, %v1488
  %1490 = vmatmul.f32.gmra.mxu0 %v1274
  %v1491 = vpop.f32.mrf.mxu0
  %v1492 = vadd.f32 %v1135, %v1491
  %1493 = vmatmul.f32.gmra.mxu0 %v1277
  %v1494 = vpop.f32.mrf.mxu0
  %v1495 = vadd.f32 %v1135, %v1494
  %1496 = vmatmul.f32.gmra.mxu0 %v1280
  %v1497 = vpop.f32.mrf.mxu0
  %v1498 = vadd.f32 %v1135, %v1497
  %1499 = vmatmul.f32.gmra.mxu0 %v1283
  %v1500 = vpop.f32.mrf.mxu0
  %v1501 = vadd.f32 %v1135, %v1500
  %1502 = vmatmul.f32.gmra.mxu0 %v1286
  %v1503 = vpop.f32.mrf.mxu0
  %v1504 = vadd.f32 %v1135, %v1503
  %1505 = vmatmul.f32.gmra.mxu0 %v1289
  %v1506 = vpop.f32.mrf.mxu0
  %v1507 = vadd.f32 %v1135, %v1506
  %1508 = vmatmul.f32.gmra.mxu0 %v1292
  %v1509 = vpop.f32.mrf.mxu0
  %v1510 = vadd.f32 %v1135, %v1509
  %1511 = vmatmul.f32.gmra.mxu0 %v1295
  %v1512 = vpop.f32.mrf.mxu0
  %v1513 = vadd.f32 %v1135, %v1512
  %1514 = vmatmul.f32.gmra.mxu0 %v1298
  %v1515 = vpop.f32.mrf.mxu0
  %v1516 = vadd.f32 %v1135, %v1515
  %1517 = vmatmul.f32.gmra.mxu0 %v1301
  %v1518 = vpop.f32.mrf.mxu0
  %v1519 = vadd.f32 %v1135, %v1518
  %1520 = vmatmul.f32.gmra.mxu0 %v1304
  %v1521 = vpop.f32.mrf.mxu0
  %v1522 = vadd.f32 %v1135, %v1521
  %1523 = vmatmul.f32.gmra.mxu0 %v1307
  %v1524 = vpop.f32.mrf.mxu0
  %v1525 = vadd.f32 %v1135, %v1524
  %1526 = vmatmul.f32.gmra.mxu0 %v1310
  %v1527 = vpop.f32.mrf.mxu0
  %v1528 = vadd.f32 %v1135, %v1527
  %1529 = vmatmul.f32.gmra.mxu0 %v1313
  %v1530 = vpop.f32.mrf.mxu0
  %v1531 = vadd.f32 %v1135, %v1530
  %1532 = vmatmul.f32.gmra.mxu0 %v1316
  %v1533 = vpop.f32.mrf.mxu0
  %v1534 = vadd.f32 %v1135, %v1533
  %1535 = vmatmul.f32.gmra.mxu0 %v1319
  %v1536 = vpop.f32.mrf.mxu0
  %v1537 = vadd.f32 %v1135, %v1536
  %1538 = vmatmul.f32.gmra.mxu0 %v1322
  %v1539 = vpop.f32.mrf.mxu0
  %v1540 = vadd.f32 %v1135, %v1539
  %1541 = vmatmul.f32.gmra.mxu0 %v1325
  %v1542 = vpop.f32.mrf.mxu0
  %v1543 = vadd.f32 %v1135, %v1542
  %1544 = vmatmul.f32.gmra.mxu0 %v1328
  %v1545 = vpop.f32.mrf.mxu0
  %v1546 = vadd.f32 %v1135, %v1545
  %1547 = vmatmul.f32.gmra.mxu0 %v1331
  %v1548 = vpop.f32.mrf.mxu0
  %v1549 = vadd.f32 %v1135, %v1548
  %1550 = vmatmul.f32.gmra.mxu0 %v1334
  %v1551 = vpop.f32.mrf.mxu0
  %v1552 = vadd.f32 %v1135, %v1551
  %1553 = vmatmul.f32.gmra.mxu0 %v1337
  %v1554 = vpop.f32.mrf.mxu0
  %v1555 = vadd.f32 %v1135, %v1554
  %1556 = vdwg.mxu0
  %v1557 = vld [vmem:[%s1] sm:$0xff]
  %v1558 = vld [vmem:[%s1 + $0x8] sm:$0xff]
  %v1559 = vld [vmem:[%s1 + $0x10] sm:$0xff]
  %v1560 = vld [vmem:[%s1 + $0x18] sm:$0xff]
  %v1561 = vld [vmem:[%s1 + $0x20] sm:$0xff]
  %v1562 = vld [vmem:[%s1 + $0x28] sm:$0xff]
  %v1563 = vld [vmem:[%s1 + $0x30] sm:$0xff]
  %v1564 = vld [vmem:[%s1 + $0x38] sm:$0xff]
  %v1565 = vld [vmem:[%s1 + $0x40] sm:$0xff]
  %v1566 = vld [vmem:[%s1 + $0x48] sm:$0xff]
  %v1567 = vld [vmem:[%s1 + $0x50] sm:$0xff]
  %v1568 = vld [vmem:[%s1 + $0x58] sm:$0xff]
  %v1569 = vld [vmem:[%s1 + $0x60] sm:$0xff]
  %v1570 = vld [vmem:[%s1 + $0x68] sm:$0xff]
  %v1571 = vld [vmem:[%s1 + $0x70] sm:$0xff]
  %v1572 = vld [vmem:[%s1 + $0x78] sm:$0xff]
  %v1573 = vld [vmem:[%s1 + $0x80] sm:$0xff]
  %v1574 = vld [vmem:[%s1 + $0x88] sm:$0xff]
  %v1575 = vld [vmem:[%s1 + $0x90] sm:$0xff]
  %v1576 = vld [vmem:[%s1 + $0x98] sm:$0xff]
  %v1577 = vld [vmem:[%s1 + $0xa0] sm:$0xff]
  %v1578 = vld [vmem:[%s1 + $0xa8] sm:$0xff]
  %v1579 = vld [vmem:[%s1 + $0xb0] sm:$0xff]
  %v1580 = vld [vmem:[%s1 + $0xb8] sm:$0xff]
  %v1581 = vld [vmem:[%s1 + $0xc0] sm:$0xff]
  %v1582 = vld [vmem:[%s1 + $0xc8] sm:$0xff]
  %v1583 = vld [vmem:[%s1 + $0xd0] sm:$0xff]
  %v1584 = vld [vmem:[%s1 + $0xd8] sm:$0xff]
  %v1585 = vld [vmem:[%s1 + $0xe0] sm:$0xff]
  %v1586 = vld [vmem:[%s1 + $0xe8] sm:$0xff]
  %v1587 = vld [vmem:[%s1 + $0xf0] sm:$0xff]
  %v1588 = vld [vmem:[%s1 + $0xf8] sm:$0xff]
  %v1589 = vld [vmem:[%s1 + $0x100] sm:$0xff]
  %v1590 = vld [vmem:[%s1 + $0x108] sm:$0xff]
  %v1591 = vld [vmem:[%s1 + $0x110] sm:$0xff]
  %v1592 = vld [vmem:[%s1 + $0x118] sm:$0xff]
  %v1593 = vld [vmem:[%s1 + $0x120] sm:$0xff]
  %v1594 = vld [vmem:[%s1 + $0x128] sm:$0xff]
  %v1595 = vld [vmem:[%s1 + $0x130] sm:$0xff]
  %v1596 = vld [vmem:[%s1 + $0x138] sm:$0xff]
  %v1597 = vld [vmem:[%s1 + $0x140] sm:$0xff]
  %v1598 = vld [vmem:[%s1 + $0x148] sm:$0xff]
  %v1599 = vld [vmem:[%s1 + $0x150] sm:$0xff]
  %v1600 = vld [vmem:[%s1 + $0x158] sm:$0xff]
  %v1601 = vld [vmem:[%s1 + $0x160] sm:$0xff]
  %v1602 = vld [vmem:[%s1 + $0x168] sm:$0xff]
  %v1603 = vld [vmem:[%s1 + $0x170] sm:$0xff]
  %v1604 = vld [vmem:[%s1 + $0x178] sm:$0xff]
  %v1605 = vld [vmem:[%s1 + $0x180] sm:$0xff]
  %v1606 = vld [vmem:[%s1 + $0x188] sm:$0xff]
  %v1607 = vld [vmem:[%s1 + $0x190] sm:$0xff]
  %v1608 = vld [vmem:[%s1 + $0x198] sm:$0xff]
  %v1609 = vld [vmem:[%s1 + $0x1a0] sm:$0xff]
  %v1610 = vld [vmem:[%s1 + $0x1a8] sm:$0xff]
  %v1611 = vld [vmem:[%s1 + $0x1b0] sm:$0xff]
  %v1612 = vld [vmem:[%s1 + $0x1b8] sm:$0xff]
  %v1613 = vld [vmem:[%s1 + $0x1c0] sm:$0xff]
  %v1614 = vld [vmem:[%s1 + $0x1c8] sm:$0xff]
  %v1615 = vld [vmem:[%s1 + $0x1d0] sm:$0xff]
  %v1616 = vld [vmem:[%s1 + $0x1d8] sm:$0xff]
  %v1617 = vld [vmem:[%s1 + $0x1e0] sm:$0xff]
  %v1618 = vld [vmem:[%s1 + $0x1e8] sm:$0xff]
  %v1619 = vld [vmem:[%s1 + $0x1f0] sm:$0xff]
  %v1620 = vld [vmem:[%s1 + $0x1f8] sm:$0xff]
  %v1621 = vld [vmem:[%s1 + $0x200] sm:$0xff]
  %v1622 = vld [vmem:[%s1 + $0x208] sm:$0xff]
  %v1623 = vld [vmem:[%s1 + $0x210] sm:$0xff]
  %v1624 = vld [vmem:[%s5] sm:$0x1]
  %v1625 = vld [vmem:[%s6] sm:$0x1]
  %1627 = vset.pattern.permute.xlu0 0
  %1628 = vperm.xlu0 %1627, %v1557
  %v1629 = vpop.permute.xlu0 %1628
  %1632 = vset.pattern.permute.xlu0 0
  %1633 = vperm.xlu0 %1632, %v1558
  %v1634 = vpop.permute.xlu0 %1633
  %1637 = vset.pattern.permute.xlu0 0
  %1638 = vperm.xlu0 %1637, %v1559
  %v1639 = vpop.permute.xlu0 %1638
  %1642 = vset.pattern.permute.xlu0 0
  %1643 = vperm.xlu0 %1642, %v1560
  %v1644 = vpop.permute.xlu0 %1643
  %1647 = vset.pattern.permute.xlu0 0
  %1648 = vperm.xlu0 %1647, %v1561
  %v1649 = vpop.permute.xlu0 %1648
  %1652 = vset.pattern.permute.xlu0 0
  %1653 = vperm.xlu0 %1652, %v1562
  %v1654 = vpop.permute.xlu0 %1653
  %1657 = vset.pattern.permute.xlu0 0
  %1658 = vperm.xlu0 %1657, %v1563
  %v1659 = vpop.permute.xlu0 %1658
  %1662 = vset.pattern.permute.xlu0 0
  %1663 = vperm.xlu0 %1662, %v1564
  %v1664 = vpop.permute.xlu0 %1663
  %1667 = vset.pattern.permute.xlu0 0
  %1668 = vperm.xlu0 %1667, %v1565
  %v1669 = vpop.permute.xlu0 %1668
  %1672 = vset.pattern.permute.xlu0 0
  %1673 = vperm.xlu0 %1672, %v1566
  %v1674 = vpop.permute.xlu0 %1673
  %1677 = vset.pattern.permute.xlu0 0
  %1678 = vperm.xlu0 %1677, %v1567
  %v1679 = vpop.permute.xlu0 %1678
  %1682 = vset.pattern.permute.xlu0 0
  %1683 = vperm.xlu0 %1682, %v1568
  %v1684 = vpop.permute.xlu0 %1683
  %1687 = vset.pattern.permute.xlu0 0
  %1688 = vperm.xlu0 %1687, %v1569
  %v1689 = vpop.permute.xlu0 %1688
  %1692 = vset.pattern.permute.xlu0 0
  %1693 = vperm.xlu0 %1692, %v1570
  %v1694 = vpop.permute.xlu0 %1693
  %1697 = vset.pattern.permute.xlu0 0
  %1698 = vperm.xlu0 %1697, %v1571
  %v1699 = vpop.permute.xlu0 %1698
  %1702 = vset.pattern.permute.xlu0 0
  %1703 = vperm.xlu0 %1702, %v1572
  %v1704 = vpop.permute.xlu0 %1703
  %1707 = vset.pattern.permute.xlu0 0
  %1708 = vperm.xlu0 %1707, %v1573
  %v1709 = vpop.permute.xlu0 %1708
  %1712 = vset.pattern.permute.xlu0 0
  %1713 = vperm.xlu0 %1712, %v1574
  %v1714 = vpop.permute.xlu0 %1713
  %1717 = vset.pattern.permute.xlu0 0
  %1718 = vperm.xlu0 %1717, %v1575
  %v1719 = vpop.permute.xlu0 %1718
  %1722 = vset.pattern.permute.xlu0 0
  %1723 = vperm.xlu0 %1722, %v1576
  %v1724 = vpop.permute.xlu0 %1723
  %1727 = vset.pattern.permute.xlu0 0
  %1728 = vperm.xlu0 %1727, %v1577
  %v1729 = vpop.permute.xlu0 %1728
  %1732 = vset.pattern.permute.xlu0 0
  %1733 = vperm.xlu0 %1732, %v1578
  %v1734 = vpop.permute.xlu0 %1733
  %1737 = vset.pattern.permute.xlu0 0
  %1738 = vperm.xlu0 %1737, %v1579
  %v1739 = vpop.permute.xlu0 %1738
  %1742 = vset.pattern.permute.xlu0 0
  %1743 = vperm.xlu0 %1742, %v1580
  %v1744 = vpop.permute.xlu0 %1743
  %1747 = vset.pattern.permute.xlu0 0
  %1748 = vperm.xlu0 %1747, %v1581
  %v1749 = vpop.permute.xlu0 %1748
  %1752 = vset.pattern.permute.xlu0 0
  %1753 = vperm.xlu0 %1752, %v1582
  %v1754 = vpop.permute.xlu0 %1753
  %1757 = vset.pattern.permute.xlu0 0
  %1758 = vperm.xlu0 %1757, %v1583
  %v1759 = vpop.permute.xlu0 %1758
  %1762 = vset.pattern.permute.xlu0 0
  %1763 = vperm.xlu0 %1762, %v1584
  %v1764 = vpop.permute.xlu0 %1763
  %1767 = vset.pattern.permute.xlu0 0
  %1768 = vperm.xlu0 %1767, %v1585
  %v1769 = vpop.permute.xlu0 %1768
  %1772 = vset.pattern.permute.xlu0 0
  %1773 = vperm.xlu0 %1772, %v1586
  %v1774 = vpop.permute.xlu0 %1773
  %1777 = vset.pattern.permute.xlu0 0
  %1778 = vperm.xlu0 %1777, %v1587
  %v1779 = vpop.permute.xlu0 %1778
  %1782 = vset.pattern.permute.xlu0 0
  %1783 = vperm.xlu0 %1782, %v1588
  %v1784 = vpop.permute.xlu0 %1783
  %1787 = vset.pattern.permute.xlu0 0
  %1788 = vperm.xlu0 %1787, %v1589
  %v1789 = vpop.permute.xlu0 %1788
  %1792 = vset.pattern.permute.xlu0 0
  %1793 = vperm.xlu0 %1792, %v1590
  %v1794 = vpop.permute.xlu0 %1793
  %1797 = vset.pattern.permute.xlu0 0
  %1798 = vperm.xlu0 %1797, %v1591
  %v1799 = vpop.permute.xlu0 %1798
  %1802 = vset.pattern.permute.xlu0 0
  %1803 = vperm.xlu0 %1802, %v1592
  %v1804 = vpop.permute.xlu0 %1803
  %1807 = vset.pattern.permute.xlu0 0
  %1808 = vperm.xlu0 %1807, %v1593
  %v1809 = vpop.permute.xlu0 %1808
  %1812 = vset.pattern.permute.xlu0 0
  %1813 = vperm.xlu0 %1812, %v1594
  %v1814 = vpop.permute.xlu0 %1813
  %1817 = vset.pattern.permute.xlu0 0
  %1818 = vperm.xlu0 %1817, %v1595
  %v1819 = vpop.permute.xlu0 %1818
  %1822 = vset.pattern.permute.xlu0 0
  %1823 = vperm.xlu0 %1822, %v1596
  %v1824 = vpop.permute.xlu0 %1823
  %1827 = vset.pattern.permute.xlu0 0
  %1828 = vperm.xlu0 %1827, %v1597
  %v1829 = vpop.permute.xlu0 %1828
  %1832 = vset.pattern.permute.xlu0 0
  %1833 = vperm.xlu0 %1832, %v1598
  %v1834 = vpop.permute.xlu0 %1833
  %1837 = vset.pattern.permute.xlu0 0
  %1838 = vperm.xlu0 %1837, %v1599
  %v1839 = vpop.permute.xlu0 %1838
  %1842 = vset.pattern.permute.xlu0 0
  %1843 = vperm.xlu0 %1842, %v1600
  %v1844 = vpop.permute.xlu0 %1843
  %1847 = vset.pattern.permute.xlu0 0
  %1848 = vperm.xlu0 %1847, %v1601
  %v1849 = vpop.permute.xlu0 %1848
  %1852 = vset.pattern.permute.xlu0 0
  %1853 = vperm.xlu0 %1852, %v1602
  %v1854 = vpop.permute.xlu0 %1853
  %1857 = vset.pattern.permute.xlu0 0
  %1858 = vperm.xlu0 %1857, %v1603
  %v1859 = vpop.permute.xlu0 %1858
  %1862 = vset.pattern.permute.xlu0 0
  %1863 = vperm.xlu0 %1862, %v1604
  %v1864 = vpop.permute.xlu0 %1863
  %1867 = vset.pattern.permute.xlu0 0
  %1868 = vperm.xlu0 %1867, %v1605
  %v1869 = vpop.permute.xlu0 %1868
  %1872 = vset.pattern.permute.xlu0 0
  %1873 = vperm.xlu0 %1872, %v1606
  %v1874 = vpop.permute.xlu0 %1873
  %1877 = vset.pattern.permute.xlu0 0
  %1878 = vperm.xlu0 %1877, %v1607
  %v1879 = vpop.permute.xlu0 %1878
  %1882 = vset.pattern.permute.xlu0 0
  %1883 = vperm.xlu0 %1882, %v1608
  %v1884 = vpop.permute.xlu0 %1883
  %1887 = vset.pattern.permute.xlu0 0
  %1888 = vperm.xlu0 %1887, %v1609
  %v1889 = vpop.permute.xlu0 %1888
  %1892 = vset.pattern.permute.xlu0 0
  %1893 = vperm.xlu0 %1892, %v1610
  %v1894 = vpop.permute.xlu0 %1893
  %1897 = vset.pattern.permute.xlu0 0
  %1898 = vperm.xlu0 %1897, %v1611
  %v1899 = vpop.permute.xlu0 %1898
  %1902 = vset.pattern.permute.xlu0 0
  %1903 = vperm.xlu0 %1902, %v1612
  %v1904 = vpop.permute.xlu0 %1903
  %1907 = vset.pattern.permute.xlu0 0
  %1908 = vperm.xlu0 %1907, %v1613
  %v1909 = vpop.permute.xlu0 %1908
  %1912 = vset.pattern.permute.xlu0 0
  %1913 = vperm.xlu0 %1912, %v1614
  %v1914 = vpop.permute.xlu0 %1913
  %1917 = vset.pattern.permute.xlu0 0
  %1918 = vperm.xlu0 %1917, %v1615
  %v1919 = vpop.permute.xlu0 %1918
  %1922 = vset.pattern.permute.xlu0 0
  %1923 = vperm.xlu0 %1922, %v1616
  %v1924 = vpop.permute.xlu0 %1923
  %1927 = vset.pattern.permute.xlu0 0
  %1928 = vperm.xlu0 %1927, %v1617
  %v1929 = vpop.permute.xlu0 %1928
  %1932 = vset.pattern.permute.xlu0 0
  %1933 = vperm.xlu0 %1932, %v1618
  %v1934 = vpop.permute.xlu0 %1933
  %1937 = vset.pattern.permute.xlu0 0
  %1938 = vperm.xlu0 %1937, %v1619
  %v1939 = vpop.permute.xlu0 %1938
  %1942 = vset.pattern.permute.xlu0 0
  %1943 = vperm.xlu0 %1942, %v1620
  %v1944 = vpop.permute.xlu0 %1943
  %1947 = vset.pattern.permute.xlu0 0
  %1948 = vperm.xlu0 %1947, %v1621
  %v1949 = vpop.permute.xlu0 %1948
  %1952 = vset.pattern.permute.xlu0 0
  %1953 = vperm.xlu0 %1952, %v1622
  %v1954 = vpop.permute.xlu0 %1953
  %1957 = vset.pattern.permute.xlu0 0
  %1958 = vperm.xlu0 %1957, %v1623
  %v1959 = vpop.permute.xlu0 %1958
  %v1961 = vmul.f32 %v1357, %v1629
  %v1962 = vmul.f32 %v1360, %v1634
  %v1963 = vmul.f32 %v1363, %v1639
  %v1964 = vmul.f32 %v1366, %v1644
  %v1965 = vmul.f32 %v1369, %v1649
  %v1966 = vmul.f32 %v1372, %v1654
  %v1967 = vmul.f32 %v1375, %v1659
  %v1968 = vmul.f32 %v1378, %v1664
  %v1969 = vmul.f32 %v1381, %v1669
  %v1970 = vmul.f32 %v1384, %v1674
  %v1971 = vmul.f32 %v1387, %v1679
  %v1972 = vmul.f32 %v1390, %v1684
  %v1973 = vmul.f32 %v1393, %v1689
  %v1974 = vmul.f32 %v1396, %v1694
  %v1975 = vmul.f32 %v1399, %v1699
  %v1976 = vmul.f32 %v1402, %v1704
  %v1977 = vmul.f32 %v1405, %v1709
  %v1978 = vmul.f32 %v1408, %v1714
  %v1979 = vmul.f32 %v1411, %v1719
  %v1980 = vmul.f32 %v1414, %v1724
  %v1981 = vmul.f32 %v1417, %v1729
  %v1982 = vmul.f32 %v1420, %v1734
  %v1983 = vmul.f32 %v1423, %v1739
  %v1984 = vmul.f32 %v1426, %v1744
  %v1985 = vmul.f32 %v1429, %v1749
  %v1986 = vmul.f32 %v1432, %v1754
  %v1987 = vmul.f32 %v1435, %v1759
  %v1988 = vmul.f32 %v1438, %v1764
  %v1989 = vmul.f32 %v1441, %v1769
  %v1990 = vmul.f32 %v1444, %v1774
  %v1991 = vmul.f32 %v1447, %v1779
  %v1992 = vmul.f32 %v1450, %v1784
  %v1993 = vmul.f32 %v1453, %v1789
  %v1994 = vmul.f32 %v1456, %v1794
  %v1995 = vmul.f32 %v1459, %v1799
  %v1996 = vmul.f32 %v1462, %v1804
  %v1997 = vmul.f32 %v1465, %v1809
  %v1998 = vmul.f32 %v1468, %v1814
  %v1999 = vmul.f32 %v1471, %v1819
  %v2000 = vmul.f32 %v1474, %v1824
  %v2001 = vmul.f32 %v1477, %v1829
  %v2002 = vmul.f32 %v1480, %v1834
  %v2003 = vmul.f32 %v1483, %v1839
  %v2004 = vmul.f32 %v1486, %v1844
  %v2005 = vmul.f32 %v1489, %v1849
  %v2006 = vmul.f32 %v1492, %v1854
  %v2007 = vmul.f32 %v1495, %v1859
  %v2008 = vmul.f32 %v1498, %v1864
  %v2009 = vmul.f32 %v1501, %v1869
  %v2010 = vmul.f32 %v1504, %v1874
  %v2011 = vmul.f32 %v1507, %v1879
  %v2012 = vmul.f32 %v1510, %v1884
  %v2013 = vmul.f32 %v1513, %v1889
  %v2014 = vmul.f32 %v1516, %v1894
  %v2015 = vmul.f32 %v1519, %v1899
  %v2016 = vmul.f32 %v1522, %v1904
  %v2017 = vmul.f32 %v1525, %v1909
  %v2018 = vmul.f32 %v1528, %v1914
  %v2019 = vmul.f32 %v1531, %v1919
  %v2020 = vmul.f32 %v1534, %v1924
  %v2021 = vmul.f32 %v1537, %v1929
  %v2022 = vmul.f32 %v1540, %v1934
  %v2023 = vmul.f32 %v1543, %v1939
  %v2024 = vmul.f32 %v1546, %v1944
  %v2025 = vmul.f32 %v1549, %v1949
  %v2026 = vmul.f32 %v1552, %v1954
  %v2027 = vmul.f32 %v1555, %v1959
  %vm2028 = vcmask 261120
  %v2029 = vsel %vm2028, %v1961, 0.0
  %v2030 = vsel %vm2028, %v1962, 0.0
  %v2031 = vadd.f32 %v2029, %v2030
  %v2032 = vsel %vm2028, %v1963, 0.0
  %v2033 = vadd.f32 %v2031, %v2032
  %v2034 = vsel %vm2028, %v1964, 0.0
  %v2035 = vadd.f32 %v2033, %v2034
  %v2036 = vsel %vm2028, %v1965, 0.0
  %v2037 = vadd.f32 %v2035, %v2036
  %v2038 = vsel %vm2028, %v1966, 0.0
  %v2039 = vadd.f32 %v2037, %v2038
  %v2040 = vsel %vm2028, %v1967, 0.0
  %v2041 = vadd.f32 %v2039, %v2040
  %v2042 = vsel %vm2028, %v1968, 0.0
  %v2043 = vadd.f32 %v2041, %v2042
  %v2044 = vsel %vm2028, %v1969, 0.0
  %v2045 = vadd.f32 %v2043, %v2044
  %v2046 = vsel %vm2028, %v1970, 0.0
  %v2047 = vadd.f32 %v2045, %v2046
  %v2048 = vsel %vm2028, %v1971, 0.0
  %v2049 = vadd.f32 %v2047, %v2048
  %v2050 = vsel %vm2028, %v1972, 0.0
  %v2051 = vadd.f32 %v2049, %v2050
  %v2052 = vsel %vm2028, %v1973, 0.0
  %v2053 = vadd.f32 %v2051, %v2052
  %v2054 = vsel %vm2028, %v1974, 0.0
  %v2055 = vadd.f32 %v2053, %v2054
  %v2056 = vsel %vm2028, %v1975, 0.0
  %v2057 = vadd.f32 %v2055, %v2056
  %v2058 = vsel %vm2028, %v1976, 0.0
  %v2059 = vadd.f32 %v2057, %v2058
  %v2060 = vsel %vm2028, %v1977, 0.0
  %v2061 = vadd.f32 %v2059, %v2060
  %v2062 = vsel %vm2028, %v1978, 0.0
  %v2063 = vadd.f32 %v2061, %v2062
  %v2064 = vsel %vm2028, %v1979, 0.0
  %v2065 = vadd.f32 %v2063, %v2064
  %v2066 = vsel %vm2028, %v1980, 0.0
  %v2067 = vadd.f32 %v2065, %v2066
  %v2068 = vsel %vm2028, %v1981, 0.0
  %v2069 = vadd.f32 %v2067, %v2068
  %v2070 = vsel %vm2028, %v1982, 0.0
  %v2071 = vadd.f32 %v2069, %v2070
  %v2072 = vsel %vm2028, %v1983, 0.0
  %v2073 = vadd.f32 %v2071, %v2072
  %v2074 = vsel %vm2028, %v1984, 0.0
  %v2075 = vadd.f32 %v2073, %v2074
  %v2076 = vsel %vm2028, %v1985, 0.0
  %v2077 = vadd.f32 %v2075, %v2076
  %v2078 = vsel %vm2028, %v1986, 0.0
  %v2079 = vadd.f32 %v2077, %v2078
  %v2080 = vsel %vm2028, %v1987, 0.0
  %v2081 = vadd.f32 %v2079, %v2080
  %v2082 = vsel %vm2028, %v1988, 0.0
  %v2083 = vadd.f32 %v2081, %v2082
  %v2084 = vsel %vm2028, %v1989, 0.0
  %v2085 = vadd.f32 %v2083, %v2084
  %v2086 = vsel %vm2028, %v1990, 0.0
  %v2087 = vadd.f32 %v2085, %v2086
  %v2088 = vsel %vm2028, %v1991, 0.0
  %v2089 = vadd.f32 %v2087, %v2088
  %v2090 = vsel %vm2028, %v1992, 0.0
  %v2091 = vadd.f32 %v2089, %v2090
  %v2092 = vsel %vm2028, %v1993, 0.0
  %v2093 = vadd.f32 %v2091, %v2092
  %v2094 = vsel %vm2028, %v1994, 0.0
  %v2095 = vadd.f32 %v2093, %v2094
  %v2096 = vsel %vm2028, %v1995, 0.0
  %v2097 = vadd.f32 %v2095, %v2096
  %v2098 = vsel %vm2028, %v1996, 0.0
  %v2099 = vadd.f32 %v2097, %v2098
  %v2100 = vsel %vm2028, %v1997, 0.0
  %v2101 = vadd.f32 %v2099, %v2100
  %v2102 = vsel %vm2028, %v1998, 0.0
  %v2103 = vadd.f32 %v2101, %v2102
  %v2104 = vsel %vm2028, %v1999, 0.0
  %v2105 = vadd.f32 %v2103, %v2104
  %v2106 = vsel %vm2028, %v2000, 0.0
  %v2107 = vadd.f32 %v2105, %v2106
  %v2108 = vsel %vm2028, %v2001, 0.0
  %v2109 = vadd.f32 %v2107, %v2108
  %v2110 = vsel %vm2028, %v2002, 0.0
  %v2111 = vadd.f32 %v2109, %v2110
  %v2112 = vsel %vm2028, %v2003, 0.0
  %v2113 = vadd.f32 %v2111, %v2112
  %v2114 = vsel %vm2028, %v2004, 0.0
  %v2115 = vadd.f32 %v2113, %v2114
  %v2116 = vsel %vm2028, %v2005, 0.0
  %v2117 = vadd.f32 %v2115, %v2116
  %v2118 = vsel %vm2028, %v2006, 0.0
  %v2119 = vadd.f32 %v2117, %v2118
  %v2120 = vsel %vm2028, %v2007, 0.0
  %v2121 = vadd.f32 %v2119, %v2120
  %v2122 = vsel %vm2028, %v2008, 0.0
  %v2123 = vadd.f32 %v2121, %v2122
  %v2124 = vsel %vm2028, %v2009, 0.0
  %v2125 = vadd.f32 %v2123, %v2124
  %v2126 = vsel %vm2028, %v2010, 0.0
  %v2127 = vadd.f32 %v2125, %v2126
  %v2128 = vsel %vm2028, %v2011, 0.0
  %v2129 = vadd.f32 %v2127, %v2128
  %v2130 = vsel %vm2028, %v2012, 0.0
  %v2131 = vadd.f32 %v2129, %v2130
  %v2132 = vsel %vm2028, %v2013, 0.0
  %v2133 = vadd.f32 %v2131, %v2132
  %v2134 = vsel %vm2028, %v2014, 0.0
  %v2135 = vadd.f32 %v2133, %v2134
  %v2136 = vsel %vm2028, %v2015, 0.0
  %v2137 = vadd.f32 %v2135, %v2136
  %v2138 = vsel %vm2028, %v2016, 0.0
  %v2139 = vadd.f32 %v2137, %v2138
  %v2140 = vsel %vm2028, %v2017, 0.0
  %v2141 = vadd.f32 %v2139, %v2140
  %v2142 = vsel %vm2028, %v2018, 0.0
  %v2143 = vadd.f32 %v2141, %v2142
  %v2144 = vsel %vm2028, %v2019, 0.0
  %v2145 = vadd.f32 %v2143, %v2144
  %v2146 = vsel %vm2028, %v2020, 0.0
  %v2147 = vadd.f32 %v2145, %v2146
  %v2148 = vsel %vm2028, %v2021, 0.0
  %v2149 = vadd.f32 %v2147, %v2148
  %v2150 = vsel %vm2028, %v2022, 0.0
  %v2151 = vadd.f32 %v2149, %v2150
  %v2152 = vsel %vm2028, %v2023, 0.0
  %v2153 = vadd.f32 %v2151, %v2152
  %v2154 = vsel %vm2028, %v2024, 0.0
  %v2155 = vadd.f32 %v2153, %v2154
  %v2156 = vsel %vm2028, %v2025, 0.0
  %v2157 = vadd.f32 %v2155, %v2156
  %v2158 = vsel %vm2028, %v2026, 0.0
  %v2159 = vadd.f32 %v2157, %v2158
  %v2160 = vsel %vm2028, %v2027, 0.0
  %v2161 = vadd.f32 %v2159, %v2160
  %v2162 = vrot.slane %v2161, 4
  %v2163 = vadd.f32 %v2161, %v2162
  %v2164 = vrot.slane %v2163, 2
  %v2165 = vadd.f32 %v2163, %v2164
  %v2166 = vrot.slane %v2165, 1
  %v2167 = vadd.f32 %v2165, %v2166
  %v2168 = vmul.f32 %v2167, 0.0022222223
  %v2169 = vsub.f32 %v1357, %v2168
  %v2170 = vsub.f32 %v1360, %v2168
  %v2171 = vsub.f32 %v1363, %v2168
  %v2172 = vsub.f32 %v1366, %v2168
  %v2173 = vsub.f32 %v1369, %v2168
  %v2174 = vsub.f32 %v1372, %v2168
  %v2175 = vsub.f32 %v1375, %v2168
  %v2176 = vsub.f32 %v1378, %v2168
  %v2177 = vsub.f32 %v1381, %v2168
  %v2178 = vsub.f32 %v1384, %v2168
  %v2179 = vsub.f32 %v1387, %v2168
  %v2180 = vsub.f32 %v1390, %v2168
  %v2181 = vsub.f32 %v1393, %v2168
  %v2182 = vsub.f32 %v1396, %v2168
  %v2183 = vsub.f32 %v1399, %v2168
  %v2184 = vsub.f32 %v1402, %v2168
  %v2185 = vsub.f32 %v1405, %v2168
  %v2186 = vsub.f32 %v1408, %v2168
  %v2187 = vsub.f32 %v1411, %v2168
  %v2188 = vsub.f32 %v1414, %v2168
  %v2189 = vsub.f32 %v1417, %v2168
  %v2190 = vsub.f32 %v1420, %v2168
  %v2191 = vsub.f32 %v1423, %v2168
  %v2192 = vsub.f32 %v1426, %v2168
  %v2193 = vsub.f32 %v1429, %v2168
  %v2194 = vsub.f32 %v1432, %v2168
  %v2195 = vsub.f32 %v1435, %v2168
  %v2196 = vsub.f32 %v1438, %v2168
  %v2197 = vsub.f32 %v1441, %v2168
  %v2198 = vsub.f32 %v1444, %v2168
  %v2199 = vsub.f32 %v1447, %v2168
  %v2200 = vsub.f32 %v1450, %v2168
  %v2201 = vsub.f32 %v1453, %v2168
  %v2202 = vsub.f32 %v1456, %v2168
  %v2203 = vsub.f32 %v1459, %v2168
  %v2204 = vsub.f32 %v1462, %v2168
  %v2205 = vsub.f32 %v1465, %v2168
  %v2206 = vsub.f32 %v1468, %v2168
  %v2207 = vsub.f32 %v1471, %v2168
  %v2208 = vsub.f32 %v1474, %v2168
  %v2209 = vsub.f32 %v1477, %v2168
  %v2210 = vsub.f32 %v1480, %v2168
  %v2211 = vsub.f32 %v1483, %v2168
  %v2212 = vsub.f32 %v1486, %v2168
  %v2213 = vsub.f32 %v1489, %v2168
  %v2214 = vsub.f32 %v1492, %v2168
  %v2215 = vsub.f32 %v1495, %v2168
  %v2216 = vsub.f32 %v1498, %v2168
  %v2217 = vsub.f32 %v1501, %v2168
  %v2218 = vsub.f32 %v1504, %v2168
  %v2219 = vsub.f32 %v1507, %v2168
  %v2220 = vsub.f32 %v1510, %v2168
  %v2221 = vsub.f32 %v1513, %v2168
  %v2222 = vsub.f32 %v1516, %v2168
  %v2223 = vsub.f32 %v1519, %v2168
  %v2224 = vsub.f32 %v1522, %v2168
  %v2225 = vsub.f32 %v1525, %v2168
  %v2226 = vsub.f32 %v1528, %v2168
  %v2227 = vsub.f32 %v1531, %v2168
  %v2228 = vsub.f32 %v1534, %v2168
  %v2229 = vsub.f32 %v1537, %v2168
  %v2230 = vsub.f32 %v1540, %v2168
  %v2231 = vsub.f32 %v1543, %v2168
  %v2232 = vsub.f32 %v1546, %v2168
  %v2233 = vsub.f32 %v1549, %v2168
  %v2234 = vsub.f32 %v1552, %v2168
  %v2235 = vsub.f32 %v1555, %v2168
  %v2236 = vmul.f32 %v2169, %v2169
  %v2237 = vmul.f32 %v2170, %v2170
  %v2238 = vmul.f32 %v2171, %v2171
  %v2239 = vmul.f32 %v2172, %v2172
  %v2240 = vmul.f32 %v2173, %v2173
  %v2241 = vmul.f32 %v2174, %v2174
  %v2242 = vmul.f32 %v2175, %v2175
  %v2243 = vmul.f32 %v2176, %v2176
  %v2244 = vmul.f32 %v2177, %v2177
  %v2245 = vmul.f32 %v2178, %v2178
  %v2246 = vmul.f32 %v2179, %v2179
  %v2247 = vmul.f32 %v2180, %v2180
  %v2248 = vmul.f32 %v2181, %v2181
  %v2249 = vmul.f32 %v2182, %v2182
  %v2250 = vmul.f32 %v2183, %v2183
  %v2251 = vmul.f32 %v2184, %v2184
  %v2252 = vmul.f32 %v2185, %v2185
  %v2253 = vmul.f32 %v2186, %v2186
  %v2254 = vmul.f32 %v2187, %v2187
  %v2255 = vmul.f32 %v2188, %v2188
  %v2256 = vmul.f32 %v2189, %v2189
  %v2257 = vmul.f32 %v2190, %v2190
  %v2258 = vmul.f32 %v2191, %v2191
  %v2259 = vmul.f32 %v2192, %v2192
  %v2260 = vmul.f32 %v2193, %v2193
  %v2261 = vmul.f32 %v2194, %v2194
  %v2262 = vmul.f32 %v2195, %v2195
  %v2263 = vmul.f32 %v2196, %v2196
  %v2264 = vmul.f32 %v2197, %v2197
  %v2265 = vmul.f32 %v2198, %v2198
  %v2266 = vmul.f32 %v2199, %v2199
  %v2267 = vmul.f32 %v2200, %v2200
  %v2268 = vmul.f32 %v2201, %v2201
  %v2269 = vmul.f32 %v2202, %v2202
  %v2270 = vmul.f32 %v2203, %v2203
  %v2271 = vmul.f32 %v2204, %v2204
  %v2272 = vmul.f32 %v2205, %v2205
  %v2273 = vmul.f32 %v2206, %v2206
  %v2274 = vmul.f32 %v2207, %v2207
  %v2275 = vmul.f32 %v2208, %v2208
  %v2276 = vmul.f32 %v2209, %v2209
  %v2277 = vmul.f32 %v2210, %v2210
  %v2278 = vmul.f32 %v2211, %v2211
  %v2279 = vmul.f32 %v2212, %v2212
  %v2280 = vmul.f32 %v2213, %v2213
  %v2281 = vmul.f32 %v2214, %v2214
  %v2282 = vmul.f32 %v2215, %v2215
  %v2283 = vmul.f32 %v2216, %v2216
  %v2284 = vmul.f32 %v2217, %v2217
  %v2285 = vmul.f32 %v2218, %v2218
  %v2286 = vmul.f32 %v2219, %v2219
  %v2287 = vmul.f32 %v2220, %v2220
  %v2288 = vmul.f32 %v2221, %v2221
  %v2289 = vmul.f32 %v2222, %v2222
  %v2290 = vmul.f32 %v2223, %v2223
  %v2291 = vmul.f32 %v2224, %v2224
  %v2292 = vmul.f32 %v2225, %v2225
  %v2293 = vmul.f32 %v2226, %v2226
  %v2294 = vmul.f32 %v2227, %v2227
  %v2295 = vmul.f32 %v2228, %v2228
  %v2296 = vmul.f32 %v2229, %v2229
  %v2297 = vmul.f32 %v2230, %v2230
  %v2298 = vmul.f32 %v2231, %v2231
  %v2299 = vmul.f32 %v2232, %v2232
  %v2300 = vmul.f32 %v2233, %v2233
  %v2301 = vmul.f32 %v2234, %v2234
  %v2302 = vmul.f32 %v2235, %v2235
  %v2303 = vmul.f32 %v2236, %v1629
  %v2304 = vmul.f32 %v2237, %v1634
  %v2305 = vmul.f32 %v2238, %v1639
  %v2306 = vmul.f32 %v2239, %v1644
  %v2307 = vmul.f32 %v2240, %v1649
  %v2308 = vmul.f32 %v2241, %v1654
  %v2309 = vmul.f32 %v2242, %v1659
  %v2310 = vmul.f32 %v2243, %v1664
  %v2311 = vmul.f32 %v2244, %v1669
  %v2312 = vmul.f32 %v2245, %v1674
  %v2313 = vmul.f32 %v2246, %v1679
  %v2314 = vmul.f32 %v2247, %v1684
  %v2315 = vmul.f32 %v2248, %v1689
  %v2316 = vmul.f32 %v2249, %v1694
  %v2317 = vmul.f32 %v2250, %v1699
  %v2318 = vmul.f32 %v2251, %v1704
  %v2319 = vmul.f32 %v2252, %v1709
  %v2320 = vmul.f32 %v2253, %v1714
  %v2321 = vmul.f32 %v2254, %v1719
  %v2322 = vmul.f32 %v2255, %v1724
  %v2323 = vmul.f32 %v2256, %v1729
  %v2324 = vmul.f32 %v2257, %v1734
  %v2325 = vmul.f32 %v2258, %v1739
  %v2326 = vmul.f32 %v2259, %v1744
  %v2327 = vmul.f32 %v2260, %v1749
  %v2328 = vmul.f32 %v2261, %v1754
  %v2329 = vmul.f32 %v2262, %v1759
  %v2330 = vmul.f32 %v2263, %v1764
  %v2331 = vmul.f32 %v2264, %v1769
  %v2332 = vmul.f32 %v2265, %v1774
  %v2333 = vmul.f32 %v2266, %v1779
  %v2334 = vmul.f32 %v2267, %v1784
  %v2335 = vmul.f32 %v2268, %v1789
  %v2336 = vmul.f32 %v2269, %v1794
  %v2337 = vmul.f32 %v2270, %v1799
  %v2338 = vmul.f32 %v2271, %v1804
  %v2339 = vmul.f32 %v2272, %v1809
  %v2340 = vmul.f32 %v2273, %v1814
  %v2341 = vmul.f32 %v2274, %v1819
  %v2342 = vmul.f32 %v2275, %v1824
  %v2343 = vmul.f32 %v2276, %v1829
  %v2344 = vmul.f32 %v2277, %v1834
  %v2345 = vmul.f32 %v2278, %v1839
  %v2346 = vmul.f32 %v2279, %v1844
  %v2347 = vmul.f32 %v2280, %v1849
  %v2348 = vmul.f32 %v2281, %v1854
  %v2349 = vmul.f32 %v2282, %v1859
  %v2350 = vmul.f32 %v2283, %v1864
  %v2351 = vmul.f32 %v2284, %v1869
  %v2352 = vmul.f32 %v2285, %v1874
  %v2353 = vmul.f32 %v2286, %v1879
  %v2354 = vmul.f32 %v2287, %v1884
  %v2355 = vmul.f32 %v2288, %v1889
  %v2356 = vmul.f32 %v2289, %v1894
  %v2357 = vmul.f32 %v2290, %v1899
  %v2358 = vmul.f32 %v2291, %v1904
  %v2359 = vmul.f32 %v2292, %v1909
  %v2360 = vmul.f32 %v2293, %v1914
  %v2361 = vmul.f32 %v2294, %v1919
  %v2362 = vmul.f32 %v2295, %v1924
  %v2363 = vmul.f32 %v2296, %v1929
  %v2364 = vmul.f32 %v2297, %v1934
  %v2365 = vmul.f32 %v2298, %v1939
  %v2366 = vmul.f32 %v2299, %v1944
  %v2367 = vmul.f32 %v2300, %v1949
  %v2368 = vmul.f32 %v2301, %v1954
  %v2369 = vmul.f32 %v2302, %v1959
  %v2370 = vsel %vm2028, %v2303, 0.0
  %v2371 = vsel %vm2028, %v2304, 0.0
  %v2372 = vadd.f32 %v2370, %v2371
  %v2373 = vsel %vm2028, %v2305, 0.0
  %v2374 = vadd.f32 %v2372, %v2373
  %v2375 = vsel %vm2028, %v2306, 0.0
  %v2376 = vadd.f32 %v2374, %v2375
  %v2377 = vsel %vm2028, %v2307, 0.0
  %v2378 = vadd.f32 %v2376, %v2377
  %v2379 = vsel %vm2028, %v2308, 0.0
  %v2380 = vadd.f32 %v2378, %v2379
  %v2381 = vsel %vm2028, %v2309, 0.0
  %v2382 = vadd.f32 %v2380, %v2381
  %v2383 = vsel %vm2028, %v2310, 0.0
  %v2384 = vadd.f32 %v2382, %v2383
  %v2385 = vsel %vm2028, %v2311, 0.0
  %v2386 = vadd.f32 %v2384, %v2385
  %v2387 = vsel %vm2028, %v2312, 0.0
  %v2388 = vadd.f32 %v2386, %v2387
  %v2389 = vsel %vm2028, %v2313, 0.0
  %v2390 = vadd.f32 %v2388, %v2389
  %v2391 = vsel %vm2028, %v2314, 0.0
  %v2392 = vadd.f32 %v2390, %v2391
  %v2393 = vsel %vm2028, %v2315, 0.0
  %v2394 = vadd.f32 %v2392, %v2393
  %v2395 = vsel %vm2028, %v2316, 0.0
  %v2396 = vadd.f32 %v2394, %v2395
  %v2397 = vsel %vm2028, %v2317, 0.0
  %v2398 = vadd.f32 %v2396, %v2397
  %v2399 = vsel %vm2028, %v2318, 0.0
  %v2400 = vadd.f32 %v2398, %v2399
  %v2401 = vsel %vm2028, %v2319, 0.0
  %v2402 = vadd.f32 %v2400, %v2401
  %v2403 = vsel %vm2028, %v2320, 0.0
  %v2404 = vadd.f32 %v2402, %v2403
  %v2405 = vsel %vm2028, %v2321, 0.0
  %v2406 = vadd.f32 %v2404, %v2405
  %v2407 = vsel %vm2028, %v2322, 0.0
  %v2408 = vadd.f32 %v2406, %v2407
  %v2409 = vsel %vm2028, %v2323, 0.0
  %v2410 = vadd.f32 %v2408, %v2409
  %v2411 = vsel %vm2028, %v2324, 0.0
  %v2412 = vadd.f32 %v2410, %v2411
  %v2413 = vsel %vm2028, %v2325, 0.0
  %v2414 = vadd.f32 %v2412, %v2413
  %v2415 = vsel %vm2028, %v2326, 0.0
  %v2416 = vadd.f32 %v2414, %v2415
  %v2417 = vsel %vm2028, %v2327, 0.0
  %v2418 = vadd.f32 %v2416, %v2417
  %v2419 = vsel %vm2028, %v2328, 0.0
  %v2420 = vadd.f32 %v2418, %v2419
  %v2421 = vsel %vm2028, %v2329, 0.0
  %v2422 = vadd.f32 %v2420, %v2421
  %v2423 = vsel %vm2028, %v2330, 0.0
  %v2424 = vadd.f32 %v2422, %v2423
  %v2425 = vsel %vm2028, %v2331, 0.0
  %v2426 = vadd.f32 %v2424, %v2425
  %v2427 = vsel %vm2028, %v2332, 0.0
  %v2428 = vadd.f32 %v2426, %v2427
  %v2429 = vsel %vm2028, %v2333, 0.0
  %v2430 = vadd.f32 %v2428, %v2429
  %v2431 = vsel %vm2028, %v2334, 0.0
  %v2432 = vadd.f32 %v2430, %v2431
  %v2433 = vsel %vm2028, %v2335, 0.0
  %v2434 = vadd.f32 %v2432, %v2433
  %v2435 = vsel %vm2028, %v2336, 0.0
  %v2436 = vadd.f32 %v2434, %v2435
  %v2437 = vsel %vm2028, %v2337, 0.0
  %v2438 = vadd.f32 %v2436, %v2437
  %v2439 = vsel %vm2028, %v2338, 0.0
  %v2440 = vadd.f32 %v2438, %v2439
  %v2441 = vsel %vm2028, %v2339, 0.0
  %v2442 = vadd.f32 %v2440, %v2441
  %v2443 = vsel %vm2028, %v2340, 0.0
  %v2444 = vadd.f32 %v2442, %v2443
  %v2445 = vsel %vm2028, %v2341, 0.0
  %v2446 = vadd.f32 %v2444, %v2445
  %v2447 = vsel %vm2028, %v2342, 0.0
  %v2448 = vadd.f32 %v2446, %v2447
  %v2449 = vsel %vm2028, %v2343, 0.0
  %v2450 = vadd.f32 %v2448, %v2449
  %v2451 = vsel %vm2028, %v2344, 0.0
  %v2452 = vadd.f32 %v2450, %v2451
  %v2453 = vsel %vm2028, %v2345, 0.0
  %v2454 = vadd.f32 %v2452, %v2453
  %v2455 = vsel %vm2028, %v2346, 0.0
  %v2456 = vadd.f32 %v2454, %v2455
  %v2457 = vsel %vm2028, %v2347, 0.0
  %v2458 = vadd.f32 %v2456, %v2457
  %v2459 = vsel %vm2028, %v2348, 0.0
  %v2460 = vadd.f32 %v2458, %v2459
  %v2461 = vsel %vm2028, %v2349, 0.0
  %v2462 = vadd.f32 %v2460, %v2461
  %v2463 = vsel %vm2028, %v2350, 0.0
  %v2464 = vadd.f32 %v2462, %v2463
  %v2465 = vsel %vm2028, %v2351, 0.0
  %v2466 = vadd.f32 %v2464, %v2465
  %v2467 = vsel %vm2028, %v2352, 0.0
  %v2468 = vadd.f32 %v2466, %v2467
  %v2469 = vsel %vm2028, %v2353, 0.0
  %v2470 = vadd.f32 %v2468, %v2469
  %v2471 = vsel %vm2028, %v2354, 0.0
  %v2472 = vadd.f32 %v2470, %v2471
  %v2473 = vsel %vm2028, %v2355, 0.0
  %v2474 = vadd.f32 %v2472, %v2473
  %v2475 = vsel %vm2028, %v2356, 0.0
  %v2476 = vadd.f32 %v2474, %v2475
  %v2477 = vsel %vm2028, %v2357, 0.0
  %v2478 = vadd.f32 %v2476, %v2477
  %v2479 = vsel %vm2028, %v2358, 0.0
  %v2480 = vadd.f32 %v2478, %v2479
  %v2481 = vsel %vm2028, %v2359, 0.0
  %v2482 = vadd.f32 %v2480, %v2481
  %v2483 = vsel %vm2028, %v2360, 0.0
  %v2484 = vadd.f32 %v2482, %v2483
  %v2485 = vsel %vm2028, %v2361, 0.0
  %v2486 = vadd.f32 %v2484, %v2485
  %v2487 = vsel %vm2028, %v2362, 0.0
  %v2488 = vadd.f32 %v2486, %v2487
  %v2489 = vsel %vm2028, %v2363, 0.0
  %v2490 = vadd.f32 %v2488, %v2489
  %v2491 = vsel %vm2028, %v2364, 0.0
  %v2492 = vadd.f32 %v2490, %v2491
  %v2493 = vsel %vm2028, %v2365, 0.0
  %v2494 = vadd.f32 %v2492, %v2493
  %v2495 = vsel %vm2028, %v2366, 0.0
  %v2496 = vadd.f32 %v2494, %v2495
  %v2497 = vsel %vm2028, %v2367, 0.0
  %v2498 = vadd.f32 %v2496, %v2497
  %v2499 = vsel %vm2028, %v2368, 0.0
  %v2500 = vadd.f32 %v2498, %v2499
  %v2501 = vsel %vm2028, %v2369, 0.0
  %v2502 = vadd.f32 %v2500, %v2501
  %v2503 = vrot.slane %v2502, 4
  %v2504 = vadd.f32 %v2502, %v2503
  %v2505 = vrot.slane %v2504, 2
  %v2506 = vadd.f32 %v2504, %v2505
  %v2507 = vrot.slane %v2506, 1
  %v2508 = vadd.f32 %v2506, %v2507
  %v2509 = vmul.f32 %v2508, 0.0022222223
  %v2510 = vadd.f32 %v2509, 1e-05
  %v2511 = vrsqrt.pop %v2510
  %v2512 = vmul.f32 %v2511, %v2510
  %v2513 = vmul.f32 %v2512, %v2511
  %v2514 = vmul.f32 0.5, %v2513
  %v2515 = vsub.f32 1.5, %v2514
  %v2516 = vmul.f32 %v2511, %v2515
  %vm2517 = vweird.f32 %v2510
  %vm2518 = vweird.f32 %v2511
  %vm2519 = vmor %vm2517, %vm2518
  %v2520 = vsel %vm2519, %v2511, %v2516
  %v2521 = vmul.f32 %v1624, %v2520
  %v2523 = vperm.slane %v2521, 0
  %v2525 = vmul.f32 %v2169, %v2523
  %v2526 = vmul.f32 %v2170, %v2523
  %v2527 = vmul.f32 %v2171, %v2523
  %v2528 = vmul.f32 %v2172, %v2523
  %v2529 = vmul.f32 %v2173, %v2523
  %v2530 = vmul.f32 %v2174, %v2523
  %v2531 = vmul.f32 %v2175, %v2523
  %v2532 = vmul.f32 %v2176, %v2523
  %v2533 = vmul.f32 %v2177, %v2523
  %v2534 = vmul.f32 %v2178, %v2523
  %v2535 = vmul.f32 %v2179, %v2523
  %v2536 = vmul.f32 %v2180, %v2523
  %v2537 = vmul.f32 %v2181, %v2523
  %v2538 = vmul.f32 %v2182, %v2523
  %v2539 = vmul.f32 %v2183, %v2523
  %v2540 = vmul.f32 %v2184, %v2523
  %v2541 = vmul.f32 %v2185, %v2523
  %v2542 = vmul.f32 %v2186, %v2523
  %v2543 = vmul.f32 %v2187, %v2523
  %v2544 = vmul.f32 %v2188, %v2523
  %v2545 = vmul.f32 %v2189, %v2523
  %v2546 = vmul.f32 %v2190, %v2523
  %v2547 = vmul.f32 %v2191, %v2523
  %v2548 = vmul.f32 %v2192, %v2523
  %v2549 = vmul.f32 %v2193, %v2523
  %v2550 = vmul.f32 %v2194, %v2523
  %v2551 = vmul.f32 %v2195, %v2523
  %v2552 = vmul.f32 %v2196, %v2523
  %v2553 = vmul.f32 %v2197, %v2523
  %v2554 = vmul.f32 %v2198, %v2523
  %v2555 = vmul.f32 %v2199, %v2523
  %v2556 = vmul.f32 %v2200, %v2523
  %v2557 = vmul.f32 %v2201, %v2523
  %v2558 = vmul.f32 %v2202, %v2523
  %v2559 = vmul.f32 %v2203, %v2523
  %v2560 = vmul.f32 %v2204, %v2523
  %v2561 = vmul.f32 %v2205, %v2523
  %v2562 = vmul.f32 %v2206, %v2523
  %v2563 = vmul.f32 %v2207, %v2523
  %v2564 = vmul.f32 %v2208, %v2523
  %v2565 = vmul.f32 %v2209, %v2523
  %v2566 = vmul.f32 %v2210, %v2523
  %v2567 = vmul.f32 %v2211, %v2523
  %v2568 = vmul.f32 %v2212, %v2523
  %v2569 = vmul.f32 %v2213, %v2523
  %v2570 = vmul.f32 %v2214, %v2523
  %v2571 = vmul.f32 %v2215, %v2523
  %v2572 = vmul.f32 %v2216, %v2523
  %v2573 = vmul.f32 %v2217, %v2523
  %v2574 = vmul.f32 %v2218, %v2523
  %v2575 = vmul.f32 %v2219, %v2523
  %v2576 = vmul.f32 %v2220, %v2523
  %v2577 = vmul.f32 %v2221, %v2523
  %v2578 = vmul.f32 %v2222, %v2523
  %v2579 = vmul.f32 %v2223, %v2523
  %v2580 = vmul.f32 %v2224, %v2523
  %v2581 = vmul.f32 %v2225, %v2523
  %v2582 = vmul.f32 %v2226, %v2523
  %v2583 = vmul.f32 %v2227, %v2523
  %v2584 = vmul.f32 %v2228, %v2523
  %v2585 = vmul.f32 %v2229, %v2523
  %v2586 = vmul.f32 %v2230, %v2523
  %v2587 = vmul.f32 %v2231, %v2523
  %v2588 = vmul.f32 %v2232, %v2523
  %v2589 = vmul.f32 %v2233, %v2523
  %v2590 = vmul.f32 %v2234, %v2523
  %v2591 = vmul.f32 %v2235, %v2523
  %v2593 = vperm.slane %v1625, 0
  %v2595 = vadd.f32 %v2525, %v2593
  %v2596 = vadd.f32 %v2526, %v2593
  %v2597 = vadd.f32 %v2527, %v2593
  %v2598 = vadd.f32 %v2528, %v2593
  %v2599 = vadd.f32 %v2529, %v2593
  %v2600 = vadd.f32 %v2530, %v2593
  %v2601 = vadd.f32 %v2531, %v2593
  %v2602 = vadd.f32 %v2532, %v2593
  %v2603 = vadd.f32 %v2533, %v2593
  %v2604 = vadd.f32 %v2534, %v2593
  %v2605 = vadd.f32 %v2535, %v2593
  %v2606 = vadd.f32 %v2536, %v2593
  %v2607 = vadd.f32 %v2537, %v2593
  %v2608 = vadd.f32 %v2538, %v2593
  %v2609 = vadd.f32 %v2539, %v2593
  %v2610 = vadd.f32 %v2540, %v2593
  %v2611 = vadd.f32 %v2541, %v2593
  %v2612 = vadd.f32 %v2542, %v2593
  %v2613 = vadd.f32 %v2543, %v2593
  %v2614 = vadd.f32 %v2544, %v2593
  %v2615 = vadd.f32 %v2545, %v2593
  %v2616 = vadd.f32 %v2546, %v2593
  %v2617 = vadd.f32 %v2547, %v2593
  %v2618 = vadd.f32 %v2548, %v2593
  %v2619 = vadd.f32 %v2549, %v2593
  %v2620 = vadd.f32 %v2550, %v2593
  %v2621 = vadd.f32 %v2551, %v2593
  %v2622 = vadd.f32 %v2552, %v2593
  %v2623 = vadd.f32 %v2553, %v2593
  %v2624 = vadd.f32 %v2554, %v2593
  %v2625 = vadd.f32 %v2555, %v2593
  %v2626 = vadd.f32 %v2556, %v2593
  %v2627 = vadd.f32 %v2557, %v2593
  %v2628 = vadd.f32 %v2558, %v2593
  %v2629 = vadd.f32 %v2559, %v2593
  %v2630 = vadd.f32 %v2560, %v2593
  %v2631 = vadd.f32 %v2561, %v2593
  %v2632 = vadd.f32 %v2562, %v2593
  %v2633 = vadd.f32 %v2563, %v2593
  %v2634 = vadd.f32 %v2564, %v2593
  %v2635 = vadd.f32 %v2565, %v2593
  %v2636 = vadd.f32 %v2566, %v2593
  %v2637 = vadd.f32 %v2567, %v2593
  %v2638 = vadd.f32 %v2568, %v2593
  %v2639 = vadd.f32 %v2569, %v2593
  %v2640 = vadd.f32 %v2570, %v2593
  %v2641 = vadd.f32 %v2571, %v2593
  %v2642 = vadd.f32 %v2572, %v2593
  %v2643 = vadd.f32 %v2573, %v2593
  %v2644 = vadd.f32 %v2574, %v2593
  %v2645 = vadd.f32 %v2575, %v2593
  %v2646 = vadd.f32 %v2576, %v2593
  %v2647 = vadd.f32 %v2577, %v2593
  %v2648 = vadd.f32 %v2578, %v2593
  %v2649 = vadd.f32 %v2579, %v2593
  %v2650 = vadd.f32 %v2580, %v2593
  %v2651 = vadd.f32 %v2581, %v2593
  %v2652 = vadd.f32 %v2582, %v2593
  %v2653 = vadd.f32 %v2583, %v2593
  %v2654 = vadd.f32 %v2584, %v2593
  %v2655 = vadd.f32 %v2585, %v2593
  %v2656 = vadd.f32 %v2586, %v2593
  %v2657 = vadd.f32 %v2587, %v2593
  %v2658 = vadd.f32 %v2588, %v2593
  %v2659 = vadd.f32 %v2589, %v2593
  %v2660 = vadd.f32 %v2590, %v2593
  %v2661 = vadd.f32 %v2591, %v2593
  %v2662 = vmax.f32 %v2595, 0.0
  %v2663 = vmax.f32 %v2596, 0.0
  %v2664 = vmax.f32 %v2597, 0.0
  %v2665 = vmax.f32 %v2598, 0.0
  %v2666 = vmax.f32 %v2599, 0.0
  %v2667 = vmax.f32 %v2600, 0.0
  %v2668 = vmax.f32 %v2601, 0.0
  %v2669 = vmax.f32 %v2602, 0.0
  %v2670 = vmax.f32 %v2603, 0.0
  %v2671 = vmax.f32 %v2604, 0.0
  %v2672 = vmax.f32 %v2605, 0.0
  %v2673 = vmax.f32 %v2606, 0.0
  %v2674 = vmax.f32 %v2607, 0.0
  %v2675 = vmax.f32 %v2608, 0.0
  %v2676 = vmax.f32 %v2609, 0.0
  %v2677 = vmax.f32 %v2610, 0.0
  %v2678 = vmax.f32 %v2611, 0.0
  %v2679 = vmax.f32 %v2612, 0.0
  %v2680 = vmax.f32 %v2613, 0.0
  %v2681 = vmax.f32 %v2614, 0.0
  %v2682 = vmax.f32 %v2615, 0.0
  %v2683 = vmax.f32 %v2616, 0.0
  %v2684 = vmax.f32 %v2617, 0.0
  %v2685 = vmax.f32 %v2618, 0.0
  %v2686 = vmax.f32 %v2619, 0.0
  %v2687 = vmax.f32 %v2620, 0.0
  %v2688 = vmax.f32 %v2621, 0.0
  %v2689 = vmax.f32 %v2622, 0.0
  %v2690 = vmax.f32 %v2623, 0.0
  %v2691 = vmax.f32 %v2624, 0.0
  %v2692 = vmax.f32 %v2625, 0.0
  %v2693 = vmax.f32 %v2626, 0.0
  %v2694 = vmax.f32 %v2627, 0.0
  %v2695 = vmax.f32 %v2628, 0.0
  %v2696 = vmax.f32 %v2629, 0.0
  %v2697 = vmax.f32 %v2630, 0.0
  %v2698 = vmax.f32 %v2631, 0.0
  %v2699 = vmax.f32 %v2632, 0.0
  %v2700 = vmax.f32 %v2633, 0.0
  %v2701 = vmax.f32 %v2634, 0.0
  %v2702 = vmax.f32 %v2635, 0.0
  %v2703 = vmax.f32 %v2636, 0.0
  %v2704 = vmax.f32 %v2637, 0.0
  %v2705 = vmax.f32 %v2638, 0.0
  %v2706 = vmax.f32 %v2639, 0.0
  %v2707 = vmax.f32 %v2640, 0.0
  %v2708 = vmax.f32 %v2641, 0.0
  %v2709 = vmax.f32 %v2642, 0.0
  %v2710 = vmax.f32 %v2643, 0.0
  %v2711 = vmax.f32 %v2644, 0.0
  %v2712 = vmax.f32 %v2645, 0.0
  %v2713 = vmax.f32 %v2646, 0.0
  %v2714 = vmax.f32 %v2647, 0.0
  %v2715 = vmax.f32 %v2648, 0.0
  %v2716 = vmax.f32 %v2649, 0.0
  %v2717 = vmax.f32 %v2650, 0.0
  %v2718 = vmax.f32 %v2651, 0.0
  %v2719 = vmax.f32 %v2652, 0.0
  %v2720 = vmax.f32 %v2653, 0.0
  %v2721 = vmax.f32 %v2654, 0.0
  %v2722 = vmax.f32 %v2655, 0.0
  %v2723 = vmax.f32 %v2656, 0.0
  %v2724 = vmax.f32 %v2657, 0.0
  %v2725 = vmax.f32 %v2658, 0.0
  %v2726 = vmax.f32 %v2659, 0.0
  %v2727 = vmax.f32 %v2660, 0.0
  %v2728 = vmax.f32 %v2661, 0.0
  %v2794 = vrot.slane %v2662, 1
  %v2795 = vrot.slane %v2663, 1
  %v2796 = vsel %vm182, %v2794, %v2795
  %v2797 = vrot.slane %v2664, 1
  %v2798 = vsel %vm182, %v2795, %v2797
  %v2799 = vrot.slane %v2665, 1
  %v2800 = vsel %vm182, %v2797, %v2799
  %v2801 = vrot.slane %v2666, 1
  %v2802 = vsel %vm182, %v2799, %v2801
  %v2803 = vrot.slane %v2667, 1
  %v2804 = vsel %vm182, %v2801, %v2803
  %v2805 = vrot.slane %v2668, 1
  %v2806 = vsel %vm182, %v2803, %v2805
  %v2807 = vrot.slane %v2669, 1
  %v2808 = vsel %vm182, %v2805, %v2807
  %v2809 = vrot.slane %v2670, 1
  %v2810 = vsel %vm182, %v2807, %v2809
  %v2811 = vrot.slane %v2671, 1
  %v2812 = vsel %vm182, %v2809, %v2811
  %v2813 = vrot.slane %v2672, 1
  %v2814 = vsel %vm182, %v2811, %v2813
  %v2815 = vrot.slane %v2673, 1
  %v2816 = vsel %vm182, %v2813, %v2815
  %v2817 = vrot.slane %v2674, 1
  %v2818 = vsel %vm182, %v2815, %v2817
  %v2819 = vrot.slane %v2675, 1
  %v2820 = vsel %vm182, %v2817, %v2819
  %v2821 = vrot.slane %v2676, 1
  %v2822 = vsel %vm182, %v2819, %v2821
  %v2823 = vrot.slane %v2677, 1
  %v2824 = vsel %vm182, %v2821, %v2823
  %v2825 = vrot.slane %v2678, 1
  %v2826 = vsel %vm182, %v2823, %v2825
  %v2827 = vrot.slane %v2679, 1
  %v2828 = vsel %vm182, %v2825, %v2827
  %v2829 = vrot.slane %v2680, 1
  %v2830 = vsel %vm182, %v2827, %v2829
  %v2831 = vrot.slane %v2681, 1
  %v2832 = vsel %vm182, %v2829, %v2831
  %v2833 = vrot.slane %v2682, 1
  %v2834 = vsel %vm182, %v2831, %v2833
  %v2835 = vrot.slane %v2683, 1
  %v2836 = vsel %vm182, %v2833, %v2835
  %v2837 = vrot.slane %v2684, 1
  %v2838 = vsel %vm182, %v2835, %v2837
  %v2839 = vrot.slane %v2685, 1
  %v2840 = vsel %vm182, %v2837, %v2839
  %v2841 = vrot.slane %v2686, 1
  %v2842 = vsel %vm182, %v2839, %v2841
  %v2843 = vrot.slane %v2687, 1
  %v2844 = vsel %vm182, %v2841, %v2843
  %v2845 = vrot.slane %v2688, 1
  %v2846 = vsel %vm182, %v2843, %v2845
  %v2847 = vrot.slane %v2689, 1
  %v2848 = vsel %vm182, %v2845, %v2847
  %v2849 = vrot.slane %v2690, 1
  %v2850 = vsel %vm182, %v2847, %v2849
  %v2851 = vrot.slane %v2691, 1
  %v2852 = vsel %vm182, %v2849, %v2851
  %v2853 = vrot.slane %v2692, 1
  %v2854 = vsel %vm182, %v2851, %v2853
  %v2855 = vrot.slane %v2693, 1
  %v2856 = vsel %vm182, %v2853, %v2855
  %v2857 = vrot.slane %v2694, 1
  %v2858 = vsel %vm182, %v2855, %v2857
  %v2859 = vrot.slane %v2695, 1
  %v2860 = vsel %vm182, %v2857, %v2859
  %v2861 = vrot.slane %v2696, 1
  %v2862 = vsel %vm182, %v2859, %v2861
  %v2863 = vrot.slane %v2697, 1
  %v2864 = vsel %vm182, %v2861, %v2863
  %v2865 = vrot.slane %v2698, 1
  %v2866 = vsel %vm182, %v2863, %v2865
  %v2867 = vrot.slane %v2699, 1
  %v2868 = vsel %vm182, %v2865, %v2867
  %v2869 = vrot.slane %v2700, 1
  %v2870 = vsel %vm182, %v2867, %v2869
  %v2871 = vrot.slane %v2701, 1
  %v2872 = vsel %vm182, %v2869, %v2871
  %v2873 = vrot.slane %v2702, 1
  %v2874 = vsel %vm182, %v2871, %v2873
  %v2875 = vrot.slane %v2703, 1
  %v2876 = vsel %vm182, %v2873, %v2875
  %v2877 = vrot.slane %v2704, 1
  %v2878 = vsel %vm182, %v2875, %v2877
  %v2879 = vrot.slane %v2705, 1
  %v2880 = vsel %vm182, %v2877, %v2879
  %v2881 = vrot.slane %v2706, 1
  %v2882 = vsel %vm182, %v2879, %v2881
  %v2883 = vrot.slane %v2707, 1
  %v2884 = vsel %vm182, %v2881, %v2883
  %v2885 = vrot.slane %v2708, 1
  %v2886 = vsel %vm182, %v2883, %v2885
  %v2887 = vrot.slane %v2709, 1
  %v2888 = vsel %vm182, %v2885, %v2887
  %v2889 = vrot.slane %v2710, 1
  %v2890 = vsel %vm182, %v2887, %v2889
  %v2891 = vrot.slane %v2711, 1
  %v2892 = vsel %vm182, %v2889, %v2891
  %v2893 = vrot.slane %v2712, 1
  %v2894 = vsel %vm182, %v2891, %v2893
  %v2895 = vrot.slane %v2713, 1
  %v2896 = vsel %vm182, %v2893, %v2895
  %v2897 = vrot.slane %v2714, 1
  %v2898 = vsel %vm182, %v2895, %v2897
  %v2899 = vrot.slane %v2715, 1
  %v2900 = vsel %vm182, %v2897, %v2899
  %v2901 = vrot.slane %v2716, 1
  %v2902 = vsel %vm182, %v2899, %v2901
  %v2903 = vrot.slane %v2717, 1
  %v2904 = vsel %vm182, %v2901, %v2903
  %v2905 = vrot.slane %v2718, 1
  %v2906 = vsel %vm182, %v2903, %v2905
  %v2907 = vrot.slane %v2719, 1
  %v2908 = vsel %vm182, %v2905, %v2907
  %v2909 = vrot.slane %v2720, 1
  %v2910 = vsel %vm182, %v2907, %v2909
  %v2911 = vrot.slane %v2721, 1
  %v2912 = vsel %vm182, %v2909, %v2911
  %v2913 = vrot.slane %v2722, 1
  %v2914 = vsel %vm182, %v2911, %v2913
  %v2915 = vrot.slane %v2723, 1
  %v2916 = vsel %vm182, %v2913, %v2915
  %v2917 = vrot.slane %v2724, 1
  %v2918 = vsel %vm182, %v2915, %v2917
  %v2919 = vrot.slane %v2725, 1
  %v2920 = vsel %vm182, %v2917, %v2919
  %v2921 = vrot.slane %v2726, 1
  %v2922 = vsel %vm182, %v2919, %v2921
  %2923 = vrot.lane.b32.xlu0 %v2796, 32
  %v2924 = vpop.permute.xlu0 %2923
  %2925 = vrot.lane.b32.xlu0 %v2798, 32
  %v2926 = vpop.permute.xlu0 %2925
  %2927 = vrot.lane.b32.xlu0 %v2800, 32
  %v2928 = vpop.permute.xlu0 %2927
  %2929 = vrot.lane.b32.xlu0 %v2802, 32
  %v2930 = vpop.permute.xlu0 %2929
  %2931 = vrot.lane.b32.xlu0 %v2804, 32
  %v2932 = vpop.permute.xlu0 %2931
  %2933 = vrot.lane.b32.xlu0 %v2806, 32
  %v2934 = vpop.permute.xlu0 %2933
  %2935 = vrot.lane.b32.xlu0 %v2808, 32
  %v2936 = vpop.permute.xlu0 %2935
  %2937 = vrot.lane.b32.xlu0 %v2810, 32
  %v2938 = vpop.permute.xlu0 %2937
  %2939 = vrot.lane.b32.xlu0 %v2812, 32
  %v2940 = vpop.permute.xlu0 %2939
  %2941 = vrot.lane.b32.xlu0 %v2814, 32
  %v2942 = vpop.permute.xlu0 %2941
  %2943 = vrot.lane.b32.xlu0 %v2816, 32
  %v2944 = vpop.permute.xlu0 %2943
  %2945 = vrot.lane.b32.xlu0 %v2818, 32
  %v2946 = vpop.permute.xlu0 %2945
  %2947 = vrot.lane.b32.xlu0 %v2820, 32
  %v2948 = vpop.permute.xlu0 %2947
  %2949 = vrot.lane.b32.xlu0 %v2822, 32
  %v2950 = vpop.permute.xlu0 %2949
  %2951 = vrot.lane.b32.xlu0 %v2824, 32
  %v2952 = vpop.permute.xlu0 %2951
  %2953 = vrot.lane.b32.xlu0 %v2826, 32
  %v2954 = vpop.permute.xlu0 %2953
  %2955 = vrot.lane.b32.xlu0 %v2828, 32
  %v2956 = vpop.permute.xlu0 %2955
  %2957 = vrot.lane.b32.xlu0 %v2830, 32
  %v2958 = vpop.permute.xlu0 %2957
  %2959 = vrot.lane.b32.xlu0 %v2832, 32
  %v2960 = vpop.permute.xlu0 %2959
  %2961 = vrot.lane.b32.xlu0 %v2834, 32
  %v2962 = vpop.permute.xlu0 %2961
  %2963 = vrot.lane.b32.xlu0 %v2836, 32
  %v2964 = vpop.permute.xlu0 %2963
  %2965 = vrot.lane.b32.xlu0 %v2838, 32
  %v2966 = vpop.permute.xlu0 %2965
  %2967 = vrot.lane.b32.xlu0 %v2840, 32
  %v2968 = vpop.permute.xlu0 %2967
  %2969 = vrot.lane.b32.xlu0 %v2842, 32
  %v2970 = vpop.permute.xlu0 %2969
  %2971 = vrot.lane.b32.xlu0 %v2844, 32
  %v2972 = vpop.permute.xlu0 %2971
  %2973 = vrot.lane.b32.xlu0 %v2846, 32
  %v2974 = vpop.permute.xlu0 %2973
  %2975 = vrot.lane.b32.xlu0 %v2848, 32
  %v2976 = vpop.permute.xlu0 %2975
  %2977 = vrot.lane.b32.xlu0 %v2850, 32
  %v2978 = vpop.permute.xlu0 %2977
  %2979 = vrot.lane.b32.xlu0 %v2852, 32
  %v2980 = vpop.permute.xlu0 %2979
  %2981 = vrot.lane.b32.xlu0 %v2854, 32
  %v2982 = vpop.permute.xlu0 %2981
  %2983 = vrot.lane.b32.xlu0 %v2856, 32
  %v2984 = vpop.permute.xlu0 %2983
  %2985 = vrot.lane.b32.xlu0 %v2858, 32
  %v2986 = vpop.permute.xlu0 %2985
  %2987 = vrot.lane.b32.xlu0 %v2860, 32
  %v2988 = vpop.permute.xlu0 %2987
  %2989 = vrot.lane.b32.xlu0 %v2862, 32
  %v2990 = vpop.permute.xlu0 %2989
  %2991 = vrot.lane.b32.xlu0 %v2864, 32
  %v2992 = vpop.permute.xlu0 %2991
  %2993 = vrot.lane.b32.xlu0 %v2866, 32
  %v2994 = vpop.permute.xlu0 %2993
  %2995 = vrot.lane.b32.xlu0 %v2868, 32
  %v2996 = vpop.permute.xlu0 %2995
  %2997 = vrot.lane.b32.xlu0 %v2870, 32
  %v2998 = vpop.permute.xlu0 %2997
  %2999 = vrot.lane.b32.xlu0 %v2872, 32
  %v3000 = vpop.permute.xlu0 %2999
  %3001 = vrot.lane.b32.xlu0 %v2874, 32
  %v3002 = vpop.permute.xlu0 %3001
  %3003 = vrot.lane.b32.xlu0 %v2876, 32
  %v3004 = vpop.permute.xlu0 %3003
  %3005 = vrot.lane.b32.xlu0 %v2878, 32
  %v3006 = vpop.permute.xlu0 %3005
  %3007 = vrot.lane.b32.xlu0 %v2880, 32
  %v3008 = vpop.permute.xlu0 %3007
  %3009 = vrot.lane.b32.xlu0 %v2882, 32
  %v3010 = vpop.permute.xlu0 %3009
  %3011 = vrot.lane.b32.xlu0 %v2884, 32
  %v3012 = vpop.permute.xlu0 %3011
  %3013 = vrot.lane.b32.xlu0 %v2886, 32
  %v3014 = vpop.permute.xlu0 %3013
  %3015 = vrot.lane.b32.xlu0 %v2888, 32
  %v3016 = vpop.permute.xlu0 %3015
  %3017 = vrot.lane.b32.xlu0 %v2890, 32
  %v3018 = vpop.permute.xlu0 %3017
  %3019 = vrot.lane.b32.xlu0 %v2892, 32
  %v3020 = vpop.permute.xlu0 %3019
  %3021 = vrot.lane.b32.xlu0 %v2894, 32
  %v3022 = vpop.permute.xlu0 %3021
  %3023 = vrot.lane.b32.xlu0 %v2896, 32
  %v3024 = vpop.permute.xlu0 %3023
  %3025 = vrot.lane.b32.xlu0 %v2898, 32
  %v3026 = vpop.permute.xlu0 %3025
  %3027 = vrot.lane.b32.xlu0 %v2900, 32
  %v3028 = vpop.permute.xlu0 %3027
  %3029 = vrot.lane.b32.xlu0 %v2902, 32
  %v3030 = vpop.permute.xlu0 %3029
  %3031 = vrot.lane.b32.xlu0 %v2904, 32
  %v3032 = vpop.permute.xlu0 %3031
  %3033 = vrot.lane.b32.xlu0 %v2906, 32
  %v3034 = vpop.permute.xlu0 %3033
  %3035 = vrot.lane.b32.xlu0 %v2908, 32
  %v3036 = vpop.permute.xlu0 %3035
  %3037 = vrot.lane.b32.xlu0 %v2910, 32
  %v3038 = vpop.permute.xlu0 %3037
  %3039 = vrot.lane.b32.xlu0 %v2912, 32
  %v3040 = vpop.permute.xlu0 %3039
  %3041 = vrot.lane.b32.xlu0 %v2914, 32
  %v3042 = vpop.permute.xlu0 %3041
  %3043 = vrot.lane.b32.xlu0 %v2916, 32
  %v3044 = vpop.permute.xlu0 %3043
  %3045 = vrot.lane.b32.xlu0 %v2918, 32
  %v3046 = vpop.permute.xlu0 %3045
  %3047 = vrot.lane.b32.xlu0 %v2920, 32
  %v3048 = vpop.permute.xlu0 %3047
  %3049 = vrot.lane.b32.xlu0 %v2922, 32
  %v3050 = vpop.permute.xlu0 %3049
  %3116 = vrot.lane.b32.xlu0 %v2664, 64
  %v3117 = vpop.permute.xlu0 %3116
  %3118 = vrot.lane.b32.xlu0 %v2665, 64
  %v3119 = vpop.permute.xlu0 %3118
  %3120 = vrot.lane.b32.xlu0 %v2666, 64
  %v3121 = vpop.permute.xlu0 %3120
  %3122 = vrot.lane.b32.xlu0 %v2667, 64
  %v3123 = vpop.permute.xlu0 %3122
  %3124 = vrot.lane.b32.xlu0 %v2668, 64
  %v3125 = vpop.permute.xlu0 %3124
  %3126 = vrot.lane.b32.xlu0 %v2669, 64
  %v3127 = vpop.permute.xlu0 %3126
  %3128 = vrot.lane.b32.xlu0 %v2670, 64
  %v3129 = vpop.permute.xlu0 %3128
  %3130 = vrot.lane.b32.xlu0 %v2671, 64
  %v3131 = vpop.permute.xlu0 %3130
  %3132 = vrot.lane.b32.xlu0 %v2672, 64
  %v3133 = vpop.permute.xlu0 %3132
  %3134 = vrot.lane.b32.xlu0 %v2673, 64
  %v3135 = vpop.permute.xlu0 %3134
  %3136 = vrot.lane.b32.xlu0 %v2674, 64
  %v3137 = vpop.permute.xlu0 %3136
  %3138 = vrot.lane.b32.xlu0 %v2675, 64
  %v3139 = vpop.permute.xlu0 %3138
  %3140 = vrot.lane.b32.xlu0 %v2676, 64
  %v3141 = vpop.permute.xlu0 %3140
  %3142 = vrot.lane.b32.xlu0 %v2677, 64
  %v3143 = vpop.permute.xlu0 %3142
  %3144 = vrot.lane.b32.xlu0 %v2678, 64
  %v3145 = vpop.permute.xlu0 %3144
  %3146 = vrot.lane.b32.xlu0 %v2679, 64
  %v3147 = vpop.permute.xlu0 %3146
  %3148 = vrot.lane.b32.xlu0 %v2680, 64
  %v3149 = vpop.permute.xlu0 %3148
  %3150 = vrot.lane.b32.xlu0 %v2681, 64
  %v3151 = vpop.permute.xlu0 %3150
  %3152 = vrot.lane.b32.xlu0 %v2682, 64
  %v3153 = vpop.permute.xlu0 %3152
  %3154 = vrot.lane.b32.xlu0 %v2683, 64
  %v3155 = vpop.permute.xlu0 %3154
  %3156 = vrot.lane.b32.xlu0 %v2684, 64
  %v3157 = vpop.permute.xlu0 %3156
  %3158 = vrot.lane.b32.xlu0 %v2685, 64
  %v3159 = vpop.permute.xlu0 %3158
  %3160 = vrot.lane.b32.xlu0 %v2686, 64
  %v3161 = vpop.permute.xlu0 %3160
  %3162 = vrot.lane.b32.xlu0 %v2687, 64
  %v3163 = vpop.permute.xlu0 %3162
  %3164 = vrot.lane.b32.xlu0 %v2688, 64
  %v3165 = vpop.permute.xlu0 %3164
  %3166 = vrot.lane.b32.xlu0 %v2689, 64
  %v3167 = vpop.permute.xlu0 %3166
  %3168 = vrot.lane.b32.xlu0 %v2690, 64
  %v3169 = vpop.permute.xlu0 %3168
  %3170 = vrot.lane.b32.xlu0 %v2691, 64
  %v3171 = vpop.permute.xlu0 %3170
  %3172 = vrot.lane.b32.xlu0 %v2692, 64
  %v3173 = vpop.permute.xlu0 %3172
  %3174 = vrot.lane.b32.xlu0 %v2693, 64
  %v3175 = vpop.permute.xlu0 %3174
  %3176 = vrot.lane.b32.xlu0 %v2694, 64
  %v3177 = vpop.permute.xlu0 %3176
  %3178 = vrot.lane.b32.xlu0 %v2695, 64
  %v3179 = vpop.permute.xlu0 %3178
  %3180 = vrot.lane.b32.xlu0 %v2696, 64
  %v3181 = vpop.permute.xlu0 %3180
  %3182 = vrot.lane.b32.xlu0 %v2697, 64
  %v3183 = vpop.permute.xlu0 %3182
  %3184 = vrot.lane.b32.xlu0 %v2698, 64
  %v3185 = vpop.permute.xlu0 %3184
  %3186 = vrot.lane.b32.xlu0 %v2699, 64
  %v3187 = vpop.permute.xlu0 %3186
  %3188 = vrot.lane.b32.xlu0 %v2700, 64
  %v3189 = vpop.permute.xlu0 %3188
  %3190 = vrot.lane.b32.xlu0 %v2701, 64
  %v3191 = vpop.permute.xlu0 %3190
  %3192 = vrot.lane.b32.xlu0 %v2702, 64
  %v3193 = vpop.permute.xlu0 %3192
  %3194 = vrot.lane.b32.xlu0 %v2703, 64
  %v3195 = vpop.permute.xlu0 %3194
  %3196 = vrot.lane.b32.xlu0 %v2704, 64
  %v3197 = vpop.permute.xlu0 %3196
  %3198 = vrot.lane.b32.xlu0 %v2705, 64
  %v3199 = vpop.permute.xlu0 %3198
  %3200 = vrot.lane.b32.xlu0 %v2706, 64
  %v3201 = vpop.permute.xlu0 %3200
  %3202 = vrot.lane.b32.xlu0 %v2707, 64
  %v3203 = vpop.permute.xlu0 %3202
  %3204 = vrot.lane.b32.xlu0 %v2708, 64
  %v3205 = vpop.permute.xlu0 %3204
  %3206 = vrot.lane.b32.xlu0 %v2709, 64
  %v3207 = vpop.permute.xlu0 %3206
  %3208 = vrot.lane.b32.xlu0 %v2710, 64
  %v3209 = vpop.permute.xlu0 %3208
  %3210 = vrot.lane.b32.xlu0 %v2711, 64
  %v3211 = vpop.permute.xlu0 %3210
  %3212 = vrot.lane.b32.xlu0 %v2712, 64
  %v3213 = vpop.permute.xlu0 %3212
  %3214 = vrot.lane.b32.xlu0 %v2713, 64
  %v3215 = vpop.permute.xlu0 %3214
  %3216 = vrot.lane.b32.xlu0 %v2714, 64
  %v3217 = vpop.permute.xlu0 %3216
  %3218 = vrot.lane.b32.xlu0 %v2715, 64
  %v3219 = vpop.permute.xlu0 %3218
  %3220 = vrot.lane.b32.xlu0 %v2716, 64
  %v3221 = vpop.permute.xlu0 %3220
  %3222 = vrot.lane.b32.xlu0 %v2717, 64
  %v3223 = vpop.permute.xlu0 %3222
  %3224 = vrot.lane.b32.xlu0 %v2718, 64
  %v3225 = vpop.permute.xlu0 %3224
  %3226 = vrot.lane.b32.xlu0 %v2719, 64
  %v3227 = vpop.permute.xlu0 %3226
  %3228 = vrot.lane.b32.xlu0 %v2720, 64
  %v3229 = vpop.permute.xlu0 %3228
  %3230 = vrot.lane.b32.xlu0 %v2721, 64
  %v3231 = vpop.permute.xlu0 %3230
  %3232 = vrot.lane.b32.xlu0 %v2722, 64
  %v3233 = vpop.permute.xlu0 %3232
  %3234 = vrot.lane.b32.xlu0 %v2723, 64
  %v3235 = vpop.permute.xlu0 %3234
  %3236 = vrot.lane.b32.xlu0 %v2724, 64
  %v3237 = vpop.permute.xlu0 %3236
  %3238 = vrot.lane.b32.xlu0 %v2725, 64
  %v3239 = vpop.permute.xlu0 %3238
  %3240 = vrot.lane.b32.xlu0 %v2726, 64
  %v3241 = vpop.permute.xlu0 %3240
  %3242 = vrot.lane.b32.xlu0 %v2727, 64
  %v3243 = vpop.permute.xlu0 %3242
  %v3309 = vrot.slane %v2727, 1
  %v3310 = vsel %vm182, %v2921, %v3309
  %v3311 = vrot.slane %v2728, 1
  %v3312 = vsel %vm182, %v3309, %v3311
  %3313 = vrot.lane.b32.xlu0 %v2800, 96
  %v3314 = vpop.permute.xlu0 %3313
  %3315 = vrot.lane.b32.xlu0 %v2802, 96
  %v3316 = vpop.permute.xlu0 %3315
  %3317 = vrot.lane.b32.xlu0 %v2804, 96
  %v3318 = vpop.permute.xlu0 %3317
  %3319 = vrot.lane.b32.xlu0 %v2806, 96
  %v3320 = vpop.permute.xlu0 %3319
  %3321 = vrot.lane.b32.xlu0 %v2808, 96
  %v3322 = vpop.permute.xlu0 %3321
  %3323 = vrot.lane.b32.xlu0 %v2810, 96
  %v3324 = vpop.permute.xlu0 %3323
  %3325 = vrot.lane.b32.xlu0 %v2812, 96
  %v3326 = vpop.permute.xlu0 %3325
  %3327 = vrot.lane.b32.xlu0 %v2814, 96
  %v3328 = vpop.permute.xlu0 %3327
  %3329 = vrot.lane.b32.xlu0 %v2816, 96
  %v3330 = vpop.permute.xlu0 %3329
  %3331 = vrot.lane.b32.xlu0 %v2818, 96
  %v3332 = vpop.permute.xlu0 %3331
  %3333 = vrot.lane.b32.xlu0 %v2820, 96
  %v3334 = vpop.permute.xlu0 %3333
  %3335 = vrot.lane.b32.xlu0 %v2822, 96
  %v3336 = vpop.permute.xlu0 %3335
  %3337 = vrot.lane.b32.xlu0 %v2824, 96
  %v3338 = vpop.permute.xlu0 %3337
  %3339 = vrot.lane.b32.xlu0 %v2826, 96
  %v3340 = vpop.permute.xlu0 %3339
  %3341 = vrot.lane.b32.xlu0 %v2828, 96
  %v3342 = vpop.permute.xlu0 %3341
  %3343 = vrot.lane.b32.xlu0 %v2830, 96
  %v3344 = vpop.permute.xlu0 %3343
  %3345 = vrot.lane.b32.xlu0 %v2832, 96
  %v3346 = vpop.permute.xlu0 %3345
  %3347 = vrot.lane.b32.xlu0 %v2834, 96
  %v3348 = vpop.permute.xlu0 %3347
  %3349 = vrot.lane.b32.xlu0 %v2836, 96
  %v3350 = vpop.permute.xlu0 %3349
  %3351 = vrot.lane.b32.xlu0 %v2838, 96
  %v3352 = vpop.permute.xlu0 %3351
  %3353 = vrot.lane.b32.xlu0 %v2840, 96
  %v3354 = vpop.permute.xlu0 %3353
  %3355 = vrot.lane.b32.xlu0 %v2842, 96
  %v3356 = vpop.permute.xlu0 %3355
  %3357 = vrot.lane.b32.xlu0 %v2844, 96
  %v3358 = vpop.permute.xlu0 %3357
  %3359 = vrot.lane.b32.xlu0 %v2846, 96
  %v3360 = vpop.permute.xlu0 %3359
  %3361 = vrot.lane.b32.xlu0 %v2848, 96
  %v3362 = vpop.permute.xlu0 %3361
  %3363 = vrot.lane.b32.xlu0 %v2850, 96
  %v3364 = vpop.permute.xlu0 %3363
  %3365 = vrot.lane.b32.xlu0 %v2852, 96
  %v3366 = vpop.permute.xlu0 %3365
  %3367 = vrot.lane.b32.xlu0 %v2854, 96
  %v3368 = vpop.permute.xlu0 %3367
  %3369 = vrot.lane.b32.xlu0 %v2856, 96
  %v3370 = vpop.permute.xlu0 %3369
  %3371 = vrot.lane.b32.xlu0 %v2858, 96
  %v3372 = vpop.permute.xlu0 %3371
  %3373 = vrot.lane.b32.xlu0 %v2860, 96
  %v3374 = vpop.permute.xlu0 %3373
  %3375 = vrot.lane.b32.xlu0 %v2862, 96
  %v3376 = vpop.permute.xlu0 %3375
  %3377 = vrot.lane.b32.xlu0 %v2864, 96
  %v3378 = vpop.permute.xlu0 %3377
  %3379 = vrot.lane.b32.xlu0 %v2866, 96
  %v3380 = vpop.permute.xlu0 %3379
  %3381 = vrot.lane.b32.xlu0 %v2868, 96
  %v3382 = vpop.permute.xlu0 %3381
  %3383 = vrot.lane.b32.xlu0 %v2870, 96
  %v3384 = vpop.permute.xlu0 %3383
  %3385 = vrot.lane.b32.xlu0 %v2872, 96
  %v3386 = vpop.permute.xlu0 %3385
  %3387 = vrot.lane.b32.xlu0 %v2874, 96
  %v3388 = vpop.permute.xlu0 %3387
  %3389 = vrot.lane.b32.xlu0 %v2876, 96
  %v3390 = vpop.permute.xlu0 %3389
  %3391 = vrot.lane.b32.xlu0 %v2878, 96
  %v3392 = vpop.permute.xlu0 %3391
  %3393 = vrot.lane.b32.xlu0 %v2880, 96
  %v3394 = vpop.permute.xlu0 %3393
  %3395 = vrot.lane.b32.xlu0 %v2882, 96
  %v3396 = vpop.permute.xlu0 %3395
  %3397 = vrot.lane.b32.xlu0 %v2884, 96
  %v3398 = vpop.permute.xlu0 %3397
  %3399 = vrot.lane.b32.xlu0 %v2886, 96
  %v3400 = vpop.permute.xlu0 %3399
  %3401 = vrot.lane.b32.xlu0 %v2888, 96
  %v3402 = vpop.permute.xlu0 %3401
  %3403 = vrot.lane.b32.xlu0 %v2890, 96
  %v3404 = vpop.permute.xlu0 %3403
  %3405 = vrot.lane.b32.xlu0 %v2892, 96
  %v3406 = vpop.permute.xlu0 %3405
  %3407 = vrot.lane.b32.xlu0 %v2894, 96
  %v3408 = vpop.permute.xlu0 %3407
  %3409 = vrot.lane.b32.xlu0 %v2896, 96
  %v3410 = vpop.permute.xlu0 %3409
  %3411 = vrot.lane.b32.xlu0 %v2898, 96
  %v3412 = vpop.permute.xlu0 %3411
  %3413 = vrot.lane.b32.xlu0 %v2900, 96
  %v3414 = vpop.permute.xlu0 %3413
  %3415 = vrot.lane.b32.xlu0 %v2902, 96
  %v3416 = vpop.permute.xlu0 %3415
  %3417 = vrot.lane.b32.xlu0 %v2904, 96
  %v3418 = vpop.permute.xlu0 %3417
  %3419 = vrot.lane.b32.xlu0 %v2906, 96
  %v3420 = vpop.permute.xlu0 %3419
  %3421 = vrot.lane.b32.xlu0 %v2908, 96
  %v3422 = vpop.permute.xlu0 %3421
  %3423 = vrot.lane.b32.xlu0 %v2910, 96
  %v3424 = vpop.permute.xlu0 %3423
  %3425 = vrot.lane.b32.xlu0 %v2912, 96
  %v3426 = vpop.permute.xlu0 %3425
  %3427 = vrot.lane.b32.xlu0 %v2914, 96
  %v3428 = vpop.permute.xlu0 %3427
  %3429 = vrot.lane.b32.xlu0 %v2916, 96
  %v3430 = vpop.permute.xlu0 %3429
  %3431 = vrot.lane.b32.xlu0 %v2918, 96
  %v3432 = vpop.permute.xlu0 %3431
  %3433 = vrot.lane.b32.xlu0 %v2920, 96
  %v3434 = vpop.permute.xlu0 %3433
  %3435 = vrot.lane.b32.xlu0 %v2922, 96
  %v3436 = vpop.permute.xlu0 %3435
  %3437 = vrot.lane.b32.xlu0 %v3310, 96
  %v3438 = vpop.permute.xlu0 %3437
  %3439 = vrot.lane.b32.xlu0 %v3312, 96
  %v3440 = vpop.permute.xlu0 %3439
  %v3505 = vsel %vm2028, %v2662, %v2924
  %v3506 = vsel %vm2028, %v2663, %v2926
  %v3507 = vsel %vm2028, %v2664, %v2928
  %v3508 = vsel %vm2028, %v2665, %v2930
  %v3509 = vsel %vm2028, %v2666, %v2932
  %v3510 = vsel %vm2028, %v2667, %v2934
  %v3511 = vsel %vm2028, %v2668, %v2936
  %v3512 = vsel %vm2028, %v2669, %v2938
  %v3513 = vsel %vm2028, %v2670, %v2940
  %v3514 = vsel %vm2028, %v2671, %v2942
  %v3515 = vsel %vm2028, %v2672, %v2944
  %v3516 = vsel %vm2028, %v2673, %v2946
  %v3517 = vsel %vm2028, %v2674, %v2948
  %v3518 = vsel %vm2028, %v2675, %v2950
  %v3519 = vsel %vm2028, %v2676, %v2952
  %v3520 = vsel %vm2028, %v2677, %v2954
  %v3521 = vsel %vm2028, %v2678, %v2956
  %v3522 = vsel %vm2028, %v2679, %v2958
  %v3523 = vsel %vm2028, %v2680, %v2960
  %v3524 = vsel %vm2028, %v2681, %v2962
  %v3525 = vsel %vm2028, %v2682, %v2964
  %v3526 = vsel %vm2028, %v2683, %v2966
  %v3527 = vsel %vm2028, %v2684, %v2968
  %v3528 = vsel %vm2028, %v2685, %v2970
  %v3529 = vsel %vm2028, %v2686, %v2972
  %v3530 = vsel %vm2028, %v2687, %v2974
  %v3531 = vsel %vm2028, %v2688, %v2976
  %v3532 = vsel %vm2028, %v2689, %v2978
  %v3533 = vsel %vm2028, %v2690, %v2980
  %v3534 = vsel %vm2028, %v2691, %v2982
  %v3535 = vsel %vm2028, %v2692, %v2984
  %v3536 = vsel %vm2028, %v2693, %v2986
  %v3537 = vsel %vm2028, %v2694, %v2988
  %v3538 = vsel %vm2028, %v2695, %v2990
  %v3539 = vsel %vm2028, %v2696, %v2992
  %v3540 = vsel %vm2028, %v2697, %v2994
  %v3541 = vsel %vm2028, %v2698, %v2996
  %v3542 = vsel %vm2028, %v2699, %v2998
  %v3543 = vsel %vm2028, %v2700, %v3000
  %v3544 = vsel %vm2028, %v2701, %v3002
  %v3545 = vsel %vm2028, %v2702, %v3004
  %v3546 = vsel %vm2028, %v2703, %v3006
  %v3547 = vsel %vm2028, %v2704, %v3008
  %v3548 = vsel %vm2028, %v2705, %v3010
  %v3549 = vsel %vm2028, %v2706, %v3012
  %v3550 = vsel %vm2028, %v2707, %v3014
  %v3551 = vsel %vm2028, %v2708, %v3016
  %v3552 = vsel %vm2028, %v2709, %v3018
  %v3553 = vsel %vm2028, %v2710, %v3020
  %v3554 = vsel %vm2028, %v2711, %v3022
  %v3555 = vsel %vm2028, %v2712, %v3024
  %v3556 = vsel %vm2028, %v2713, %v3026
  %v3557 = vsel %vm2028, %v2714, %v3028
  %v3558 = vsel %vm2028, %v2715, %v3030
  %v3559 = vsel %vm2028, %v2716, %v3032
  %v3560 = vsel %vm2028, %v2717, %v3034
  %v3561 = vsel %vm2028, %v2718, %v3036
  %v3562 = vsel %vm2028, %v2719, %v3038
  %v3563 = vsel %vm2028, %v2720, %v3040
  %v3564 = vsel %vm2028, %v2721, %v3042
  %v3565 = vsel %vm2028, %v2722, %v3044
  %v3566 = vsel %vm2028, %v2723, %v3046
  %v3567 = vsel %vm2028, %v2724, %v3048
  %v3568 = vsel %vm2028, %v2725, %v3050
  %vm3569 = vcmask 523264
  %v3570 = vsel %vm3569, %v3505, %v3117
  %v3571 = vsel %vm3569, %v3506, %v3119
  %v3572 = vsel %vm3569, %v3507, %v3121
  %v3573 = vsel %vm3569, %v3508, %v3123
  %v3574 = vsel %vm3569, %v3509, %v3125
  %v3575 = vsel %vm3569, %v3510, %v3127
  %v3576 = vsel %vm3569, %v3511, %v3129
  %v3577 = vsel %vm3569, %v3512, %v3131
  %v3578 = vsel %vm3569, %v3513, %v3133
  %v3579 = vsel %vm3569, %v3514, %v3135
  %v3580 = vsel %vm3569, %v3515, %v3137
  %v3581 = vsel %vm3569, %v3516, %v3139
  %v3582 = vsel %vm3569, %v3517, %v3141
  %v3583 = vsel %vm3569, %v3518, %v3143
  %v3584 = vsel %vm3569, %v3519, %v3145
  %v3585 = vsel %vm3569, %v3520, %v3147
  %v3586 = vsel %vm3569, %v3521, %v3149
  %v3587 = vsel %vm3569, %v3522, %v3151
  %v3588 = vsel %vm3569, %v3523, %v3153
  %v3589 = vsel %vm3569, %v3524, %v3155
  %v3590 = vsel %vm3569, %v3525, %v3157
  %v3591 = vsel %vm3569, %v3526, %v3159
  %v3592 = vsel %vm3569, %v3527, %v3161
  %v3593 = vsel %vm3569, %v3528, %v3163
  %v3594 = vsel %vm3569, %v3529, %v3165
  %v3595 = vsel %vm3569, %v3530, %v3167
  %v3596 = vsel %vm3569, %v3531, %v3169
  %v3597 = vsel %vm3569, %v3532, %v3171
  %v3598 = vsel %vm3569, %v3533, %v3173
  %v3599 = vsel %vm3569, %v3534, %v3175
  %v3600 = vsel %vm3569, %v3535, %v3177
  %v3601 = vsel %vm3569, %v3536, %v3179
  %v3602 = vsel %vm3569, %v3537, %v3181
  %v3603 = vsel %vm3569, %v3538, %v3183
  %v3604 = vsel %vm3569, %v3539, %v3185
  %v3605 = vsel %vm3569, %v3540, %v3187
  %v3606 = vsel %vm3569, %v3541, %v3189
  %v3607 = vsel %vm3569, %v3542, %v3191
  %v3608 = vsel %vm3569, %v3543, %v3193
  %v3609 = vsel %vm3569, %v3544, %v3195
  %v3610 = vsel %vm3569, %v3545, %v3197
  %v3611 = vsel %vm3569, %v3546, %v3199
  %v3612 = vsel %vm3569, %v3547, %v3201
  %v3613 = vsel %vm3569, %v3548, %v3203
  %v3614 = vsel %vm3569, %v3549, %v3205
  %v3615 = vsel %vm3569, %v3550, %v3207
  %v3616 = vsel %vm3569, %v3551, %v3209
  %v3617 = vsel %vm3569, %v3552, %v3211
  %v3618 = vsel %vm3569, %v3553, %v3213
  %v3619 = vsel %vm3569, %v3554, %v3215
  %v3620 = vsel %vm3569, %v3555, %v3217
  %v3621 = vsel %vm3569, %v3556, %v3219
  %v3622 = vsel %vm3569, %v3557, %v3221
  %v3623 = vsel %vm3569, %v3558, %v3223
  %v3624 = vsel %vm3569, %v3559, %v3225
  %v3625 = vsel %vm3569, %v3560, %v3227
  %v3626 = vsel %vm3569, %v3561, %v3229
  %v3627 = vsel %vm3569, %v3562, %v3231
  %v3628 = vsel %vm3569, %v3563, %v3233
  %v3629 = vsel %vm3569, %v3564, %v3235
  %v3630 = vsel %vm3569, %v3565, %v3237
  %v3631 = vsel %vm3569, %v3566, %v3239
  %v3632 = vsel %vm3569, %v3567, %v3241
  %v3633 = vsel %vm3569, %v3568, %v3243
  %vm3634 = vcmask 785408
  %v3635 = vsel %vm3634, %v3570, %v3314
  %v3636 = vsel %vm3634, %v3571, %v3316
  %v3637 = vsel %vm3634, %v3572, %v3318
  %v3638 = vsel %vm3634, %v3573, %v3320
  %v3639 = vsel %vm3634, %v3574, %v3322
  %v3640 = vsel %vm3634, %v3575, %v3324
  %v3641 = vsel %vm3634, %v3576, %v3326
  %v3642 = vsel %vm3634, %v3577, %v3328
  %v3643 = vsel %vm3634, %v3578, %v3330
  %v3644 = vsel %vm3634, %v3579, %v3332
  %v3645 = vsel %vm3634, %v3580, %v3334
  %v3646 = vsel %vm3634, %v3581, %v3336
  %v3647 = vsel %vm3634, %v3582, %v3338
  %v3648 = vsel %vm3634, %v3583, %v3340
  %v3649 = vsel %vm3634, %v3584, %v3342
  %v3650 = vsel %vm3634, %v3585, %v3344
  %v3651 = vsel %vm3634, %v3586, %v3346
  %v3652 = vsel %vm3634, %v3587, %v3348
  %v3653 = vsel %vm3634, %v3588, %v3350
  %v3654 = vsel %vm3634, %v3589, %v3352
  %v3655 = vsel %vm3634, %v3590, %v3354
  %v3656 = vsel %vm3634, %v3591, %v3356
  %v3657 = vsel %vm3634, %v3592, %v3358
  %v3658 = vsel %vm3634, %v3593, %v3360
  %v3659 = vsel %vm3634, %v3594, %v3362
  %v3660 = vsel %vm3634, %v3595, %v3364
  %v3661 = vsel %vm3634, %v3596, %v3366
  %v3662 = vsel %vm3634, %v3597, %v3368
  %v3663 = vsel %vm3634, %v3598, %v3370
  %v3664 = vsel %vm3634, %v3599, %v3372
  %v3665 = vsel %vm3634, %v3600, %v3374
  %v3666 = vsel %vm3634, %v3601, %v3376
  %v3667 = vsel %vm3634, %v3602, %v3378
  %v3668 = vsel %vm3634, %v3603, %v3380
  %v3669 = vsel %vm3634, %v3604, %v3382
  %v3670 = vsel %vm3634, %v3605, %v3384
  %v3671 = vsel %vm3634, %v3606, %v3386
  %v3672 = vsel %vm3634, %v3607, %v3388
  %v3673 = vsel %vm3634, %v3608, %v3390
  %v3674 = vsel %vm3634, %v3609, %v3392
  %v3675 = vsel %vm3634, %v3610, %v3394
  %v3676 = vsel %vm3634, %v3611, %v3396
  %v3677 = vsel %vm3634, %v3612, %v3398
  %v3678 = vsel %vm3634, %v3613, %v3400
  %v3679 = vsel %vm3634, %v3614, %v3402
  %v3680 = vsel %vm3634, %v3615, %v3404
  %v3681 = vsel %vm3634, %v3616, %v3406
  %v3682 = vsel %vm3634, %v3617, %v3408
  %v3683 = vsel %vm3634, %v3618, %v3410
  %v3684 = vsel %vm3634, %v3619, %v3412
  %v3685 = vsel %vm3634, %v3620, %v3414
  %v3686 = vsel %vm3634, %v3621, %v3416
  %v3687 = vsel %vm3634, %v3622, %v3418
  %v3688 = vsel %vm3634, %v3623, %v3420
  %v3689 = vsel %vm3634, %v3624, %v3422
  %v3690 = vsel %vm3634, %v3625, %v3424
  %v3691 = vsel %vm3634, %v3626, %v3426
  %v3692 = vsel %vm3634, %v3627, %v3428
  %v3693 = vsel %vm3634, %v3628, %v3430
  %v3694 = vsel %vm3634, %v3629, %v3432
  %v3695 = vsel %vm3634, %v3630, %v3434
  %v3696 = vsel %vm3634, %v3631, %v3436
  %v3697 = vsel %vm3634, %v3632, %v3438
  %v3698 = vsel %vm3634, %v3633, %v3440
  %v3699 = vld [vmem:[%s7] sm:$0xff]
  %v3700 = vld [vmem:[%s7 + $0x8] sm:$0xff]
  %v3701 = vld [vmem:[%s7 + $0x10] sm:$0xff]
  %v3702 = vld [vmem:[%s7 + $0x18] sm:$0xff]
  %v3703 = vld [vmem:[%s7 + $0x20] sm:$0xff]
  %v3704 = vld [vmem:[%s7 + $0x28] sm:$0xff]
  %v3705 = vld [vmem:[%s7 + $0x30] sm:$0xff]
  %v3706 = vld [vmem:[%s7 + $0x38] sm:$0xff]
  %v3707 = vld [vmem:[%s7 + $0x40] sm:$0xff]
  %v3708 = vld [vmem:[%s7 + $0x48] sm:$0xff]
  %v3709 = vld [vmem:[%s7 + $0x50] sm:$0xff]
  %v3710 = vld [vmem:[%s7 + $0x58] sm:$0xff]
  %v3711 = vld [vmem:[%s7 + $0x60] sm:$0xff]
  %v3712 = vld [vmem:[%s7 + $0x68] sm:$0xff]
  %v3713 = vld [vmem:[%s7 + $0x70] sm:$0xff]
  %v3714 = vld [vmem:[%s7 + $0x78] sm:$0xff]
  %v3715 = vld [vmem:[%s8] sm:$0x1]
  %v3717 = vperm.slane %v3715, 0
  %3719 = vmatpush.msra.mxu0 %v3714
  %3720 = vmatpush.msra.mxu0 %v3713
  %3721 = vmatpush.msra.mxu0 %v3712
  %3722 = vmatpush.msra.mxu0 %v3711
  %3723 = vmatpush.msra.mxu0 %v3710
  %3724 = vmatpush.msra.mxu0 %v3709
  %3725 = vmatpush.msra.mxu0 %v3708
  %3726 = vmatpush.msra.mxu0 %v3707
  %3727 = vmatpush.msra.mxu0 %v3706
  %3728 = vmatpush.msra.mxu0 %v3705
  %3729 = vmatpush.msra.mxu0 %v3704
  %3730 = vmatpush.msra.mxu0 %v3703
  %3731 = vmatpush.msra.mxu0 %v3702
  %3732 = vmatpush.msra.mxu0 %v3701
  %3733 = vmatpush.msra.mxu0 %v3700
  %3734 = vmatpush.msra.mxu0 %v3699
  %3735 = vmatmul.f32.gmra.mxu0 %v3635
  %v3736 = vpop.f32.mrf.mxu0
  %v3737 = vadd.f32 %v3717, %v3736
  %3738 = vmatmul.f32.gmra.mxu0 %v3636
  %v3739 = vpop.f32.mrf.mxu0
  %v3740 = vadd.f32 %v3717, %v3739
  %3741 = vmatmul.f32.gmra.mxu0 %v3637
  %v3742 = vpop.f32.mrf.mxu0
  %v3743 = vadd.f32 %v3717, %v3742
  %3744 = vmatmul.f32.gmra.mxu0 %v3638
  %v3745 = vpop.f32.mrf.mxu0
  %v3746 = vadd.f32 %v3717, %v3745
  %3747 = vmatmul.f32.gmra.mxu0 %v3639
  %v3748 = vpop.f32.mrf.mxu0
  %v3749 = vadd.f32 %v3717, %v3748
  %3750 = vmatmul.f32.gmra.mxu0 %v3640
  %v3751 = vpop.f32.mrf.mxu0
  %v3752 = vadd.f32 %v3717, %v3751
  %3753 = vmatmul.f32.gmra.mxu0 %v3641
  %v3754 = vpop.f32.mrf.mxu0
  %v3755 = vadd.f32 %v3717, %v3754
  %3756 = vmatmul.f32.gmra.mxu0 %v3642
  %v3757 = vpop.f32.mrf.mxu0
  %v3758 = vadd.f32 %v3717, %v3757
  %3759 = vmatmul.f32.gmra.mxu0 %v3643
  %v3760 = vpop.f32.mrf.mxu0
  %v3761 = vadd.f32 %v3717, %v3760
  %3762 = vmatmul.f32.gmra.mxu0 %v3644
  %v3763 = vpop.f32.mrf.mxu0
  %v3764 = vadd.f32 %v3717, %v3763
  %3765 = vmatmul.f32.gmra.mxu0 %v3645
  %v3766 = vpop.f32.mrf.mxu0
  %v3767 = vadd.f32 %v3717, %v3766
  %3768 = vmatmul.f32.gmra.mxu0 %v3646
  %v3769 = vpop.f32.mrf.mxu0
  %v3770 = vadd.f32 %v3717, %v3769
  %3771 = vmatmul.f32.gmra.mxu0 %v3647
  %v3772 = vpop.f32.mrf.mxu0
  %v3773 = vadd.f32 %v3717, %v3772
  %3774 = vmatmul.f32.gmra.mxu0 %v3648
  %v3775 = vpop.f32.mrf.mxu0
  %v3776 = vadd.f32 %v3717, %v3775
  %3777 = vmatmul.f32.gmra.mxu0 %v3649
  %v3778 = vpop.f32.mrf.mxu0
  %v3779 = vadd.f32 %v3717, %v3778
  %3780 = vmatmul.f32.gmra.mxu0 %v3650
  %v3781 = vpop.f32.mrf.mxu0
  %v3782 = vadd.f32 %v3717, %v3781
  %3783 = vmatmul.f32.gmra.mxu0 %v3651
  %v3784 = vpop.f32.mrf.mxu0
  %v3785 = vadd.f32 %v3717, %v3784
  %3786 = vmatmul.f32.gmra.mxu0 %v3652
  %v3787 = vpop.f32.mrf.mxu0
  %v3788 = vadd.f32 %v3717, %v3787
  %3789 = vmatmul.f32.gmra.mxu0 %v3653
  %v3790 = vpop.f32.mrf.mxu0
  %v3791 = vadd.f32 %v3717, %v3790
  %3792 = vmatmul.f32.gmra.mxu0 %v3654
  %v3793 = vpop.f32.mrf.mxu0
  %v3794 = vadd.f32 %v3717, %v3793
  %3795 = vmatmul.f32.gmra.mxu0 %v3655
  %v3796 = vpop.f32.mrf.mxu0
  %v3797 = vadd.f32 %v3717, %v3796
  %3798 = vmatmul.f32.gmra.mxu0 %v3656
  %v3799 = vpop.f32.mrf.mxu0
  %v3800 = vadd.f32 %v3717, %v3799
  %3801 = vmatmul.f32.gmra.mxu0 %v3657
  %v3802 = vpop.f32.mrf.mxu0
  %v3803 = vadd.f32 %v3717, %v3802
  %3804 = vmatmul.f32.gmra.mxu0 %v3658
  %v3805 = vpop.f32.mrf.mxu0
  %v3806 = vadd.f32 %v3717, %v3805
  %3807 = vmatmul.f32.gmra.mxu0 %v3659
  %v3808 = vpop.f32.mrf.mxu0
  %v3809 = vadd.f32 %v3717, %v3808
  %3810 = vmatmul.f32.gmra.mxu0 %v3660
  %v3811 = vpop.f32.mrf.mxu0
  %v3812 = vadd.f32 %v3717, %v3811
  %3813 = vmatmul.f32.gmra.mxu0 %v3661
  %v3814 = vpop.f32.mrf.mxu0
  %v3815 = vadd.f32 %v3717, %v3814
  %3816 = vmatmul.f32.gmra.mxu0 %v3662
  %v3817 = vpop.f32.mrf.mxu0
  %v3818 = vadd.f32 %v3717, %v3817
  %3819 = vmatmul.f32.gmra.mxu0 %v3663
  %v3820 = vpop.f32.mrf.mxu0
  %v3821 = vadd.f32 %v3717, %v3820
  %3822 = vmatmul.f32.gmra.mxu0 %v3664
  %v3823 = vpop.f32.mrf.mxu0
  %v3824 = vadd.f32 %v3717, %v3823
  %3825 = vmatmul.f32.gmra.mxu0 %v3665
  %v3826 = vpop.f32.mrf.mxu0
  %v3827 = vadd.f32 %v3717, %v3826
  %3828 = vmatmul.f32.gmra.mxu0 %v3666
  %v3829 = vpop.f32.mrf.mxu0
  %v3830 = vadd.f32 %v3717, %v3829
  %3831 = vmatmul.f32.gmra.mxu0 %v3667
  %v3832 = vpop.f32.mrf.mxu0
  %v3833 = vadd.f32 %v3717, %v3832
  %3834 = vmatmul.f32.gmra.mxu0 %v3668
  %v3835 = vpop.f32.mrf.mxu0
  %v3836 = vadd.f32 %v3717, %v3835
  %3837 = vmatmul.f32.gmra.mxu0 %v3669
  %v3838 = vpop.f32.mrf.mxu0
  %v3839 = vadd.f32 %v3717, %v3838
  %3840 = vmatmul.f32.gmra.mxu0 %v3670
  %v3841 = vpop.f32.mrf.mxu0
  %v3842 = vadd.f32 %v3717, %v3841
  %3843 = vmatmul.f32.gmra.mxu0 %v3671
  %v3844 = vpop.f32.mrf.mxu0
  %v3845 = vadd.f32 %v3717, %v3844
  %3846 = vmatmul.f32.gmra.mxu0 %v3672
  %v3847 = vpop.f32.mrf.mxu0
  %v3848 = vadd.f32 %v3717, %v3847
  %3849 = vmatmul.f32.gmra.mxu0 %v3673
  %v3850 = vpop.f32.mrf.mxu0
  %v3851 = vadd.f32 %v3717, %v3850
  %3852 = vmatmul.f32.gmra.mxu0 %v3674
  %v3853 = vpop.f32.mrf.mxu0
  %v3854 = vadd.f32 %v3717, %v3853
  %3855 = vmatmul.f32.gmra.mxu0 %v3675
  %v3856 = vpop.f32.mrf.mxu0
  %v3857 = vadd.f32 %v3717, %v3856
  %3858 = vmatmul.f32.gmra.mxu0 %v3676
  %v3859 = vpop.f32.mrf.mxu0
  %v3860 = vadd.f32 %v3717, %v3859
  %3861 = vmatmul.f32.gmra.mxu0 %v3677
  %v3862 = vpop.f32.mrf.mxu0
  %v3863 = vadd.f32 %v3717, %v3862
  %3864 = vmatmul.f32.gmra.mxu0 %v3678
  %v3865 = vpop.f32.mrf.mxu0
  %v3866 = vadd.f32 %v3717, %v3865
  %3867 = vmatmul.f32.gmra.mxu0 %v3679
  %v3868 = vpop.f32.mrf.mxu0
  %v3869 = vadd.f32 %v3717, %v3868
  %3870 = vmatmul.f32.gmra.mxu0 %v3680
  %v3871 = vpop.f32.mrf.mxu0
  %v3872 = vadd.f32 %v3717, %v3871
  %3873 = vmatmul.f32.gmra.mxu0 %v3681
  %v3874 = vpop.f32.mrf.mxu0
  %v3875 = vadd.f32 %v3717, %v3874
  %3876 = vmatmul.f32.gmra.mxu0 %v3682
  %v3877 = vpop.f32.mrf.mxu0
  %v3878 = vadd.f32 %v3717, %v3877
  %3879 = vmatmul.f32.gmra.mxu0 %v3683
  %v3880 = vpop.f32.mrf.mxu0
  %v3881 = vadd.f32 %v3717, %v3880
  %3882 = vmatmul.f32.gmra.mxu0 %v3684
  %v3883 = vpop.f32.mrf.mxu0
  %v3884 = vadd.f32 %v3717, %v3883
  %3885 = vmatmul.f32.gmra.mxu0 %v3685
  %v3886 = vpop.f32.mrf.mxu0
  %v3887 = vadd.f32 %v3717, %v3886
  %3888 = vmatmul.f32.gmra.mxu0 %v3686
  %v3889 = vpop.f32.mrf.mxu0
  %v3890 = vadd.f32 %v3717, %v3889
  %3891 = vmatmul.f32.gmra.mxu0 %v3687
  %v3892 = vpop.f32.mrf.mxu0
  %v3893 = vadd.f32 %v3717, %v3892
  %3894 = vmatmul.f32.gmra.mxu0 %v3688
  %v3895 = vpop.f32.mrf.mxu0
  %v3896 = vadd.f32 %v3717, %v3895
  %3897 = vmatmul.f32.gmra.mxu0 %v3689
  %v3898 = vpop.f32.mrf.mxu0
  %v3899 = vadd.f32 %v3717, %v3898
  %3900 = vmatmul.f32.gmra.mxu0 %v3690
  %v3901 = vpop.f32.mrf.mxu0
  %v3902 = vadd.f32 %v3717, %v3901
  %3903 = vmatmul.f32.gmra.mxu0 %v3691
  %v3904 = vpop.f32.mrf.mxu0
  %v3905 = vadd.f32 %v3717, %v3904
  %3906 = vmatmul.f32.gmra.mxu0 %v3692
  %v3907 = vpop.f32.mrf.mxu0
  %v3908 = vadd.f32 %v3717, %v3907
  %3909 = vmatmul.f32.gmra.mxu0 %v3693
  %v3910 = vpop.f32.mrf.mxu0
  %v3911 = vadd.f32 %v3717, %v3910
  %3912 = vmatmul.f32.gmra.mxu0 %v3694
  %v3913 = vpop.f32.mrf.mxu0
  %v3914 = vadd.f32 %v3717, %v3913
  %3915 = vmatmul.f32.gmra.mxu0 %v3695
  %v3916 = vpop.f32.mrf.mxu0
  %v3917 = vadd.f32 %v3717, %v3916
  %3918 = vmatmul.f32.gmra.mxu0 %v3696
  %v3919 = vpop.f32.mrf.mxu0
  %v3920 = vadd.f32 %v3717, %v3919
  %3921 = vmatmul.f32.gmra.mxu0 %v3697
  %v3922 = vpop.f32.mrf.mxu0
  %v3923 = vadd.f32 %v3717, %v3922
  %3924 = vmatmul.f32.gmra.mxu0 %v3698
  %v3925 = vpop.f32.mrf.mxu0
  %v3926 = vadd.f32 %v3717, %v3925
  %3927 = vdwg.mxu0
  %v3928 = vld [vmem:[%s2] sm:$0xff]
  %v3929 = vld [vmem:[%s2 + $0x8] sm:$0xff]
  %v3930 = vld [vmem:[%s2 + $0x10] sm:$0xff]
  %v3931 = vld [vmem:[%s2 + $0x18] sm:$0xff]
  %v3932 = vld [vmem:[%s2 + $0x20] sm:$0xff]
  %v3933 = vld [vmem:[%s2 + $0x28] sm:$0xff]
  %v3934 = vld [vmem:[%s2 + $0x30] sm:$0xff]
  %v3935 = vld [vmem:[%s2 + $0x38] sm:$0xff]
  %v3936 = vld [vmem:[%s2 + $0x40] sm:$0xff]
  %v3937 = vld [vmem:[%s2 + $0x48] sm:$0xff]
  %v3938 = vld [vmem:[%s2 + $0x50] sm:$0xff]
  %v3939 = vld [vmem:[%s2 + $0x58] sm:$0xff]
  %v3940 = vld [vmem:[%s2 + $0x60] sm:$0xff]
  %v3941 = vld [vmem:[%s2 + $0x68] sm:$0xff]
  %v3942 = vld [vmem:[%s2 + $0x70] sm:$0xff]
  %v3943 = vld [vmem:[%s2 + $0x78] sm:$0xff]
  %v3944 = vld [vmem:[%s2 + $0x80] sm:$0xff]
  %v3945 = vld [vmem:[%s2 + $0x88] sm:$0xff]
  %v3946 = vld [vmem:[%s2 + $0x90] sm:$0xff]
  %v3947 = vld [vmem:[%s2 + $0x98] sm:$0xff]
  %v3948 = vld [vmem:[%s2 + $0xa0] sm:$0xff]
  %v3949 = vld [vmem:[%s2 + $0xa8] sm:$0xff]
  %v3950 = vld [vmem:[%s2 + $0xb0] sm:$0xff]
  %v3951 = vld [vmem:[%s2 + $0xb8] sm:$0xff]
  %v3952 = vld [vmem:[%s2 + $0xc0] sm:$0xff]
  %v3953 = vld [vmem:[%s2 + $0xc8] sm:$0xff]
  %v3954 = vld [vmem:[%s2 + $0xd0] sm:$0xff]
  %v3955 = vld [vmem:[%s2 + $0xd8] sm:$0xff]
  %v3956 = vld [vmem:[%s2 + $0xe0] sm:$0xff]
  %v3957 = vld [vmem:[%s2 + $0xe8] sm:$0xff]
  %v3958 = vld [vmem:[%s2 + $0xf0] sm:$0xff]
  %v3959 = vld [vmem:[%s2 + $0xf8] sm:$0xff]
  %v3960 = vld [vmem:[%s2 + $0x100] sm:$0xff]
  %v3961 = vld [vmem:[%s2 + $0x108] sm:$0xff]
  %v3962 = vld [vmem:[%s2 + $0x110] sm:$0xff]
  %v3963 = vld [vmem:[%s2 + $0x118] sm:$0xff]
  %v3964 = vld [vmem:[%s2 + $0x120] sm:$0xff]
  %v3965 = vld [vmem:[%s2 + $0x128] sm:$0xff]
  %v3966 = vld [vmem:[%s2 + $0x130] sm:$0xff]
  %v3967 = vld [vmem:[%s2 + $0x138] sm:$0xff]
  %v3968 = vld [vmem:[%s2 + $0x140] sm:$0xff]
  %v3969 = vld [vmem:[%s2 + $0x148] sm:$0xff]
  %v3970 = vld [vmem:[%s2 + $0x150] sm:$0xff]
  %v3971 = vld [vmem:[%s2 + $0x158] sm:$0xff]
  %v3972 = vld [vmem:[%s2 + $0x160] sm:$0xff]
  %v3973 = vld [vmem:[%s2 + $0x168] sm:$0xff]
  %v3974 = vld [vmem:[%s2 + $0x170] sm:$0xff]
  %v3975 = vld [vmem:[%s2 + $0x178] sm:$0xff]
  %v3976 = vld [vmem:[%s2 + $0x180] sm:$0xff]
  %v3977 = vld [vmem:[%s2 + $0x188] sm:$0xff]
  %v3978 = vld [vmem:[%s2 + $0x190] sm:$0xff]
  %v3979 = vld [vmem:[%s2 + $0x198] sm:$0xff]
  %v3980 = vld [vmem:[%s2 + $0x1a0] sm:$0xff]
  %v3981 = vld [vmem:[%s2 + $0x1a8] sm:$0xff]
  %v3982 = vld [vmem:[%s2 + $0x1b0] sm:$0xff]
  %v3983 = vld [vmem:[%s2 + $0x1b8] sm:$0xff]
  %v3984 = vld [vmem:[%s2 + $0x1c0] sm:$0xff]
  %v3985 = vld [vmem:[%s2 + $0x1c8] sm:$0xff]
  %v3986 = vld [vmem:[%s2 + $0x1d0] sm:$0xff]
  %v3987 = vld [vmem:[%s2 + $0x1d8] sm:$0xff]
  %v3988 = vld [vmem:[%s2 + $0x1e0] sm:$0xff]
  %v3989 = vld [vmem:[%s2 + $0x1e8] sm:$0xff]
  %v3990 = vld [vmem:[%s2 + $0x1f0] sm:$0xff]
  %v3991 = vld [vmem:[%s2 + $0x1f8] sm:$0xff]
  %v3992 = vld [vmem:[%s9] sm:$0x1]
  %v3993 = vld [vmem:[%s10] sm:$0x1]
  %3995 = vset.pattern.permute.xlu0 0
  %3996 = vperm.xlu0 %3995, %v3928
  %v3997 = vpop.permute.xlu0 %3996
  %4000 = vset.pattern.permute.xlu0 0
  %4001 = vperm.xlu0 %4000, %v3929
  %v4002 = vpop.permute.xlu0 %4001
  %4005 = vset.pattern.permute.xlu0 0
  %4006 = vperm.xlu0 %4005, %v3930
  %v4007 = vpop.permute.xlu0 %4006
  %4010 = vset.pattern.permute.xlu0 0
  %4011 = vperm.xlu0 %4010, %v3931
  %v4012 = vpop.permute.xlu0 %4011
  %4015 = vset.pattern.permute.xlu0 0
  %4016 = vperm.xlu0 %4015, %v3932
  %v4017 = vpop.permute.xlu0 %4016
  %4020 = vset.pattern.permute.xlu0 0
  %4021 = vperm.xlu0 %4020, %v3933
  %v4022 = vpop.permute.xlu0 %4021
  %4025 = vset.pattern.permute.xlu0 0
  %4026 = vperm.xlu0 %4025, %v3934
  %v4027 = vpop.permute.xlu0 %4026
  %4030 = vset.pattern.permute.xlu0 0
  %4031 = vperm.xlu0 %4030, %v3935
  %v4032 = vpop.permute.xlu0 %4031
  %4035 = vset.pattern.permute.xlu0 0
  %4036 = vperm.xlu0 %4035, %v3936
  %v4037 = vpop.permute.xlu0 %4036
  %4040 = vset.pattern.permute.xlu0 0
  %4041 = vperm.xlu0 %4040, %v3937
  %v4042 = vpop.permute.xlu0 %4041
  %4045 = vset.pattern.permute.xlu0 0
  %4046 = vperm.xlu0 %4045, %v3938
  %v4047 = vpop.permute.xlu0 %4046
  %4050 = vset.pattern.permute.xlu0 0
  %4051 = vperm.xlu0 %4050, %v3939
  %v4052 = vpop.permute.xlu0 %4051
  %4055 = vset.pattern.permute.xlu0 0
  %4056 = vperm.xlu0 %4055, %v3940
  %v4057 = vpop.permute.xlu0 %4056
  %4060 = vset.pattern.permute.xlu0 0
  %4061 = vperm.xlu0 %4060, %v3941
  %v4062 = vpop.permute.xlu0 %4061
  %4065 = vset.pattern.permute.xlu0 0
  %4066 = vperm.xlu0 %4065, %v3942
  %v4067 = vpop.permute.xlu0 %4066
  %4070 = vset.pattern.permute.xlu0 0
  %4071 = vperm.xlu0 %4070, %v3943
  %v4072 = vpop.permute.xlu0 %4071
  %4075 = vset.pattern.permute.xlu0 0
  %4076 = vperm.xlu0 %4075, %v3944
  %v4077 = vpop.permute.xlu0 %4076
  %4080 = vset.pattern.permute.xlu0 0
  %4081 = vperm.xlu0 %4080, %v3945
  %v4082 = vpop.permute.xlu0 %4081
  %4085 = vset.pattern.permute.xlu0 0
  %4086 = vperm.xlu0 %4085, %v3946
  %v4087 = vpop.permute.xlu0 %4086
  %4090 = vset.pattern.permute.xlu0 0
  %4091 = vperm.xlu0 %4090, %v3947
  %v4092 = vpop.permute.xlu0 %4091
  %4095 = vset.pattern.permute.xlu0 0
  %4096 = vperm.xlu0 %4095, %v3948
  %v4097 = vpop.permute.xlu0 %4096
  %4100 = vset.pattern.permute.xlu0 0
  %4101 = vperm.xlu0 %4100, %v3949
  %v4102 = vpop.permute.xlu0 %4101
  %4105 = vset.pattern.permute.xlu0 0
  %4106 = vperm.xlu0 %4105, %v3950
  %v4107 = vpop.permute.xlu0 %4106
  %4110 = vset.pattern.permute.xlu0 0
  %4111 = vperm.xlu0 %4110, %v3951
  %v4112 = vpop.permute.xlu0 %4111
  %4115 = vset.pattern.permute.xlu0 0
  %4116 = vperm.xlu0 %4115, %v3952
  %v4117 = vpop.permute.xlu0 %4116
  %4120 = vset.pattern.permute.xlu0 0
  %4121 = vperm.xlu0 %4120, %v3953
  %v4122 = vpop.permute.xlu0 %4121
  %4125 = vset.pattern.permute.xlu0 0
  %4126 = vperm.xlu0 %4125, %v3954
  %v4127 = vpop.permute.xlu0 %4126
  %4130 = vset.pattern.permute.xlu0 0
  %4131 = vperm.xlu0 %4130, %v3955
  %v4132 = vpop.permute.xlu0 %4131
  %4135 = vset.pattern.permute.xlu0 0
  %4136 = vperm.xlu0 %4135, %v3956
  %v4137 = vpop.permute.xlu0 %4136
  %4140 = vset.pattern.permute.xlu0 0
  %4141 = vperm.xlu0 %4140, %v3957
  %v4142 = vpop.permute.xlu0 %4141
  %4145 = vset.pattern.permute.xlu0 0
  %4146 = vperm.xlu0 %4145, %v3958
  %v4147 = vpop.permute.xlu0 %4146
  %4150 = vset.pattern.permute.xlu0 0
  %4151 = vperm.xlu0 %4150, %v3959
  %v4152 = vpop.permute.xlu0 %4151
  %4155 = vset.pattern.permute.xlu0 0
  %4156 = vperm.xlu0 %4155, %v3960
  %v4157 = vpop.permute.xlu0 %4156
  %4160 = vset.pattern.permute.xlu0 0
  %4161 = vperm.xlu0 %4160, %v3961
  %v4162 = vpop.permute.xlu0 %4161
  %4165 = vset.pattern.permute.xlu0 0
  %4166 = vperm.xlu0 %4165, %v3962
  %v4167 = vpop.permute.xlu0 %4166
  %4170 = vset.pattern.permute.xlu0 0
  %4171 = vperm.xlu0 %4170, %v3963
  %v4172 = vpop.permute.xlu0 %4171
  %4175 = vset.pattern.permute.xlu0 0
  %4176 = vperm.xlu0 %4175, %v3964
  %v4177 = vpop.permute.xlu0 %4176
  %4180 = vset.pattern.permute.xlu0 0
  %4181 = vperm.xlu0 %4180, %v3965
  %v4182 = vpop.permute.xlu0 %4181
  %4185 = vset.pattern.permute.xlu0 0
  %4186 = vperm.xlu0 %4185, %v3966
  %v4187 = vpop.permute.xlu0 %4186
  %4190 = vset.pattern.permute.xlu0 0
  %4191 = vperm.xlu0 %4190, %v3967
  %v4192 = vpop.permute.xlu0 %4191
  %4195 = vset.pattern.permute.xlu0 0
  %4196 = vperm.xlu0 %4195, %v3968
  %v4197 = vpop.permute.xlu0 %4196
  %4200 = vset.pattern.permute.xlu0 0
  %4201 = vperm.xlu0 %4200, %v3969
  %v4202 = vpop.permute.xlu0 %4201
  %4205 = vset.pattern.permute.xlu0 0
  %4206 = vperm.xlu0 %4205, %v3970
  %v4207 = vpop.permute.xlu0 %4206
  %4210 = vset.pattern.permute.xlu0 0
  %4211 = vperm.xlu0 %4210, %v3971
  %v4212 = vpop.permute.xlu0 %4211
  %4215 = vset.pattern.permute.xlu0 0
  %4216 = vperm.xlu0 %4215, %v3972
  %v4217 = vpop.permute.xlu0 %4216
  %4220 = vset.pattern.permute.xlu0 0
  %4221 = vperm.xlu0 %4220, %v3973
  %v4222 = vpop.permute.xlu0 %4221
  %4225 = vset.pattern.permute.xlu0 0
  %4226 = vperm.xlu0 %4225, %v3974
  %v4227 = vpop.permute.xlu0 %4226
  %4230 = vset.pattern.permute.xlu0 0
  %4231 = vperm.xlu0 %4230, %v3975
  %v4232 = vpop.permute.xlu0 %4231
  %4235 = vset.pattern.permute.xlu0 0
  %4236 = vperm.xlu0 %4235, %v3976
  %v4237 = vpop.permute.xlu0 %4236
  %4240 = vset.pattern.permute.xlu0 0
  %4241 = vperm.xlu0 %4240, %v3977
  %v4242 = vpop.permute.xlu0 %4241
  %4245 = vset.pattern.permute.xlu0 0
  %4246 = vperm.xlu0 %4245, %v3978
  %v4247 = vpop.permute.xlu0 %4246
  %4250 = vset.pattern.permute.xlu0 0
  %4251 = vperm.xlu0 %4250, %v3979
  %v4252 = vpop.permute.xlu0 %4251
  %4255 = vset.pattern.permute.xlu0 0
  %4256 = vperm.xlu0 %4255, %v3980
  %v4257 = vpop.permute.xlu0 %4256
  %4260 = vset.pattern.permute.xlu0 0
  %4261 = vperm.xlu0 %4260, %v3981
  %v4262 = vpop.permute.xlu0 %4261
  %4265 = vset.pattern.permute.xlu0 0
  %4266 = vperm.xlu0 %4265, %v3982
  %v4267 = vpop.permute.xlu0 %4266
  %4270 = vset.pattern.permute.xlu0 0
  %4271 = vperm.xlu0 %4270, %v3983
  %v4272 = vpop.permute.xlu0 %4271
  %4275 = vset.pattern.permute.xlu0 0
  %4276 = vperm.xlu0 %4275, %v3984
  %v4277 = vpop.permute.xlu0 %4276
  %4280 = vset.pattern.permute.xlu0 0
  %4281 = vperm.xlu0 %4280, %v3985
  %v4282 = vpop.permute.xlu0 %4281
  %4285 = vset.pattern.permute.xlu0 0
  %4286 = vperm.xlu0 %4285, %v3986
  %v4287 = vpop.permute.xlu0 %4286
  %4290 = vset.pattern.permute.xlu0 0
  %4291 = vperm.xlu0 %4290, %v3987
  %v4292 = vpop.permute.xlu0 %4291
  %4295 = vset.pattern.permute.xlu0 0
  %4296 = vperm.xlu0 %4295, %v3988
  %v4297 = vpop.permute.xlu0 %4296
  %4300 = vset.pattern.permute.xlu0 0
  %4301 = vperm.xlu0 %4300, %v3989
  %v4302 = vpop.permute.xlu0 %4301
  %4305 = vset.pattern.permute.xlu0 0
  %4306 = vperm.xlu0 %4305, %v3990
  %v4307 = vpop.permute.xlu0 %4306
  %4310 = vset.pattern.permute.xlu0 0
  %4311 = vperm.xlu0 %4310, %v3991
  %v4312 = vpop.permute.xlu0 %4311
  %v4314 = vmul.f32 %v3737, %v3997
  %v4315 = vmul.f32 %v3740, %v4002
  %v4316 = vmul.f32 %v3743, %v4007
  %v4317 = vmul.f32 %v3746, %v4012
  %v4318 = vmul.f32 %v3749, %v4017
  %v4319 = vmul.f32 %v3752, %v4022
  %v4320 = vmul.f32 %v3755, %v4027
  %v4321 = vmul.f32 %v3758, %v4032
  %v4322 = vmul.f32 %v3761, %v4037
  %v4323 = vmul.f32 %v3764, %v4042
  %v4324 = vmul.f32 %v3767, %v4047
  %v4325 = vmul.f32 %v3770, %v4052
  %v4326 = vmul.f32 %v3773, %v4057
  %v4327 = vmul.f32 %v3776, %v4062
  %v4328 = vmul.f32 %v3779, %v4067
  %v4329 = vmul.f32 %v3782, %v4072
  %v4330 = vmul.f32 %v3785, %v4077
  %v4331 = vmul.f32 %v3788, %v4082
  %v4332 = vmul.f32 %v3791, %v4087
  %v4333 = vmul.f32 %v3794, %v4092
  %v4334 = vmul.f32 %v3797, %v4097
  %v4335 = vmul.f32 %v3800, %v4102
  %v4336 = vmul.f32 %v3803, %v4107
  %v4337 = vmul.f32 %v3806, %v4112
  %v4338 = vmul.f32 %v3809, %v4117
  %v4339 = vmul.f32 %v3812, %v4122
  %v4340 = vmul.f32 %v3815, %v4127
  %v4341 = vmul.f32 %v3818, %v4132
  %v4342 = vmul.f32 %v3821, %v4137
  %v4343 = vmul.f32 %v3824, %v4142
  %v4344 = vmul.f32 %v3827, %v4147
  %v4345 = vmul.f32 %v3830, %v4152
  %v4346 = vmul.f32 %v3833, %v4157
  %v4347 = vmul.f32 %v3836, %v4162
  %v4348 = vmul.f32 %v3839, %v4167
  %v4349 = vmul.f32 %v3842, %v4172
  %v4350 = vmul.f32 %v3845, %v4177
  %v4351 = vmul.f32 %v3848, %v4182
  %v4352 = vmul.f32 %v3851, %v4187
  %v4353 = vmul.f32 %v3854, %v4192
  %v4354 = vmul.f32 %v3857, %v4197
  %v4355 = vmul.f32 %v3860, %v4202
  %v4356 = vmul.f32 %v3863, %v4207
  %v4357 = vmul.f32 %v3866, %v4212
  %v4358 = vmul.f32 %v3869, %v4217
  %v4359 = vmul.f32 %v3872, %v4222
  %v4360 = vmul.f32 %v3875, %v4227
  %v4361 = vmul.f32 %v3878, %v4232
  %v4362 = vmul.f32 %v3881, %v4237
  %v4363 = vmul.f32 %v3884, %v4242
  %v4364 = vmul.f32 %v3887, %v4247
  %v4365 = vmul.f32 %v3890, %v4252
  %v4366 = vmul.f32 %v3893, %v4257
  %v4367 = vmul.f32 %v3896, %v4262
  %v4368 = vmul.f32 %v3899, %v4267
  %v4369 = vmul.f32 %v3902, %v4272
  %v4370 = vmul.f32 %v3905, %v4277
  %v4371 = vmul.f32 %v3908, %v4282
  %v4372 = vmul.f32 %v3911, %v4287
  %v4373 = vmul.f32 %v3914, %v4292
  %v4374 = vmul.f32 %v3917, %v4297
  %v4375 = vmul.f32 %v3920, %v4302
  %v4376 = vmul.f32 %v3923, %v4307
  %v4377 = vmul.f32 %v3926, %v4312
  %v4378 = vsel %vm2028, %v4314, 0.0
  %v4379 = vsel %vm2028, %v4315, 0.0
  %v4380 = vadd.f32 %v4378, %v4379
  %v4381 = vsel %vm2028, %v4316, 0.0
  %v4382 = vadd.f32 %v4380, %v4381
  %v4383 = vsel %vm2028, %v4317, 0.0
  %v4384 = vadd.f32 %v4382, %v4383
  %v4385 = vsel %vm2028, %v4318, 0.0
  %v4386 = vadd.f32 %v4384, %v4385
  %v4387 = vsel %vm2028, %v4319, 0.0
  %v4388 = vadd.f32 %v4386, %v4387
  %v4389 = vsel %vm2028, %v4320, 0.0
  %v4390 = vadd.f32 %v4388, %v4389
  %v4391 = vsel %vm2028, %v4321, 0.0
  %v4392 = vadd.f32 %v4390, %v4391
  %v4393 = vsel %vm2028, %v4322, 0.0
  %v4394 = vadd.f32 %v4392, %v4393
  %v4395 = vsel %vm2028, %v4323, 0.0
  %v4396 = vadd.f32 %v4394, %v4395
  %v4397 = vsel %vm2028, %v4324, 0.0
  %v4398 = vadd.f32 %v4396, %v4397
  %v4399 = vsel %vm2028, %v4325, 0.0
  %v4400 = vadd.f32 %v4398, %v4399
  %v4401 = vsel %vm2028, %v4326, 0.0
  %v4402 = vadd.f32 %v4400, %v4401
  %v4403 = vsel %vm2028, %v4327, 0.0
  %v4404 = vadd.f32 %v4402, %v4403
  %v4405 = vsel %vm2028, %v4328, 0.0
  %v4406 = vadd.f32 %v4404, %v4405
  %v4407 = vsel %vm2028, %v4329, 0.0
  %v4408 = vadd.f32 %v4406, %v4407
  %v4409 = vsel %vm2028, %v4330, 0.0
  %v4410 = vadd.f32 %v4408, %v4409
  %v4411 = vsel %vm2028, %v4331, 0.0
  %v4412 = vadd.f32 %v4410, %v4411
  %v4413 = vsel %vm2028, %v4332, 0.0
  %v4414 = vadd.f32 %v4412, %v4413
  %v4415 = vsel %vm2028, %v4333, 0.0
  %v4416 = vadd.f32 %v4414, %v4415
  %v4417 = vsel %vm2028, %v4334, 0.0
  %v4418 = vadd.f32 %v4416, %v4417
  %v4419 = vsel %vm2028, %v4335, 0.0
  %v4420 = vadd.f32 %v4418, %v4419
  %v4421 = vsel %vm2028, %v4336, 0.0
  %v4422 = vadd.f32 %v4420, %v4421
  %v4423 = vsel %vm2028, %v4337, 0.0
  %v4424 = vadd.f32 %v4422, %v4423
  %v4425 = vsel %vm2028, %v4338, 0.0
  %v4426 = vadd.f32 %v4424, %v4425
  %v4427 = vsel %vm2028, %v4339, 0.0
  %v4428 = vadd.f32 %v4426, %v4427
  %v4429 = vsel %vm2028, %v4340, 0.0
  %v4430 = vadd.f32 %v4428, %v4429
  %v4431 = vsel %vm2028, %v4341, 0.0
  %v4432 = vadd.f32 %v4430, %v4431
  %v4433 = vsel %vm2028, %v4342, 0.0
  %v4434 = vadd.f32 %v4432, %v4433
  %v4435 = vsel %vm2028, %v4343, 0.0
  %v4436 = vadd.f32 %v4434, %v4435
  %v4437 = vsel %vm2028, %v4344, 0.0
  %v4438 = vadd.f32 %v4436, %v4437
  %v4439 = vsel %vm2028, %v4345, 0.0
  %v4440 = vadd.f32 %v4438, %v4439
  %v4441 = vsel %vm2028, %v4346, 0.0
  %v4442 = vadd.f32 %v4440, %v4441
  %v4443 = vsel %vm2028, %v4347, 0.0
  %v4444 = vadd.f32 %v4442, %v4443
  %v4445 = vsel %vm2028, %v4348, 0.0
  %v4446 = vadd.f32 %v4444, %v4445
  %v4447 = vsel %vm2028, %v4349, 0.0
  %v4448 = vadd.f32 %v4446, %v4447
  %v4449 = vsel %vm2028, %v4350, 0.0
  %v4450 = vadd.f32 %v4448, %v4449
  %v4451 = vsel %vm2028, %v4351, 0.0
  %v4452 = vadd.f32 %v4450, %v4451
  %v4453 = vsel %vm2028, %v4352, 0.0
  %v4454 = vadd.f32 %v4452, %v4453
  %v4455 = vsel %vm2028, %v4353, 0.0
  %v4456 = vadd.f32 %v4454, %v4455
  %v4457 = vsel %vm2028, %v4354, 0.0
  %v4458 = vadd.f32 %v4456, %v4457
  %v4459 = vsel %vm2028, %v4355, 0.0
  %v4460 = vadd.f32 %v4458, %v4459
  %v4461 = vsel %vm2028, %v4356, 0.0
  %v4462 = vadd.f32 %v4460, %v4461
  %v4463 = vsel %vm2028, %v4357, 0.0
  %v4464 = vadd.f32 %v4462, %v4463
  %v4465 = vsel %vm2028, %v4358, 0.0
  %v4466 = vadd.f32 %v4464, %v4465
  %v4467 = vsel %vm2028, %v4359, 0.0
  %v4468 = vadd.f32 %v4466, %v4467
  %v4469 = vsel %vm2028, %v4360, 0.0
  %v4470 = vadd.f32 %v4468, %v4469
  %v4471 = vsel %vm2028, %v4361, 0.0
  %v4472 = vadd.f32 %v4470, %v4471
  %v4473 = vsel %vm2028, %v4362, 0.0
  %v4474 = vadd.f32 %v4472, %v4473
  %v4475 = vsel %vm2028, %v4363, 0.0
  %v4476 = vadd.f32 %v4474, %v4475
  %v4477 = vsel %vm2028, %v4364, 0.0
  %v4478 = vadd.f32 %v4476, %v4477
  %v4479 = vsel %vm2028, %v4365, 0.0
  %v4480 = vadd.f32 %v4478, %v4479
  %v4481 = vsel %vm2028, %v4366, 0.0
  %v4482 = vadd.f32 %v4480, %v4481
  %v4483 = vsel %vm2028, %v4367, 0.0
  %v4484 = vadd.f32 %v4482, %v4483
  %v4485 = vsel %vm2028, %v4368, 0.0
  %v4486 = vadd.f32 %v4484, %v4485
  %v4487 = vsel %vm2028, %v4369, 0.0
  %v4488 = vadd.f32 %v4486, %v4487
  %v4489 = vsel %vm2028, %v4370, 0.0
  %v4490 = vadd.f32 %v4488, %v4489
  %v4491 = vsel %vm2028, %v4371, 0.0
  %v4492 = vadd.f32 %v4490, %v4491
  %v4493 = vsel %vm2028, %v4372, 0.0
  %v4494 = vadd.f32 %v4492, %v4493
  %v4495 = vsel %vm2028, %v4373, 0.0
  %v4496 = vadd.f32 %v4494, %v4495
  %v4497 = vsel %vm2028, %v4374, 0.0
  %v4498 = vadd.f32 %v4496, %v4497
  %v4499 = vsel %vm2028, %v4375, 0.0
  %v4500 = vadd.f32 %v4498, %v4499
  %v4501 = vsel %vm2028, %v4376, 0.0
  %v4502 = vadd.f32 %v4500, %v4501
  %v4503 = vsel %vm2028, %v4377, 0.0
  %v4504 = vadd.f32 %v4502, %v4503
  %v4505 = vrot.slane %v4504, 4
  %v4506 = vadd.f32 %v4504, %v4505
  %v4507 = vrot.slane %v4506, 2
  %v4508 = vadd.f32 %v4506, %v4507
  %v4509 = vrot.slane %v4508, 1
  %v4510 = vadd.f32 %v4508, %v4509
  %v4511 = vmul.f32 %v4510, 0.0025510204
  %v4512 = vsub.f32 %v3737, %v4511
  %v4513 = vsub.f32 %v3740, %v4511
  %v4514 = vsub.f32 %v3743, %v4511
  %v4515 = vsub.f32 %v3746, %v4511
  %v4516 = vsub.f32 %v3749, %v4511
  %v4517 = vsub.f32 %v3752, %v4511
  %v4518 = vsub.f32 %v3755, %v4511
  %v4519 = vsub.f32 %v3758, %v4511
  %v4520 = vsub.f32 %v3761, %v4511
  %v4521 = vsub.f32 %v3764, %v4511
  %v4522 = vsub.f32 %v3767, %v4511
  %v4523 = vsub.f32 %v3770, %v4511
  %v4524 = vsub.f32 %v3773, %v4511
  %v4525 = vsub.f32 %v3776, %v4511
  %v4526 = vsub.f32 %v3779, %v4511
  %v4527 = vsub.f32 %v3782, %v4511
  %v4528 = vsub.f32 %v3785, %v4511
  %v4529 = vsub.f32 %v3788, %v4511
  %v4530 = vsub.f32 %v3791, %v4511
  %v4531 = vsub.f32 %v3794, %v4511
  %v4532 = vsub.f32 %v3797, %v4511
  %v4533 = vsub.f32 %v3800, %v4511
  %v4534 = vsub.f32 %v3803, %v4511
  %v4535 = vsub.f32 %v3806, %v4511
  %v4536 = vsub.f32 %v3809, %v4511
  %v4537 = vsub.f32 %v3812, %v4511
  %v4538 = vsub.f32 %v3815, %v4511
  %v4539 = vsub.f32 %v3818, %v4511
  %v4540 = vsub.f32 %v3821, %v4511
  %v4541 = vsub.f32 %v3824, %v4511
  %v4542 = vsub.f32 %v3827, %v4511
  %v4543 = vsub.f32 %v3830, %v4511
  %v4544 = vsub.f32 %v3833, %v4511
  %v4545 = vsub.f32 %v3836, %v4511
  %v4546 = vsub.f32 %v3839, %v4511
  %v4547 = vsub.f32 %v3842, %v4511
  %v4548 = vsub.f32 %v3845, %v4511
  %v4549 = vsub.f32 %v3848, %v4511
  %v4550 = vsub.f32 %v3851, %v4511
  %v4551 = vsub.f32 %v3854, %v4511
  %v4552 = vsub.f32 %v3857, %v4511
  %v4553 = vsub.f32 %v3860, %v4511
  %v4554 = vsub.f32 %v3863, %v4511
  %v4555 = vsub.f32 %v3866, %v4511
  %v4556 = vsub.f32 %v3869, %v4511
  %v4557 = vsub.f32 %v3872, %v4511
  %v4558 = vsub.f32 %v3875, %v4511
  %v4559 = vsub.f32 %v3878, %v4511
  %v4560 = vsub.f32 %v3881, %v4511
  %v4561 = vsub.f32 %v3884, %v4511
  %v4562 = vsub.f32 %v3887, %v4511
  %v4563 = vsub.f32 %v3890, %v4511
  %v4564 = vsub.f32 %v3893, %v4511
  %v4565 = vsub.f32 %v3896, %v4511
  %v4566 = vsub.f32 %v3899, %v4511
  %v4567 = vsub.f32 %v3902, %v4511
  %v4568 = vsub.f32 %v3905, %v4511
  %v4569 = vsub.f32 %v3908, %v4511
  %v4570 = vsub.f32 %v3911, %v4511
  %v4571 = vsub.f32 %v3914, %v4511
  %v4572 = vsub.f32 %v3917, %v4511
  %v4573 = vsub.f32 %v3920, %v4511
  %v4574 = vsub.f32 %v3923, %v4511
  %v4575 = vsub.f32 %v3926, %v4511
  %v4576 = vmul.f32 %v4512, %v4512
  %v4577 = vmul.f32 %v4513, %v4513
  %v4578 = vmul.f32 %v4514, %v4514
  %v4579 = vmul.f32 %v4515, %v4515
  %v4580 = vmul.f32 %v4516, %v4516
  %v4581 = vmul.f32 %v4517, %v4517
  %v4582 = vmul.f32 %v4518, %v4518
  %v4583 = vmul.f32 %v4519, %v4519
  %v4584 = vmul.f32 %v4520, %v4520
  %v4585 = vmul.f32 %v4521, %v4521
  %v4586 = vmul.f32 %v4522, %v4522
  %v4587 = vmul.f32 %v4523, %v4523
  %v4588 = vmul.f32 %v4524, %v4524
  %v4589 = vmul.f32 %v4525, %v4525
  %v4590 = vmul.f32 %v4526, %v4526
  %v4591 = vmul.f32 %v4527, %v4527
  %v4592 = vmul.f32 %v4528, %v4528
  %v4593 = vmul.f32 %v4529, %v4529
  %v4594 = vmul.f32 %v4530, %v4530
  %v4595 = vmul.f32 %v4531, %v4531
  %v4596 = vmul.f32 %v4532, %v4532
  %v4597 = vmul.f32 %v4533, %v4533
  %v4598 = vmul.f32 %v4534, %v4534
  %v4599 = vmul.f32 %v4535, %v4535
  %v4600 = vmul.f32 %v4536, %v4536
  %v4601 = vmul.f32 %v4537, %v4537
  %v4602 = vmul.f32 %v4538, %v4538
  %v4603 = vmul.f32 %v4539, %v4539
  %v4604 = vmul.f32 %v4540, %v4540
  %v4605 = vmul.f32 %v4541, %v4541
  %v4606 = vmul.f32 %v4542, %v4542
  %v4607 = vmul.f32 %v4543, %v4543
  %v4608 = vmul.f32 %v4544, %v4544
  %v4609 = vmul.f32 %v4545, %v4545
  %v4610 = vmul.f32 %v4546, %v4546
  %v4611 = vmul.f32 %v4547, %v4547
  %v4612 = vmul.f32 %v4548, %v4548
  %v4613 = vmul.f32 %v4549, %v4549
  %v4614 = vmul.f32 %v4550, %v4550
  %v4615 = vmul.f32 %v4551, %v4551
  %v4616 = vmul.f32 %v4552, %v4552
  %v4617 = vmul.f32 %v4553, %v4553
  %v4618 = vmul.f32 %v4554, %v4554
  %v4619 = vmul.f32 %v4555, %v4555
  %v4620 = vmul.f32 %v4556, %v4556
  %v4621 = vmul.f32 %v4557, %v4557
  %v4622 = vmul.f32 %v4558, %v4558
  %v4623 = vmul.f32 %v4559, %v4559
  %v4624 = vmul.f32 %v4560, %v4560
  %v4625 = vmul.f32 %v4561, %v4561
  %v4626 = vmul.f32 %v4562, %v4562
  %v4627 = vmul.f32 %v4563, %v4563
  %v4628 = vmul.f32 %v4564, %v4564
  %v4629 = vmul.f32 %v4565, %v4565
  %v4630 = vmul.f32 %v4566, %v4566
  %v4631 = vmul.f32 %v4567, %v4567
  %v4632 = vmul.f32 %v4568, %v4568
  %v4633 = vmul.f32 %v4569, %v4569
  %v4634 = vmul.f32 %v4570, %v4570
  %v4635 = vmul.f32 %v4571, %v4571
  %v4636 = vmul.f32 %v4572, %v4572
  %v4637 = vmul.f32 %v4573, %v4573
  %v4638 = vmul.f32 %v4574, %v4574
  %v4639 = vmul.f32 %v4575, %v4575
  %v4640 = vmul.f32 %v4576, %v3997
  %v4641 = vmul.f32 %v4577, %v4002
  %v4642 = vmul.f32 %v4578, %v4007
  %v4643 = vmul.f32 %v4579, %v4012
  %v4644 = vmul.f32 %v4580, %v4017
  %v4645 = vmul.f32 %v4581, %v4022
  %v4646 = vmul.f32 %v4582, %v4027
  %v4647 = vmul.f32 %v4583, %v4032
  %v4648 = vmul.f32 %v4584, %v4037
  %v4649 = vmul.f32 %v4585, %v4042
  %v4650 = vmul.f32 %v4586, %v4047
  %v4651 = vmul.f32 %v4587, %v4052
  %v4652 = vmul.f32 %v4588, %v4057
  %v4653 = vmul.f32 %v4589, %v4062
  %v4654 = vmul.f32 %v4590, %v4067
  %v4655 = vmul.f32 %v4591, %v4072
  %v4656 = vmul.f32 %v4592, %v4077
  %v4657 = vmul.f32 %v4593, %v4082
  %v4658 = vmul.f32 %v4594, %v4087
  %v4659 = vmul.f32 %v4595, %v4092
  %v4660 = vmul.f32 %v4596, %v4097
  %v4661 = vmul.f32 %v4597, %v4102
  %v4662 = vmul.f32 %v4598, %v4107
  %v4663 = vmul.f32 %v4599, %v4112
  %v4664 = vmul.f32 %v4600, %v4117
  %v4665 = vmul.f32 %v4601, %v4122
  %v4666 = vmul.f32 %v4602, %v4127
  %v4667 = vmul.f32 %v4603, %v4132
  %v4668 = vmul.f32 %v4604, %v4137
  %v4669 = vmul.f32 %v4605, %v4142
  %v4670 = vmul.f32 %v4606, %v4147
  %v4671 = vmul.f32 %v4607, %v4152
  %v4672 = vmul.f32 %v4608, %v4157
  %v4673 = vmul.f32 %v4609, %v4162
  %v4674 = vmul.f32 %v4610, %v4167
  %v4675 = vmul.f32 %v4611, %v4172
  %v4676 = vmul.f32 %v4612, %v4177
  %v4677 = vmul.f32 %v4613, %v4182
  %v4678 = vmul.f32 %v4614, %v4187
  %v4679 = vmul.f32 %v4615, %v4192
  %v4680 = vmul.f32 %v4616, %v4197
  %v4681 = vmul.f32 %v4617, %v4202
  %v4682 = vmul.f32 %v4618, %v4207
  %v4683 = vmul.f32 %v4619, %v4212
  %v4684 = vmul.f32 %v4620, %v4217
  %v4685 = vmul.f32 %v4621, %v4222
  %v4686 = vmul.f32 %v4622, %v4227
  %v4687 = vmul.f32 %v4623, %v4232
  %v4688 = vmul.f32 %v4624, %v4237
  %v4689 = vmul.f32 %v4625, %v4242
  %v4690 = vmul.f32 %v4626, %v4247
  %v4691 = vmul.f32 %v4627, %v4252
  %v4692 = vmul.f32 %v4628, %v4257
  %v4693 = vmul.f32 %v4629, %v4262
  %v4694 = vmul.f32 %v4630, %v4267
  %v4695 = vmul.f32 %v4631, %v4272
  %v4696 = vmul.f32 %v4632, %v4277
  %v4697 = vmul.f32 %v4633, %v4282
  %v4698 = vmul.f32 %v4634, %v4287
  %v4699 = vmul.f32 %v4635, %v4292
  %v4700 = vmul.f32 %v4636, %v4297
  %v4701 = vmul.f32 %v4637, %v4302
  %v4702 = vmul.f32 %v4638, %v4307
  %v4703 = vmul.f32 %v4639, %v4312
  %v4704 = vsel %vm2028, %v4640, 0.0
  %v4705 = vsel %vm2028, %v4641, 0.0
  %v4706 = vadd.f32 %v4704, %v4705
  %v4707 = vsel %vm2028, %v4642, 0.0
  %v4708 = vadd.f32 %v4706, %v4707
  %v4709 = vsel %vm2028, %v4643, 0.0
  %v4710 = vadd.f32 %v4708, %v4709
  %v4711 = vsel %vm2028, %v4644, 0.0
  %v4712 = vadd.f32 %v4710, %v4711
  %v4713 = vsel %vm2028, %v4645, 0.0
  %v4714 = vadd.f32 %v4712, %v4713
  %v4715 = vsel %vm2028, %v4646, 0.0
  %v4716 = vadd.f32 %v4714, %v4715
  %v4717 = vsel %vm2028, %v4647, 0.0
  %v4718 = vadd.f32 %v4716, %v4717
  %v4719 = vsel %vm2028, %v4648, 0.0
  %v4720 = vadd.f32 %v4718, %v4719
  %v4721 = vsel %vm2028, %v4649, 0.0
  %v4722 = vadd.f32 %v4720, %v4721
  %v4723 = vsel %vm2028, %v4650, 0.0
  %v4724 = vadd.f32 %v4722, %v4723
  %v4725 = vsel %vm2028, %v4651, 0.0
  %v4726 = vadd.f32 %v4724, %v4725
  %v4727 = vsel %vm2028, %v4652, 0.0
  %v4728 = vadd.f32 %v4726, %v4727
  %v4729 = vsel %vm2028, %v4653, 0.0
  %v4730 = vadd.f32 %v4728, %v4729
  %v4731 = vsel %vm2028, %v4654, 0.0
  %v4732 = vadd.f32 %v4730, %v4731
  %v4733 = vsel %vm2028, %v4655, 0.0
  %v4734 = vadd.f32 %v4732, %v4733
  %v4735 = vsel %vm2028, %v4656, 0.0
  %v4736 = vadd.f32 %v4734, %v4735
  %v4737 = vsel %vm2028, %v4657, 0.0
  %v4738 = vadd.f32 %v4736, %v4737
  %v4739 = vsel %vm2028, %v4658, 0.0
  %v4740 = vadd.f32 %v4738, %v4739
  %v4741 = vsel %vm2028, %v4659, 0.0
  %v4742 = vadd.f32 %v4740, %v4741
  %v4743 = vsel %vm2028, %v4660, 0.0
  %v4744 = vadd.f32 %v4742, %v4743
  %v4745 = vsel %vm2028, %v4661, 0.0
  %v4746 = vadd.f32 %v4744, %v4745
  %v4747 = vsel %vm2028, %v4662, 0.0
  %v4748 = vadd.f32 %v4746, %v4747
  %v4749 = vsel %vm2028, %v4663, 0.0
  %v4750 = vadd.f32 %v4748, %v4749
  %v4751 = vsel %vm2028, %v4664, 0.0
  %v4752 = vadd.f32 %v4750, %v4751
  %v4753 = vsel %vm2028, %v4665, 0.0
  %v4754 = vadd.f32 %v4752, %v4753
  %v4755 = vsel %vm2028, %v4666, 0.0
  %v4756 = vadd.f32 %v4754, %v4755
  %v4757 = vsel %vm2028, %v4667, 0.0
  %v4758 = vadd.f32 %v4756, %v4757
  %v4759 = vsel %vm2028, %v4668, 0.0
  %v4760 = vadd.f32 %v4758, %v4759
  %v4761 = vsel %vm2028, %v4669, 0.0
  %v4762 = vadd.f32 %v4760, %v4761
  %v4763 = vsel %vm2028, %v4670, 0.0
  %v4764 = vadd.f32 %v4762, %v4763
  %v4765 = vsel %vm2028, %v4671, 0.0
  %v4766 = vadd.f32 %v4764, %v4765
  %v4767 = vsel %vm2028, %v4672, 0.0
  %v4768 = vadd.f32 %v4766, %v4767
  %v4769 = vsel %vm2028, %v4673, 0.0
  %v4770 = vadd.f32 %v4768, %v4769
  %v4771 = vsel %vm2028, %v4674, 0.0
  %v4772 = vadd.f32 %v4770, %v4771
  %v4773 = vsel %vm2028, %v4675, 0.0
  %v4774 = vadd.f32 %v4772, %v4773
  %v4775 = vsel %vm2028, %v4676, 0.0
  %v4776 = vadd.f32 %v4774, %v4775
  %v4777 = vsel %vm2028, %v4677, 0.0
  %v4778 = vadd.f32 %v4776, %v4777
  %v4779 = vsel %vm2028, %v4678, 0.0
  %v4780 = vadd.f32 %v4778, %v4779
  %v4781 = vsel %vm2028, %v4679, 0.0
  %v4782 = vadd.f32 %v4780, %v4781
  %v4783 = vsel %vm2028, %v4680, 0.0
  %v4784 = vadd.f32 %v4782, %v4783
  %v4785 = vsel %vm2028, %v4681, 0.0
  %v4786 = vadd.f32 %v4784, %v4785
  %v4787 = vsel %vm2028, %v4682, 0.0
  %v4788 = vadd.f32 %v4786, %v4787
  %v4789 = vsel %vm2028, %v4683, 0.0
  %v4790 = vadd.f32 %v4788, %v4789
  %v4791 = vsel %vm2028, %v4684, 0.0
  %v4792 = vadd.f32 %v4790, %v4791
  %v4793 = vsel %vm2028, %v4685, 0.0
  %v4794 = vadd.f32 %v4792, %v4793
  %v4795 = vsel %vm2028, %v4686, 0.0
  %v4796 = vadd.f32 %v4794, %v4795
  %v4797 = vsel %vm2028, %v4687, 0.0
  %v4798 = vadd.f32 %v4796, %v4797
  %v4799 = vsel %vm2028, %v4688, 0.0
  %v4800 = vadd.f32 %v4798, %v4799
  %v4801 = vsel %vm2028, %v4689, 0.0
  %v4802 = vadd.f32 %v4800, %v4801
  %v4803 = vsel %vm2028, %v4690, 0.0
  %v4804 = vadd.f32 %v4802, %v4803
  %v4805 = vsel %vm2028, %v4691, 0.0
  %v4806 = vadd.f32 %v4804, %v4805
  %v4807 = vsel %vm2028, %v4692, 0.0
  %v4808 = vadd.f32 %v4806, %v4807
  %v4809 = vsel %vm2028, %v4693, 0.0
  %v4810 = vadd.f32 %v4808, %v4809
  %v4811 = vsel %vm2028, %v4694, 0.0
  %v4812 = vadd.f32 %v4810, %v4811
  %v4813 = vsel %vm2028, %v4695, 0.0
  %v4814 = vadd.f32 %v4812, %v4813
  %v4815 = vsel %vm2028, %v4696, 0.0
  %v4816 = vadd.f32 %v4814, %v4815
  %v4817 = vsel %vm2028, %v4697, 0.0
  %v4818 = vadd.f32 %v4816, %v4817
  %v4819 = vsel %vm2028, %v4698, 0.0
  %v4820 = vadd.f32 %v4818, %v4819
  %v4821 = vsel %vm2028, %v4699, 0.0
  %v4822 = vadd.f32 %v4820, %v4821
  %v4823 = vsel %vm2028, %v4700, 0.0
  %v4824 = vadd.f32 %v4822, %v4823
  %v4825 = vsel %vm2028, %v4701, 0.0
  %v4826 = vadd.f32 %v4824, %v4825
  %v4827 = vsel %vm2028, %v4702, 0.0
  %v4828 = vadd.f32 %v4826, %v4827
  %v4829 = vsel %vm2028, %v4703, 0.0
  %v4830 = vadd.f32 %v4828, %v4829
  %v4831 = vrot.slane %v4830, 4
  %v4832 = vadd.f32 %v4830, %v4831
  %v4833 = vrot.slane %v4832, 2
  %v4834 = vadd.f32 %v4832, %v4833
  %v4835 = vrot.slane %v4834, 1
  %v4836 = vadd.f32 %v4834, %v4835
  %v4837 = vmul.f32 %v4836, 0.0025510204
  %v4838 = vadd.f32 %v4837, 1e-05
  %v4839 = vrsqrt.pop %v4838
  %v4840 = vmul.f32 %v4839, %v4838
  %v4841 = vmul.f32 %v4840, %v4839
  %v4842 = vmul.f32 0.5, %v4841
  %v4843 = vsub.f32 1.5, %v4842
  %v4844 = vmul.f32 %v4839, %v4843
  %vm4845 = vweird.f32 %v4838
  %vm4846 = vweird.f32 %v4839
  %vm4847 = vmor %vm4845, %vm4846
  %v4848 = vsel %vm4847, %v4839, %v4844
  %v4849 = vmul.f32 %v3992, %v4848
  %v4851 = vperm.slane %v4849, 0
  %v4853 = vmul.f32 %v4512, %v4851
  %v4854 = vmul.f32 %v4513, %v4851
  %v4855 = vmul.f32 %v4514, %v4851
  %v4856 = vmul.f32 %v4515, %v4851
  %v4857 = vmul.f32 %v4516, %v4851
  %v4858 = vmul.f32 %v4517, %v4851
  %v4859 = vmul.f32 %v4518, %v4851
  %v4860 = vmul.f32 %v4519, %v4851
  %v4861 = vmul.f32 %v4520, %v4851
  %v4862 = vmul.f32 %v4521, %v4851
  %v4863 = vmul.f32 %v4522, %v4851
  %v4864 = vmul.f32 %v4523, %v4851
  %v4865 = vmul.f32 %v4524, %v4851
  %v4866 = vmul.f32 %v4525, %v4851
  %v4867 = vmul.f32 %v4526, %v4851
  %v4868 = vmul.f32 %v4527, %v4851
  %v4869 = vmul.f32 %v4528, %v4851
  %v4870 = vmul.f32 %v4529, %v4851
  %v4871 = vmul.f32 %v4530, %v4851
  %v4872 = vmul.f32 %v4531, %v4851
  %v4873 = vmul.f32 %v4532, %v4851
  %v4874 = vmul.f32 %v4533, %v4851
  %v4875 = vmul.f32 %v4534, %v4851
  %v4876 = vmul.f32 %v4535, %v4851
  %v4877 = vmul.f32 %v4536, %v4851
  %v4878 = vmul.f32 %v4537, %v4851
  %v4879 = vmul.f32 %v4538, %v4851
  %v4880 = vmul.f32 %v4539, %v4851
  %v4881 = vmul.f32 %v4540, %v4851
  %v4882 = vmul.f32 %v4541, %v4851
  %v4883 = vmul.f32 %v4542, %v4851
  %v4884 = vmul.f32 %v4543, %v4851
  %v4885 = vmul.f32 %v4544, %v4851
  %v4886 = vmul.f32 %v4545, %v4851
  %v4887 = vmul.f32 %v4546, %v4851
  %v4888 = vmul.f32 %v4547, %v4851
  %v4889 = vmul.f32 %v4548, %v4851
  %v4890 = vmul.f32 %v4549, %v4851
  %v4891 = vmul.f32 %v4550, %v4851
  %v4892 = vmul.f32 %v4551, %v4851
  %v4893 = vmul.f32 %v4552, %v4851
  %v4894 = vmul.f32 %v4553, %v4851
  %v4895 = vmul.f32 %v4554, %v4851
  %v4896 = vmul.f32 %v4555, %v4851
  %v4897 = vmul.f32 %v4556, %v4851
  %v4898 = vmul.f32 %v4557, %v4851
  %v4899 = vmul.f32 %v4558, %v4851
  %v4900 = vmul.f32 %v4559, %v4851
  %v4901 = vmul.f32 %v4560, %v4851
  %v4902 = vmul.f32 %v4561, %v4851
  %v4903 = vmul.f32 %v4562, %v4851
  %v4904 = vmul.f32 %v4563, %v4851
  %v4905 = vmul.f32 %v4564, %v4851
  %v4906 = vmul.f32 %v4565, %v4851
  %v4907 = vmul.f32 %v4566, %v4851
  %v4908 = vmul.f32 %v4567, %v4851
  %v4909 = vmul.f32 %v4568, %v4851
  %v4910 = vmul.f32 %v4569, %v4851
  %v4911 = vmul.f32 %v4570, %v4851
  %v4912 = vmul.f32 %v4571, %v4851
  %v4913 = vmul.f32 %v4572, %v4851
  %v4914 = vmul.f32 %v4573, %v4851
  %v4915 = vmul.f32 %v4574, %v4851
  %v4916 = vmul.f32 %v4575, %v4851
  %v4918 = vperm.slane %v3993, 0
  %v4920 = vadd.f32 %v4853, %v4918
  %v4921 = vadd.f32 %v4854, %v4918
  %v4922 = vadd.f32 %v4855, %v4918
  %v4923 = vadd.f32 %v4856, %v4918
  %v4924 = vadd.f32 %v4857, %v4918
  %v4925 = vadd.f32 %v4858, %v4918
  %v4926 = vadd.f32 %v4859, %v4918
  %v4927 = vadd.f32 %v4860, %v4918
  %v4928 = vadd.f32 %v4861, %v4918
  %v4929 = vadd.f32 %v4862, %v4918
  %v4930 = vadd.f32 %v4863, %v4918
  %v4931 = vadd.f32 %v4864, %v4918
  %v4932 = vadd.f32 %v4865, %v4918
  %v4933 = vadd.f32 %v4866, %v4918
  %v4934 = vadd.f32 %v4867, %v4918
  %v4935 = vadd.f32 %v4868, %v4918
  %v4936 = vadd.f32 %v4869, %v4918
  %v4937 = vadd.f32 %v4870, %v4918
  %v4938 = vadd.f32 %v4871, %v4918
  %v4939 = vadd.f32 %v4872, %v4918
  %v4940 = vadd.f32 %v4873, %v4918
  %v4941 = vadd.f32 %v4874, %v4918
  %v4942 = vadd.f32 %v4875, %v4918
  %v4943 = vadd.f32 %v4876, %v4918
  %v4944 = vadd.f32 %v4877, %v4918
  %v4945 = vadd.f32 %v4878, %v4918
  %v4946 = vadd.f32 %v4879, %v4918
  %v4947 = vadd.f32 %v4880, %v4918
  %v4948 = vadd.f32 %v4881, %v4918
  %v4949 = vadd.f32 %v4882, %v4918
  %v4950 = vadd.f32 %v4883, %v4918
  %v4951 = vadd.f32 %v4884, %v4918
  %v4952 = vadd.f32 %v4885, %v4918
  %v4953 = vadd.f32 %v4886, %v4918
  %v4954 = vadd.f32 %v4887, %v4918
  %v4955 = vadd.f32 %v4888, %v4918
  %v4956 = vadd.f32 %v4889, %v4918
  %v4957 = vadd.f32 %v4890, %v4918
  %v4958 = vadd.f32 %v4891, %v4918
  %v4959 = vadd.f32 %v4892, %v4918
  %v4960 = vadd.f32 %v4893, %v4918
  %v4961 = vadd.f32 %v4894, %v4918
  %v4962 = vadd.f32 %v4895, %v4918
  %v4963 = vadd.f32 %v4896, %v4918
  %v4964 = vadd.f32 %v4897, %v4918
  %v4965 = vadd.f32 %v4898, %v4918
  %v4966 = vadd.f32 %v4899, %v4918
  %v4967 = vadd.f32 %v4900, %v4918
  %v4968 = vadd.f32 %v4901, %v4918
  %v4969 = vadd.f32 %v4902, %v4918
  %v4970 = vadd.f32 %v4903, %v4918
  %v4971 = vadd.f32 %v4904, %v4918
  %v4972 = vadd.f32 %v4905, %v4918
  %v4973 = vadd.f32 %v4906, %v4918
  %v4974 = vadd.f32 %v4907, %v4918
  %v4975 = vadd.f32 %v4908, %v4918
  %v4976 = vadd.f32 %v4909, %v4918
  %v4977 = vadd.f32 %v4910, %v4918
  %v4978 = vadd.f32 %v4911, %v4918
  %v4979 = vadd.f32 %v4912, %v4918
  %v4980 = vadd.f32 %v4913, %v4918
  %v4981 = vadd.f32 %v4914, %v4918
  %v4982 = vadd.f32 %v4915, %v4918
  %v4983 = vadd.f32 %v4916, %v4918
  %v4984 = vmax.f32 %v4920, 0.0
  %v4985 = vmax.f32 %v4921, 0.0
  %v4986 = vmax.f32 %v4922, 0.0
  %v4987 = vmax.f32 %v4923, 0.0
  %v4988 = vmax.f32 %v4924, 0.0
  %v4989 = vmax.f32 %v4925, 0.0
  %v4990 = vmax.f32 %v4926, 0.0
  %v4991 = vmax.f32 %v4927, 0.0
  %v4992 = vmax.f32 %v4928, 0.0
  %v4993 = vmax.f32 %v4929, 0.0
  %v4994 = vmax.f32 %v4930, 0.0
  %v4995 = vmax.f32 %v4931, 0.0
  %v4996 = vmax.f32 %v4932, 0.0
  %v4997 = vmax.f32 %v4933, 0.0
  %v4998 = vmax.f32 %v4934, 0.0
  %v4999 = vmax.f32 %v4935, 0.0
  %v5000 = vmax.f32 %v4936, 0.0
  %v5001 = vmax.f32 %v4937, 0.0
  %v5002 = vmax.f32 %v4938, 0.0
  %v5003 = vmax.f32 %v4939, 0.0
  %v5004 = vmax.f32 %v4940, 0.0
  %v5005 = vmax.f32 %v4941, 0.0
  %v5006 = vmax.f32 %v4942, 0.0
  %v5007 = vmax.f32 %v4943, 0.0
  %v5008 = vmax.f32 %v4944, 0.0
  %v5009 = vmax.f32 %v4945, 0.0
  %v5010 = vmax.f32 %v4946, 0.0
  %v5011 = vmax.f32 %v4947, 0.0
  %v5012 = vmax.f32 %v4948, 0.0
  %v5013 = vmax.f32 %v4949, 0.0
  %v5014 = vmax.f32 %v4950, 0.0
  %v5015 = vmax.f32 %v4951, 0.0
  %v5016 = vmax.f32 %v4952, 0.0
  %v5017 = vmax.f32 %v4953, 0.0
  %v5018 = vmax.f32 %v4954, 0.0
  %v5019 = vmax.f32 %v4955, 0.0
  %v5020 = vmax.f32 %v4956, 0.0
  %v5021 = vmax.f32 %v4957, 0.0
  %v5022 = vmax.f32 %v4958, 0.0
  %v5023 = vmax.f32 %v4959, 0.0
  %v5024 = vmax.f32 %v4960, 0.0
  %v5025 = vmax.f32 %v4961, 0.0
  %v5026 = vmax.f32 %v4962, 0.0
  %v5027 = vmax.f32 %v4963, 0.0
  %v5028 = vmax.f32 %v4964, 0.0
  %v5029 = vmax.f32 %v4965, 0.0
  %v5030 = vmax.f32 %v4966, 0.0
  %v5031 = vmax.f32 %v4967, 0.0
  %v5032 = vmax.f32 %v4968, 0.0
  %v5033 = vmax.f32 %v4969, 0.0
  %v5034 = vmax.f32 %v4970, 0.0
  %v5035 = vmax.f32 %v4971, 0.0
  %v5036 = vmax.f32 %v4972, 0.0
  %v5037 = vmax.f32 %v4973, 0.0
  %v5038 = vmax.f32 %v4974, 0.0
  %v5039 = vmax.f32 %v4975, 0.0
  %v5040 = vmax.f32 %v4976, 0.0
  %v5041 = vmax.f32 %v4977, 0.0
  %v5042 = vmax.f32 %v4978, 0.0
  %v5043 = vmax.f32 %v4979, 0.0
  %v5044 = vmax.f32 %v4980, 0.0
  %v5045 = vmax.f32 %v4981, 0.0
  %v5046 = vmax.f32 %v4982, 0.0
  %v5047 = vmax.f32 %v4983, 0.0
  %v5048 = vld [vmem:[%s11] sm:$0xff]
  %v5049 = vld [vmem:[%s11 + $0x8] sm:$0xff]
  %v5050 = vld [vmem:[%s11 + $0x10] sm:$0xff]
  %v5051 = vld [vmem:[%s11 + $0x18] sm:$0xff]
  %v5052 = vld [vmem:[%s12] sm:$0x1]
  %v5054 = vperm.slane %v5052, 0
  %v5057 = vsel %vm2028, %v4984, 0
  %v5060 = vsel %vm2028, %v4985, 0
  %v5063 = vsel %vm2028, %v4986, 0
  %v5066 = vsel %vm2028, %v4987, 0
  %v5069 = vsel %vm2028, %v4988, 0
  %v5072 = vsel %vm2028, %v4989, 0
  %v5075 = vsel %vm2028, %v4990, 0
  %v5078 = vsel %vm2028, %v4991, 0
  %v5081 = vsel %vm2028, %v4992, 0
  %v5084 = vsel %vm2028, %v4993, 0
  %v5087 = vsel %vm2028, %v4994, 0
  %v5090 = vsel %vm2028, %v4995, 0
  %v5093 = vsel %vm2028, %v4996, 0
  %v5096 = vsel %vm2028, %v4997, 0
  %v5099 = vsel %vm2028, %v4998, 0
  %v5102 = vsel %vm2028, %v4999, 0
  %v5105 = vsel %vm2028, %v5000, 0
  %v5108 = vsel %vm2028, %v5001, 0
  %v5111 = vsel %vm2028, %v5002, 0
  %v5114 = vsel %vm2028, %v5003, 0
  %v5117 = vsel %vm2028, %v5004, 0
  %v5120 = vsel %vm2028, %v5005, 0
  %v5123 = vsel %vm2028, %v5006, 0
  %v5126 = vsel %vm2028, %v5007, 0
  %v5129 = vsel %vm2028, %v5008, 0
  %v5132 = vsel %vm2028, %v5009, 0
  %v5135 = vsel %vm2028, %v5010, 0
  %v5138 = vsel %vm2028, %v5011, 0
  %v5141 = vsel %vm2028, %v5012, 0
  %v5144 = vsel %vm2028, %v5013, 0
  %v5147 = vsel %vm2028, %v5014, 0
  %v5150 = vsel %vm2028, %v5015, 0
  %v5153 = vsel %vm2028, %v5016, 0
  %v5156 = vsel %vm2028, %v5017, 0
  %v5159 = vsel %vm2028, %v5018, 0
  %v5162 = vsel %vm2028, %v5019, 0
  %v5165 = vsel %vm2028, %v5020, 0
  %v5168 = vsel %vm2028, %v5021, 0
  %v5171 = vsel %vm2028, %v5022, 0
  %v5174 = vsel %vm2028, %v5023, 0
  %v5177 = vsel %vm2028, %v5024, 0
  %v5180 = vsel %vm2028, %v5025, 0
  %v5183 = vsel %vm2028, %v5026, 0
  %v5186 = vsel %vm2028, %v5027, 0
  %v5189 = vsel %vm2028, %v5028, 0
  %v5192 = vsel %vm2028, %v5029, 0
  %v5195 = vsel %vm2028, %v5030, 0
  %v5198 = vsel %vm2028, %v5031, 0
  %v5201 = vsel %vm2028, %v5032, 0
  %v5204 = vsel %vm2028, %v5033, 0
  %v5207 = vsel %vm2028, %v5034, 0
  %v5210 = vsel %vm2028, %v5035, 0
  %v5213 = vsel %vm2028, %v5036, 0
  %v5216 = vsel %vm2028, %v5037, 0
  %v5219 = vsel %vm2028, %v5038, 0
  %v5222 = vsel %vm2028, %v5039, 0
  %v5225 = vsel %vm2028, %v5040, 0
  %v5228 = vsel %vm2028, %v5041, 0
  %v5231 = vsel %vm2028, %v5042, 0
  %v5234 = vsel %vm2028, %v5043, 0
  %v5237 = vsel %vm2028, %v5044, 0
  %v5240 = vsel %vm2028, %v5045, 0
  %v5243 = vsel %vm2028, %v5046, 0
  %v5246 = vsel %vm2028, %v5047, 0
  %5248 = vmatpush.msra.mxu0 0.0
  %5249 = vmatpush.msra.mxu0 0.0
  %5250 = vmatpush.msra.mxu0 0.0
  %5251 = vmatpush.msra.mxu0 0.0
  %5252 = vmatpush.msra.mxu0 0.0
  %5253 = vmatpush.msra.mxu0 0.0
  %5254 = vmatpush.msra.mxu0 0.0
  %5255 = vmatpush.msra.mxu0 0.0
  %5256 = vmatpush.msra.mxu0 0.0
  %5257 = vmatpush.msra.mxu0 0.0
  %5258 = vmatpush.msra.mxu0 0.0
  %5259 = vmatpush.msra.mxu0 0.0
  %5260 = vmatpush.msra.mxu0 %v5051
  %5261 = vmatpush.msra.mxu0 %v5050
  %5262 = vmatpush.msra.mxu0 %v5049
  %5263 = vmatpush.msra.mxu0 %v5048
  %5264 = vmatmul.f32.gmra.mxu0 %v5057
  %v5265 = vpop.f32.mrf.mxu0
  %v5266 = vadd.f32 %v5054, %v5265
  %5267 = vmatmul.f32.gmra.mxu0 %v5060
  %v5268 = vpop.f32.mrf.mxu0
  %v5269 = vadd.f32 %v5054, %v5268
  %5270 = vmatmul.f32.gmra.mxu0 %v5063
  %v5271 = vpop.f32.mrf.mxu0
  %v5272 = vadd.f32 %v5054, %v5271
  %5273 = vmatmul.f32.gmra.mxu0 %v5066
  %v5274 = vpop.f32.mrf.mxu0
  %v5275 = vadd.f32 %v5054, %v5274
  %5276 = vmatmul.f32.gmra.mxu0 %v5069
  %v5277 = vpop.f32.mrf.mxu0
  %v5278 = vadd.f32 %v5054, %v5277
  %5279 = vmatmul.f32.gmra.mxu0 %v5072
  %v5280 = vpop.f32.mrf.mxu0
  %v5281 = vadd.f32 %v5054, %v5280
  %5282 = vmatmul.f32.gmra.mxu0 %v5075
  %v5283 = vpop.f32.mrf.mxu0
  %v5284 = vadd.f32 %v5054, %v5283
  %5285 = vmatmul.f32.gmra.mxu0 %v5078
  %v5286 = vpop.f32.mrf.mxu0
  %v5287 = vadd.f32 %v5054, %v5286
  %5288 = vmatmul.f32.gmra.mxu0 %v5081
  %v5289 = vpop.f32.mrf.mxu0
  %v5290 = vadd.f32 %v5054, %v5289
  %5291 = vmatmul.f32.gmra.mxu0 %v5084
  %v5292 = vpop.f32.mrf.mxu0
  %v5293 = vadd.f32 %v5054, %v5292
  %5294 = vmatmul.f32.gmra.mxu0 %v5087
  %v5295 = vpop.f32.mrf.mxu0
  %v5296 = vadd.f32 %v5054, %v5295
  %5297 = vmatmul.f32.gmra.mxu0 %v5090
  %v5298 = vpop.f32.mrf.mxu0
  %v5299 = vadd.f32 %v5054, %v5298
  %5300 = vmatmul.f32.gmra.mxu0 %v5093
  %v5301 = vpop.f32.mrf.mxu0
  %v5302 = vadd.f32 %v5054, %v5301
  %5303 = vmatmul.f32.gmra.mxu0 %v5096
  %v5304 = vpop.f32.mrf.mxu0
  %v5305 = vadd.f32 %v5054, %v5304
  %5306 = vmatmul.f32.gmra.mxu0 %v5099
  %v5307 = vpop.f32.mrf.mxu0
  %v5308 = vadd.f32 %v5054, %v5307
  %5309 = vmatmul.f32.gmra.mxu0 %v5102
  %v5310 = vpop.f32.mrf.mxu0
  %v5311 = vadd.f32 %v5054, %v5310
  %5312 = vmatmul.f32.gmra.mxu0 %v5105
  %v5313 = vpop.f32.mrf.mxu0
  %v5314 = vadd.f32 %v5054, %v5313
  %5315 = vmatmul.f32.gmra.mxu0 %v5108
  %v5316 = vpop.f32.mrf.mxu0
  %v5317 = vadd.f32 %v5054, %v5316
  %5318 = vmatmul.f32.gmra.mxu0 %v5111
  %v5319 = vpop.f32.mrf.mxu0
  %v5320 = vadd.f32 %v5054, %v5319
  %5321 = vmatmul.f32.gmra.mxu0 %v5114
  %v5322 = vpop.f32.mrf.mxu0
  %v5323 = vadd.f32 %v5054, %v5322
  %5324 = vmatmul.f32.gmra.mxu0 %v5117
  %v5325 = vpop.f32.mrf.mxu0
  %v5326 = vadd.f32 %v5054, %v5325
  %5327 = vmatmul.f32.gmra.mxu0 %v5120
  %v5328 = vpop.f32.mrf.mxu0
  %v5329 = vadd.f32 %v5054, %v5328
  %5330 = vmatmul.f32.gmra.mxu0 %v5123
  %v5331 = vpop.f32.mrf.mxu0
  %v5332 = vadd.f32 %v5054, %v5331
  %5333 = vmatmul.f32.gmra.mxu0 %v5126
  %v5334 = vpop.f32.mrf.mxu0
  %v5335 = vadd.f32 %v5054, %v5334
  %5336 = vmatmul.f32.gmra.mxu0 %v5129
  %v5337 = vpop.f32.mrf.mxu0
  %v5338 = vadd.f32 %v5054, %v5337
  %5339 = vmatmul.f32.gmra.mxu0 %v5132
  %v5340 = vpop.f32.mrf.mxu0
  %v5341 = vadd.f32 %v5054, %v5340
  %5342 = vmatmul.f32.gmra.mxu0 %v5135
  %v5343 = vpop.f32.mrf.mxu0
  %v5344 = vadd.f32 %v5054, %v5343
  %5345 = vmatmul.f32.gmra.mxu0 %v5138
  %v5346 = vpop.f32.mrf.mxu0
  %v5347 = vadd.f32 %v5054, %v5346
  %5348 = vmatmul.f32.gmra.mxu0 %v5141
  %v5349 = vpop.f32.mrf.mxu0
  %v5350 = vadd.f32 %v5054, %v5349
  %5351 = vmatmul.f32.gmra.mxu0 %v5144
  %v5352 = vpop.f32.mrf.mxu0
  %v5353 = vadd.f32 %v5054, %v5352
  %5354 = vmatmul.f32.gmra.mxu0 %v5147
  %v5355 = vpop.f32.mrf.mxu0
  %v5356 = vadd.f32 %v5054, %v5355
  %5357 = vmatmul.f32.gmra.mxu0 %v5150
  %v5358 = vpop.f32.mrf.mxu0
  %v5359 = vadd.f32 %v5054, %v5358
  %5360 = vmatmul.f32.gmra.mxu0 %v5153
  %v5361 = vpop.f32.mrf.mxu0
  %v5362 = vadd.f32 %v5054, %v5361
  %5363 = vmatmul.f32.gmra.mxu0 %v5156
  %v5364 = vpop.f32.mrf.mxu0
  %v5365 = vadd.f32 %v5054, %v5364
  %5366 = vmatmul.f32.gmra.mxu0 %v5159
  %v5367 = vpop.f32.mrf.mxu0
  %v5368 = vadd.f32 %v5054, %v5367
  %5369 = vmatmul.f32.gmra.mxu0 %v5162
  %v5370 = vpop.f32.mrf.mxu0
  %v5371 = vadd.f32 %v5054, %v5370
  %5372 = vmatmul.f32.gmra.mxu0 %v5165
  %v5373 = vpop.f32.mrf.mxu0
  %v5374 = vadd.f32 %v5054, %v5373
  %5375 = vmatmul.f32.gmra.mxu0 %v5168
  %v5376 = vpop.f32.mrf.mxu0
  %v5377 = vadd.f32 %v5054, %v5376
  %5378 = vmatmul.f32.gmra.mxu0 %v5171
  %v5379 = vpop.f32.mrf.mxu0
  %v5380 = vadd.f32 %v5054, %v5379
  %5381 = vmatmul.f32.gmra.mxu0 %v5174
  %v5382 = vpop.f32.mrf.mxu0
  %v5383 = vadd.f32 %v5054, %v5382
  %5384 = vmatmul.f32.gmra.mxu0 %v5177
  %v5385 = vpop.f32.mrf.mxu0
  %v5386 = vadd.f32 %v5054, %v5385
  %5387 = vmatmul.f32.gmra.mxu0 %v5180
  %v5388 = vpop.f32.mrf.mxu0
  %v5389 = vadd.f32 %v5054, %v5388
  %5390 = vmatmul.f32.gmra.mxu0 %v5183
  %v5391 = vpop.f32.mrf.mxu0
  %v5392 = vadd.f32 %v5054, %v5391
  %5393 = vmatmul.f32.gmra.mxu0 %v5186
  %v5394 = vpop.f32.mrf.mxu0
  %v5395 = vadd.f32 %v5054, %v5394
  %5396 = vmatmul.f32.gmra.mxu0 %v5189
  %v5397 = vpop.f32.mrf.mxu0
  %v5398 = vadd.f32 %v5054, %v5397
  %5399 = vmatmul.f32.gmra.mxu0 %v5192
  %v5400 = vpop.f32.mrf.mxu0
  %v5401 = vadd.f32 %v5054, %v5400
  %5402 = vmatmul.f32.gmra.mxu0 %v5195
  %v5403 = vpop.f32.mrf.mxu0
  %v5404 = vadd.f32 %v5054, %v5403
  %5405 = vmatmul.f32.gmra.mxu0 %v5198
  %v5406 = vpop.f32.mrf.mxu0
  %v5407 = vadd.f32 %v5054, %v5406
  %5408 = vmatmul.f32.gmra.mxu0 %v5201
  %v5409 = vpop.f32.mrf.mxu0
  %v5410 = vadd.f32 %v5054, %v5409
  %5411 = vmatmul.f32.gmra.mxu0 %v5204
  %v5412 = vpop.f32.mrf.mxu0
  %v5413 = vadd.f32 %v5054, %v5412
  %5414 = vmatmul.f32.gmra.mxu0 %v5207
  %v5415 = vpop.f32.mrf.mxu0
  %v5416 = vadd.f32 %v5054, %v5415
  %5417 = vmatmul.f32.gmra.mxu0 %v5210
  %v5418 = vpop.f32.mrf.mxu0
  %v5419 = vadd.f32 %v5054, %v5418
  %5420 = vmatmul.f32.gmra.mxu0 %v5213
  %v5421 = vpop.f32.mrf.mxu0
  %v5422 = vadd.f32 %v5054, %v5421
  %5423 = vmatmul.f32.gmra.mxu0 %v5216
  %v5424 = vpop.f32.mrf.mxu0
  %v5425 = vadd.f32 %v5054, %v5424
  %5426 = vmatmul.f32.gmra.mxu0 %v5219
  %v5427 = vpop.f32.mrf.mxu0
  %v5428 = vadd.f32 %v5054, %v5427
  %5429 = vmatmul.f32.gmra.mxu0 %v5222
  %v5430 = vpop.f32.mrf.mxu0
  %v5431 = vadd.f32 %v5054, %v5430
  %5432 = vmatmul.f32.gmra.mxu0 %v5225
  %v5433 = vpop.f32.mrf.mxu0
  %v5434 = vadd.f32 %v5054, %v5433
  %5435 = vmatmul.f32.gmra.mxu0 %v5228
  %v5436 = vpop.f32.mrf.mxu0
  %v5437 = vadd.f32 %v5054, %v5436
  %5438 = vmatmul.f32.gmra.mxu0 %v5231
  %v5439 = vpop.f32.mrf.mxu0
  %v5440 = vadd.f32 %v5054, %v5439
  %5441 = vmatmul.f32.gmra.mxu0 %v5234
  %v5442 = vpop.f32.mrf.mxu0
  %v5443 = vadd.f32 %v5054, %v5442
  %5444 = vmatmul.f32.gmra.mxu0 %v5237
  %v5445 = vpop.f32.mrf.mxu0
  %v5446 = vadd.f32 %v5054, %v5445
  %5447 = vmatmul.f32.gmra.mxu0 %v5240
  %v5448 = vpop.f32.mrf.mxu0
  %v5449 = vadd.f32 %v5054, %v5448
  %5450 = vmatmul.f32.gmra.mxu0 %v5243
  %v5451 = vpop.f32.mrf.mxu0
  %v5452 = vadd.f32 %v5054, %v5451
  %5453 = vmatmul.f32.gmra.mxu0 %v5246
  %v5454 = vpop.f32.mrf.mxu0
  %v5455 = vadd.f32 %v5054, %v5454
  %5456 = vdwg.mxu0
  %5457 = vst [vmem:[%s13] sm:$0xff] %v5266
  %5458 = vst [vmem:[%s13 + $0x8] sm:$0xff] %v5269
  %5459 = vst [vmem:[%s13 + $0x10] sm:$0xff] %v5272
  %5460 = vst [vmem:[%s13 + $0x18] sm:$0xff] %v5275
  %5461 = vst [vmem:[%s13 + $0x20] sm:$0xff] %v5278
  %5462 = vst [vmem:[%s13 + $0x28] sm:$0xff] %v5281
  %5463 = vst [vmem:[%s13 + $0x30] sm:$0xff] %v5284
  %5464 = vst [vmem:[%s13 + $0x38] sm:$0xff] %v5287
  %5465 = vst [vmem:[%s13 + $0x40] sm:$0xff] %v5290
  %5466 = vst [vmem:[%s13 + $0x48] sm:$0xff] %v5293
  %5467 = vst [vmem:[%s13 + $0x50] sm:$0xff] %v5296
  %5468 = vst [vmem:[%s13 + $0x58] sm:$0xff] %v5299
  %5469 = vst [vmem:[%s13 + $0x60] sm:$0xff] %v5302
  %5470 = vst [vmem:[%s13 + $0x68] sm:$0xff] %v5305
  %5471 = vst [vmem:[%s13 + $0x70] sm:$0xff] %v5308
  %5472 = vst [vmem:[%s13 + $0x78] sm:$0xff] %v5311
  %5473 = vst [vmem:[%s13 + $0x80] sm:$0xff] %v5314
  %5474 = vst [vmem:[%s13 + $0x88] sm:$0xff] %v5317
  %5475 = vst [vmem:[%s13 + $0x90] sm:$0xff] %v5320
  %5476 = vst [vmem:[%s13 + $0x98] sm:$0xff] %v5323
  %5477 = vst [vmem:[%s13 + $0xa0] sm:$0xff] %v5326
  %5478 = vst [vmem:[%s13 + $0xa8] sm:$0xff] %v5329
  %5479 = vst [vmem:[%s13 + $0xb0] sm:$0xff] %v5332
  %5480 = vst [vmem:[%s13 + $0xb8] sm:$0xff] %v5335
  %5481 = vst [vmem:[%s13 + $0xc0] sm:$0xff] %v5338
  %5482 = vst [vmem:[%s13 + $0xc8] sm:$0xff] %v5341
  %5483 = vst [vmem:[%s13 + $0xd0] sm:$0xff] %v5344
  %5484 = vst [vmem:[%s13 + $0xd8] sm:$0xff] %v5347
  %5485 = vst [vmem:[%s13 + $0xe0] sm:$0xff] %v5350
  %5486 = vst [vmem:[%s13 + $0xe8] sm:$0xff] %v5353
  %5487 = vst [vmem:[%s13 + $0xf0] sm:$0xff] %v5356
  %5488 = vst [vmem:[%s13 + $0xf8] sm:$0xff] %v5359
  %5489 = vst [vmem:[%s13 + $0x100] sm:$0xff] %v5362
  %5490 = vst [vmem:[%s13 + $0x108] sm:$0xff] %v5365
  %5491 = vst [vmem:[%s13 + $0x110] sm:$0xff] %v5368
  %5492 = vst [vmem:[%s13 + $0x118] sm:$0xff] %v5371
  %5493 = vst [vmem:[%s13 + $0x120] sm:$0xff] %v5374
  %5494 = vst [vmem:[%s13 + $0x128] sm:$0xff] %v5377
  %5495 = vst [vmem:[%s13 + $0x130] sm:$0xff] %v5380
  %5496 = vst [vmem:[%s13 + $0x138] sm:$0xff] %v5383
  %5497 = vst [vmem:[%s13 + $0x140] sm:$0xff] %v5386
  %5498 = vst [vmem:[%s13 + $0x148] sm:$0xff] %v5389
  %5499 = vst [vmem:[%s13 + $0x150] sm:$0xff] %v5392
  %5500 = vst [vmem:[%s13 + $0x158] sm:$0xff] %v5395
  %5501 = vst [vmem:[%s13 + $0x160] sm:$0xff] %v5398
  %5502 = vst [vmem:[%s13 + $0x168] sm:$0xff] %v5401
  %5503 = vst [vmem:[%s13 + $0x170] sm:$0xff] %v5404
  %5504 = vst [vmem:[%s13 + $0x178] sm:$0xff] %v5407
  %5505 = vst [vmem:[%s13 + $0x180] sm:$0xff] %v5410
  %5506 = vst [vmem:[%s13 + $0x188] sm:$0xff] %v5413
  %5507 = vst [vmem:[%s13 + $0x190] sm:$0xff] %v5416
  %5508 = vst [vmem:[%s13 + $0x198] sm:$0xff] %v5419
  %5509 = vst [vmem:[%s13 + $0x1a0] sm:$0xff] %v5422
  %5510 = vst [vmem:[%s13 + $0x1a8] sm:$0xff] %v5425
  %5511 = vst [vmem:[%s13 + $0x1b0] sm:$0xff] %v5428
  %5512 = vst [vmem:[%s13 + $0x1b8] sm:$0xff] %v5431
  %5513 = vst [vmem:[%s13 + $0x1c0] sm:$0xff] %v5434
  %5514 = vst [vmem:[%s13 + $0x1c8] sm:$0xff] %v5437
  %5515 = vst [vmem:[%s13 + $0x1d0] sm:$0xff] %v5440
  %5516 = vst [vmem:[%s13 + $0x1d8] sm:$0xff] %v5443
  %5517 = vst [vmem:[%s13 + $0x1e0] sm:$0xff] %v5446
  %5518 = vst [vmem:[%s13 + $0x1e8] sm:$0xff] %v5449
  %5519 = vst [vmem:[%s13 + $0x1f0] sm:$0xff] %v5452
  %5520 = vst [vmem:[%s13 + $0x1f8] sm:$0xff] %v5455
  // Predicated region
  $region54: #{forward.1} parent=0 // pred_check
    _
  $region55: #{forward.1} parent=0 // pred_check_branch
    %5522 = sbr.rel (0) target = $region57
  $region56: #{forward.1} parent=0 // pred_region
    _
  $region57: #{forward.1} parent=0 // pred_fallthru
    _
  // Predicated region
  $region58: #{forward.1} parent=0 // pred_check
    _
  $region59: #{forward.1} parent=0 // pred_check_branch
    %5524 = sbr.rel (0) target = $region61
  $region60: #{forward.1} parent=0 // pred_region
    _
  $region61: #{forward.1} parent=0 // pred_fallthru
    _

</llo_original>
